<compile_context>
chip_gen: v7x
topology: tpu7x:2x2x1
jax: 0.10.0
libtpu: 0.0.40
codegen_flags: <defaults>
</compile_context>

<pallas_src>
import functools

import jax
import jax.numpy as jnp
import numpy as np
from jax.experimental import pallas as pl
from jax.experimental.pallas import tpu as pltpu


# Spatial sizes after each pool, and their 128-lane-aligned paddings.
MP1, MP1_PAD = 14 * 14, 256   # conv1 pooled output: 196 -> 256 lanes
MP2, MP2_PAD = 7 * 7, 128     # conv2 pooled output:  49 -> 128 lanes

_VMEM_LIMIT = 48 * 1024 * 1024   # explicit scoped-VMEM limit; fits v5e/v6e/v7x


def _vmem_capacity_bytes() -> int:
    """Physical VMEM of the current chip; conservative v7x fallback."""
    try:
        return int(pltpu.get_tpu_info().vmem_capacity_bytes)
    except Exception:
        return 64 * 1024 * 1024


def _per_image_vmem(k: int, cout: int, mp_pad: int) -> int:
    """VMEM bytes one image's conv block occupies (sublane-padded, f32)."""
    k_pad = ((k + 7) // 8) * 8
    return (k_pad * 4 * mp_pad + cout * mp_pad) * 4


def _conv_batch_tile(n: int, per_image_bytes: int) -> int:
    """Images per conv grid step: amortize step overhead, stay inside a
    conservative VMEM budget (double-buffered), keep >=2 grid steps (v7x 2 TCs)."""
    budget = int(0.35 * _vmem_capacity_bytes())
    cap = max(1, min(32, budget // (2 * per_image_bytes)))
    return int(max(1, min(cap, (n + 1) // 2)))


# ----------------------------------------------------------------------------
# Pallas kernels
# ----------------------------------------------------------------------------
def _conv_block_kernel(p_ref, w_ref, b_ref, o_ref, *, b_tile, mp_pad):
    """Fused conv(3x3,p=1) + bias + ReLU + 2x2 maxpool for B_TILE images.

    p_ref: (B_TILE, K, 4*Mp_pad) -- 4 pool-phase patch slabs concatenated on lanes
    w_ref: (Cout, K)             -- transposed GEMM weight (resident)
    b_ref: (Cout, 1)             -- bias column (resident)
    o_ref: (B_TILE, Cout, Mp_pad)-- pooled output, NCHW-flattened spatially
    """
    w = w_ref[...]
    b = b_ref[...]
    for i in range(b_tile):                       # unrolled at trace time
        # One wide MXU dot per image over all 4 pool phases.
        y = jnp.dot(w, p_ref[i], preferred_element_type=jnp.float32)
        # Pool max over 128-aligned phase slices (bias/ReLU commute with max).
        y0 = y[:, 0 * mp_pad:1 * mp_pad]
        y1 = y[:, 1 * mp_pad:2 * mp_pad]
        y2 = y[:, 2 * mp_pad:3 * mp_pad]
        y3 = y[:, 3 * mp_pad:4 * mp_pad]
        pooled = jnp.maximum(jnp.maximum(y0, y1), jnp.maximum(y2, y3))
        o_ref[i] = jnp.maximum(pooled + b, 0.0).astype(o_ref.dtype)


def conv_relu_pool(p, w_t, b_col, *, mp_pad, b_tile):
    """p: (N, K, 4*mp_pad), w_t: (Cout, K), b_col: (Cout, 1) -> (N, Cout, mp_pad)."""
    N, K, L = p.shape
    Cout = w_t.shape[0]
    n_pad = (-N) % b_tile
    if n_pad:
        p = jnp.pad(p, ((0, n_pad), (0, 0), (0, 0)))
    Np = N + n_pad
    out = pl.pallas_call(
        functools.partial(_conv_block_kernel, b_tile=b_tile, mp_pad=mp_pad),
        out_shape=jax.ShapeDtypeStruct((Np, Cout, mp_pad), jnp.float32),
        grid=(Np // b_tile,),
        in_specs=[
            pl.BlockSpec((b_tile, K, L), lambda i: (i, 0, 0)),
            pl.BlockSpec((Cout, K), lambda i: (0, 0)),
            pl.BlockSpec((Cout, 1), lambda i: (0, 0)),
        ],
        out_specs=pl.BlockSpec((b_tile, Cout, mp_pad), lambda i: (i, 0, 0)),
        compiler_params=pltpu.CompilerParams(
            dimension_semantics=("parallel",),
            vmem_limit_bytes=_VMEM_LIMIT),
    )(p, w_t, b_col)
    return out[:N] if n_pad else out


def _fc_head_kernel(f_ref, w1_ref, b1_ref, w2_ref, b2_ref, o_ref):
    """Fused Linear(3136,128) + ReLU + Linear(128,10) on one M-tile of the batch."""
    h = jnp.dot(f_ref[...], w1_ref[...], preferred_element_type=jnp.float32) + b1_ref[...]
    h = jnp.maximum(h, 0.0)
    y = jnp.dot(h, w2_ref[...], preferred_element_type=jnp.float32) + b2_ref[...]
    o_ref[...] = y.astype(o_ref.dtype)


def fc_head(feats, w1, b1, w2, b2, *, max_tile=512):
    """feats: (N, K) -> logits (N, Nout); M-tiled with resident weights.

    Batch is padded only to a multiple of 8; the M-tile is the largest
    multiple-of-8 divisor of the padded batch that is <= max_tile, so no
    padded FC work is done for awkward batch sizes.
    """
    N, K = feats.shape
    H1 = w1.shape[1]
    Nout = w2.shape[1]
    n_pad = (-N) % 8
    fp = jnp.pad(feats, ((0, n_pad), (0, 0))) if n_pad else feats
    Np = N + n_pad
    tm = 8
    for t in range(min(max_tile, Np), 7, -8):
        if Np % t == 0:
            tm = t
            break
    out = pl.pallas_call(
        _fc_head_kernel,
        out_shape=jax.ShapeDtypeStruct((Np, Nout), jnp.float32),
        grid=(Np // tm,),
        in_specs=[
            pl.BlockSpec((tm, K), lambda i: (i, 0)),
            pl.BlockSpec((K, H1), lambda i: (0, 0)),
            pl.BlockSpec((1, H1), lambda i: (0, 0)),
            pl.BlockSpec((H1, Nout), lambda i: (0, 0)),
            pl.BlockSpec((1, Nout), lambda i: (0, 0)),
        ],
        out_specs=pl.BlockSpec((tm, Nout), lambda i: (i, 0)),
        compiler_params=pltpu.CompilerParams(
            dimension_semantics=("parallel",),
            vmem_limit_bytes=_VMEM_LIMIT),
    )(fp, w1, b1, w2, b2)
    return out[:N] if n_pad else out


# ----------------------------------------------------------------------------
# Glue (indexing / reshapes only)
# ----------------------------------------------------------------------------
def phase_patches_nchw(x_nchw, mp_pad):
    """(N, C, H, W) -> (N, C*9, 4*mp_pad) pool-phase patch slabs (transposed).

    Phase (dh, dw) holds the 3x3/pad=1 patches of the conv-output pixels
    (2*ho+dh, 2*wo+dw); K index = ci*9 + ky*3 + kx; lane = phase*mp_pad + ho*Wh+wo.
    Lanes [Hh*Wh, mp_pad) of each phase segment are zero so the conv kernel's
    operands and outputs are 128-lane aligned.
    """
    N, C, H, W = x_nchw.shape
    Hh, Wh = H // 2, W // 2
    mp = Hh * Wh
    xp = jnp.pad(x_nchw, ((0, 0), (0, 0), (1, 1), (1, 1)))
    segs = []
    for dh in (0, 1):
        for dw in (0, 1):
            taps = [
                xp[:, :, dh + ky: dh + ky + 2 * Hh: 2, dw + kx: dw + kx + 2 * Wh: 2]
                for ky in range(3) for kx in range(3)
            ]
            seg = jnp.stack(taps, axis=2).reshape(N, C * 9, mp)     # (N, C*9, Hh*Wh)
            if mp_pad > mp:
                seg = jnp.pad(seg, ((0, 0), (0, 0), (0, mp_pad - mp)))
            segs.append(seg)
    return jnp.concatenate(segs, axis=-1)                           # (N, C*9, 4*mp_pad)


def conv_weight_t(w_hwio):
    """HWIO (3,3,Cin,Cout) -> (Cout, Cin*9) with K order ci*9 + ky*3 + kx."""
    cout = w_hwio.shape[-1]
    w = jnp.transpose(w_hwio, (2, 0, 1, 3)).reshape(-1, cout)   # (Cin*9, Cout)
    return jnp.transpose(w, (1, 0))


def init_params(key):
    """Deterministic synthetic parameters (same shapes the torch module implies)."""
    ks = jax.random.split(key, 8)
    s = 0.05
    return {
        "w_conv1": jax.random.normal(ks[0], (3, 3, 3, 32), jnp.float32) * s,   # HWIO
        "b_conv1": jax.random.normal(ks[1], (32,), jnp.float32) * s,
        "w_conv2": jax.random.normal(ks[2], (3, 3, 32, 64), jnp.float32) * s,
        "b_conv2": jax.random.normal(ks[3], (64,), jnp.float32) * s,
        "w_fc1": jax.random.normal(ks[4], (64 * 7 * 7, 128), jnp.float32) * s,
        "b_fc1": jax.random.normal(ks[5], (1, 128), jnp.float32) * s,
        "w_fc2": jax.random.normal(ks[6], (128, 10), jnp.float32) * s,
        "b_fc2": jax.random.normal(ks[7], (1, 10), jnp.float32) * s,
    }


@jax.jit
def colored_mnist_forward(x_nchw, params):
    """Returns (logits (N,10), feats (N, 64*7*7)) — same as the torch forward."""
    N = x_nchw.shape[0]

    # Per-chip conv batch tiles (static, trace-time Python ints).
    bt1 = _conv_batch_tile(N, _per_image_vmem(3 * 9, 32, MP1_PAD))
    bt2 = _conv_batch_tile(N, _per_image_vmem(32 * 9, 64, MP2_PAD))

    # Block 1: Conv2d(3,32,3,p=1) + ReLU + MaxPool2d(2) -> (N, 32, 196) NCHW order
    p1 = phase_patches_nchw(x_nchw, MP1_PAD)                         # (N, 27, 1024)
    a1 = conv_relu_pool(p1, conv_weight_t(params["w_conv1"]),
                        params["b_conv1"].reshape(-1, 1),
                        mp_pad=MP1_PAD, b_tile=bt1)                  # (N, 32, 256)
    a1 = a1[:, :, :MP1].reshape(N, 32, 14, 14)

    # Block 2: Conv2d(32,64,3,p=1) + ReLU + MaxPool2d(2) -> (N, 64, 49) NCHW order
    p2 = phase_patches_nchw(a1, MP2_PAD)                             # (N, 288, 512)
    a2 = conv_relu_pool(p2, conv_weight_t(params["w_conv2"]),
                        params["b_conv2"].reshape(-1, 1),
                        mp_pad=MP2_PAD, b_tile=bt2)                  # (N, 64, 128)

    # Classifier: Flatten (NCHW order, no transpose) + fused fc1+ReLU+fc2
    feats = a2[:, :, :MP2].reshape(N, 64 * 7 * 7)
    logits = fc_head(feats, params["w_fc1"], params["b_fc1"],
                     params["w_fc2"], params["b_fc2"])
    return logits, feats


# ----------------------------------------------------------------------------
# Pure-JAX reference (for correctness check only)
# ----------------------------------------------------------------------------
def reference_forward(x_nchw, params):
    dn = ("NCHW", "HWIO", "NCHW")
    y = jax.lax.conv_general_dilated(x_nchw, params["w_conv1"], (1, 1), "SAME",
                                     dimension_numbers=dn)
    y = jnp.maximum(y + params["b_conv1"].reshape(1, -1, 1, 1), 0.0)
    y = jax.lax.reduce_window(y, -jnp.inf, jax.lax.max, (1, 1, 2, 2), (1, 1, 2, 2), "VALID")
    y = jax.lax.conv_general_dilated(y, params["w_conv2"], (1, 1), "SAME",
                                     dimension_numbers=dn)
    y = jnp.maximum(y + params["b_conv2"].reshape(1, -1, 1, 1), 0.0)
    y = jax.lax.reduce_window(y, -jnp.inf, jax.lax.max, (1, 1, 2, 2), (1, 1, 2, 2), "VALID")
    feats = y.reshape(x_nchw.shape[0], -1)
    h = jnp.maximum(feats @ params["w_fc1"] + params["b_fc1"], 0.0)
    logits = h @ params["w_fc2"] + params["b_fc2"]
    return logits, feats


if __name__ == "__main__":
    key = jax.random.PRNGKey(0)
    kx, kp = jax.random.split(key)
    # PyTorch-style NCHW input: ColoredMNIST = 3-channel 28x28 images, batch = 2.
    x = jax.random.normal(kx, (2, 3, 28, 28), jnp.float32)
    params = init_params(kp)

    logits, feats = colored_mnist_forward(x, params)
    jax.block_until_ready((logits, feats))
    assert logits.shape == (2, 10) and feats.shape == (2, 64 * 7 * 7)

    ref_logits, ref_feats = reference_forward(x, params)
    np.testing.assert_allclose(np.asarray(logits), np.asarray(ref_logits),
                               rtol=1e-4, atol=1e-4)
    np.testing.assert_allclose(np.asarray(feats), np.asarray(ref_feats),
                               rtol=1e-4, atol=1e-4)
    print("KERNEL_OK")
</pallas_src>

<mosaic_0001>
module attributes {stable_mosaic.version = 11 : i64} {
  func.func @_conv_block_kernel(%arg0: i32, %arg1: memref<1x27x1024xf32, #tpu.memory_space<vmem>>, %arg2: memref<32x27xf32, #tpu.memory_space<vmem>>, %arg3: memref<32x1xf32, #tpu.memory_space<vmem>>, %arg4: memref<1x32x256xf32, #tpu.memory_space<vmem>>) attributes {dimension_semantics = [#tpu.dimension_semantics<parallel>], iteration_bounds = array<i64: 2>, scalar_prefetch = 0 : i64, scratch_operands = 0 : i64, tpu.core_type = #tpu.core_type<tc>, window_params = [{transform_indices = @transform_0, window_bounds = array<i64: 1, 27, 1024>}, {pipeline_mode = #tpu.pipeline_mode<synchronous>, transform_indices = @transform_1, window_bounds = array<i64: 32, 27>}, {pipeline_mode = #tpu.pipeline_mode<synchronous>, transform_indices = @transform_2, window_bounds = array<i64: 32, 1>}, {transform_indices = @transform_3, window_bounds = array<i64: 1, 32, 256>}]} {
    %c0 = arith.constant 0 : index
    %c0_0 = arith.constant 0 : index
    %0 = vector.load %arg2[%c0, %c0_0] : memref<32x27xf32, #tpu.memory_space<vmem>>, vector<32x27xf32>
    %c0_1 = arith.constant 0 : index
    %c0_2 = arith.constant 0 : index
    %1 = vector.load %arg3[%c0_1, %c0_2] : memref<32x1xf32, #tpu.memory_space<vmem>>, vector<32x1xf32>
    %c0_3 = arith.constant 0 : index
    %c0_4 = arith.constant 0 : index
    %c0_5 = arith.constant 0 : index
    %2 = vector.load %arg1[%c0_3, %c0_4, %c0_5] : memref<1x27x1024xf32, #tpu.memory_space<vmem>>, vector<1x27x1024xf32>
    %3 = vector.shape_cast %2 : vector<1x27x1024xf32> to vector<27x1024xf32>
    %cst = arith.constant dense<0.000000e+00> : vector<32x1024xf32>
    %4 = tpu.matmul %0, %3, %cst {dimension_numbers = #tpu.dot_dimension_numbers<[1], [0], [0], [1], [0, 0, 1, 1], [], []>} : vector<32x27xf32>, vector<27x1024xf32>, vector<32x1024xf32> -> vector<32x1024xf32>
    %5 = vector.extract_strided_slice %4 {offsets = [0, 0], sizes = [32, 256], strides = [1, 1]} : vector<32x1024xf32> to vector<32x256xf32>
    %6 = vector.extract_strided_slice %4 {offsets = [0, 256], sizes = [32, 256], strides = [1, 1]} : vector<32x1024xf32> to vector<32x256xf32>
    %7 = vector.extract_strided_slice %4 {offsets = [0, 512], sizes = [32, 256], strides = [1, 1]} : vector<32x1024xf32> to vector<32x256xf32>
    %8 = vector.extract_strided_slice %4 {offsets = [0, 768], sizes = [32, 256], strides = [1, 1]} : vector<32x1024xf32> to vector<32x256xf32>
    %9 = arith.maximumf %5, %6 : vector<32x256xf32>
    %10 = arith.maximumf %7, %8 : vector<32x256xf32>
    %11 = arith.maximumf %9, %10 : vector<32x256xf32>
    %12 = vector.broadcast %1 : vector<32x1xf32> to vector<32x256xf32>
    %13 = arith.addf %11, %12 : vector<32x256xf32>
    %cst_6 = arith.constant 0.000000e+00 : f32
    %14 = vector.broadcast %cst_6 : f32 to vector<32x256xf32>
    %15 = arith.maximumf %13, %14 : vector<32x256xf32>
    %c0_7 = arith.constant 0 : index
    %c0_8 = arith.constant 0 : index
    %c0_9 = arith.constant 0 : index
    %16 = vector.load %arg4[%c0_7, %c0_8, %c0_9] : memref<1x32x256xf32, #tpu.memory_space<vmem>>, vector<1x32x256xf32>
    %17 = vector.shape_cast %16 : vector<1x32x256xf32> to vector<32x256xf32>
    %18 = vector.shape_cast %15 : vector<32x256xf32> to vector<1x32x256xf32>
    tpu.vector_store %arg4[%c0_7, %c0_8, %c0_9], %18 {strides = array<i32>} : memref<1x32x256xf32, #tpu.memory_space<vmem>>, vector<1x32x256xf32>,
    return
  }
  func.func @transform_0(%arg0: i32) -> (i32, i32, i32) {
    %c0_i32 = arith.constant 0 : i32
    %c0_i32_0 = arith.constant 0 : i32
    %c0_i32_1 = arith.constant 0 : i32
    return %arg0, %c0_i32, %c0_i32_0 : i32, i32, i32
  }
  func.func @transform_1(%arg0: i32) -> (i32, i32) {
    %c0_i32 = arith.constant 0 : i32
    %c0_i32_0 = arith.constant 0 : i32
    %c0_i32_1 = arith.constant 0 : i32
    return %c0_i32, %c0_i32_0 : i32, i32
  }
  func.func @transform_2(%arg0: i32) -> (i32, i32) {
    %c0_i32 = arith.constant 0 : i32
    %c0_i32_0 = arith.constant 0 : i32
    %c0_i32_1 = arith.constant 0 : i32
    return %c0_i32, %c0_i32_0 : i32, i32
  }
  func.func @transform_3(%arg0: i32) -> (i32, i32, i32) {
    %c0_i32 = arith.constant 0 : i32
    %c0_i32_0 = arith.constant 0 : i32
    %c0_i32_1 = arith.constant 0 : i32
    return %arg0, %c0_i32, %c0_i32_0 : i32, i32, i32
  }
}

module attributes {stable_mosaic.version = 11 : i64} {
  func.func @_conv_block_kernel(%arg0: i32, %arg1: memref<1x288x512xf32, #tpu.memory_space<vmem>>, %arg2: memref<64x288xf32, #tpu.memory_space<vmem>>, %arg3: memref<64x1xf32, #tpu.memory_space<vmem>>, %arg4: memref<1x64x128xf32, #tpu.memory_space<vmem>>) attributes {dimension_semantics = [#tpu.dimension_semantics<parallel>], iteration_bounds = array<i64: 2>, scalar_prefetch = 0 : i64, scratch_operands = 0 : i64, tpu.core_type = #tpu.core_type<tc>, window_params = [{transform_indices = @transform_0, window_bounds = array<i64: 1, 288, 512>}, {pipeline_mode = #tpu.pipeline_mode<synchronous>, transform_indices = @transform_1, window_bounds = array<i64: 64, 288>}, {pipeline_mode = #tpu.pipeline_mode<synchronous>, transform_indices = @transform_2, window_bounds = array<i64: 64, 1>}, {transform_indices = @transform_3, window_bounds = array<i64: 1, 64, 128>}]} {
    %c0 = arith.constant 0 : index
    %c0_0 = arith.constant 0 : index
    %0 = vector.load %arg2[%c0, %c0_0] : memref<64x288xf32, #tpu.memory_space<vmem>>, vector<64x288xf32>
    %c0_1 = arith.constant 0 : index
    %c0_2 = arith.constant 0 : index
    %1 = vector.load %arg3[%c0_1, %c0_2] : memref<64x1xf32, #tpu.memory_space<vmem>>, vector<64x1xf32>
    %c0_3 = arith.constant 0 : index
    %c0_4 = arith.constant 0 : index
    %c0_5 = arith.constant 0 : index
    %2 = vector.load %arg1[%c0_3, %c0_4, %c0_5] : memref<1x288x512xf32, #tpu.memory_space<vmem>>, vector<1x288x512xf32>
    %3 = vector.shape_cast %2 : vector<1x288x512xf32> to vector<288x512xf32>
    %cst = arith.constant dense<0.000000e+00> : vector<64x512xf32>
    %4 = tpu.matmul %0, %3, %cst {dimension_numbers = #tpu.dot_dimension_numbers<[1], [0], [0], [1], [0, 0, 1, 1], [], []>} : vector<64x288xf32>, vector<288x512xf32>, vector<64x512xf32> -> vector<64x512xf32>
    %5 = vector.extract_strided_slice %4 {offsets = [0, 0], sizes = [64, 128], strides = [1, 1]} : vector<64x512xf32> to vector<64x128xf32>
    %6 = vector.extract_strided_slice %4 {offsets = [0, 128], sizes = [64, 128], strides = [1, 1]} : vector<64x512xf32> to vector<64x128xf32>
    %7 = vector.extract_strided_slice %4 {offsets = [0, 256], sizes = [64, 128], strides = [1, 1]} : vector<64x512xf32> to vector<64x128xf32>
    %8 = vector.extract_strided_slice %4 {offsets = [0, 384], sizes = [64, 128], strides = [1, 1]} : vector<64x512xf32> to vector<64x128xf32>
    %9 = arith.maximumf %5, %6 : vector<64x128xf32>
    %10 = arith.maximumf %7, %8 : vector<64x128xf32>
    %11 = arith.maximumf %9, %10 : vector<64x128xf32>
    %12 = vector.broadcast %1 : vector<64x1xf32> to vector<64x128xf32>
    %13 = arith.addf %11, %12 : vector<64x128xf32>
    %cst_6 = arith.constant 0.000000e+00 : f32
    %14 = vector.broadcast %cst_6 : f32 to vector<64x128xf32>
    %15 = arith.maximumf %13, %14 : vector<64x128xf32>
    %c0_7 = arith.constant 0 : index
    %c0_8 = arith.constant 0 : index
    %c0_9 = arith.constant 0 : index
    %16 = vector.load %arg4[%c0_7, %c0_8, %c0_9] : memref<1x64x128xf32, #tpu.memory_space<vmem>>, vector<1x64x128xf32>
    %17 = vector.shape_cast %16 : vector<1x64x128xf32> to vector<64x128xf32>
    %18 = vector.shape_cast %15 : vector<64x128xf32> to vector<1x64x128xf32>
    tpu.vector_store %arg4[%c0_7, %c0_8, %c0_9], %18 {strides = array<i32>} : memref<1x64x128xf32, #tpu.memory_space<vmem>>, vector<1x64x128xf32>,
    return
  }
  func.func @transform_0(%arg0: i32) -> (i32, i32, i32) {
    %c0_i32 = arith.constant 0 : i32
    %c0_i32_0 = arith.constant 0 : i32
    %c0_i32_1 = arith.constant 0 : i32
    return %arg0, %c0_i32, %c0_i32_0 : i32, i32, i32
  }
  func.func @transform_1(%arg0: i32) -> (i32, i32) {
    %c0_i32 = arith.constant 0 : i32
    %c0_i32_0 = arith.constant 0 : i32
    %c0_i32_1 = arith.constant 0 : i32
    return %c0_i32, %c0_i32_0 : i32, i32
  }
  func.func @transform_2(%arg0: i32) -> (i32, i32) {
    %c0_i32 = arith.constant 0 : i32
    %c0_i32_0 = arith.constant 0 : i32
    %c0_i32_1 = arith.constant 0 : i32
    return %c0_i32, %c0_i32_0 : i32, i32
  }
  func.func @transform_3(%arg0: i32) -> (i32, i32, i32) {
    %c0_i32 = arith.constant 0 : i32
    %c0_i32_0 = arith.constant 0 : i32
    %c0_i32_1 = arith.constant 0 : i32
    return %arg0, %c0_i32, %c0_i32_0 : i32, i32, i32
  }
}

module attributes {stable_mosaic.version = 11 : i64} {
  func.func @_fc_head_kernel(%arg0: i32, %arg1: memref<8x3136xf32, #tpu.memory_space<vmem>>, %arg2: memref<3136x128xf32, #tpu.memory_space<vmem>>, %arg3: memref<1x128xf32, #tpu.memory_space<vmem>>, %arg4: memref<128x10xf32, #tpu.memory_space<vmem>>, %arg5: memref<1x10xf32, #tpu.memory_space<vmem>>, %arg6: memref<8x10xf32, #tpu.memory_space<vmem>>) attributes {dimension_semantics = [#tpu.dimension_semantics<parallel>], iteration_bounds = array<i64: 1>, scalar_prefetch = 0 : i64, scratch_operands = 0 : i64, tpu.core_type = #tpu.core_type<tc>, window_params = [{transform_indices = @transform_0, window_bounds = array<i64: 8, 3136>}, {pipeline_mode = #tpu.pipeline_mode<synchronous>, transform_indices = @transform_1, window_bounds = array<i64: 3136, 128>}, {pipeline_mode = #tpu.pipeline_mode<synchronous>, transform_indices = @transform_2, window_bounds = array<i64: 1, 128>}, {pipeline_mode = #tpu.pipeline_mode<synchronous>, transform_indices = @transform_3, window_bounds = array<i64: 128, 10>}, {pipeline_mode = #tpu.pipeline_mode<synchronous>, transform_indices = @transform_4, window_bounds = array<i64: 1, 10>}, {transform_indices = @transform_5, window_bounds = array<i64: 8, 10>}]} {
    %c0 = arith.constant 0 : index
    %c0_0 = arith.constant 0 : index
    %0 = vector.load %arg1[%c0, %c0_0] : memref<8x3136xf32, #tpu.memory_space<vmem>>, vector<8x3136xf32>
    %c0_1 = arith.constant 0 : index
    %c0_2 = arith.constant 0 : index
    %1 = vector.load %arg2[%c0_1, %c0_2] : memref<3136x128xf32, #tpu.memory_space<vmem>>, vector<3136x128xf32>
    %cst = arith.constant dense<0.000000e+00> : vector<8x128xf32>
    %2 = tpu.matmul %0, %1, %cst {dimension_numbers = #tpu.dot_dimension_numbers<[1], [0], [0], [1], [0, 0, 1, 1], [], []>} : vector<8x3136xf32>, vector<3136x128xf32>, vector<8x128xf32> -> vector<8x128xf32>
    %c0_3 = arith.constant 0 : index
    %c0_4 = arith.constant 0 : index
    %3 = vector.load %arg3[%c0_3, %c0_4] : memref<1x128xf32, #tpu.memory_space<vmem>>, vector<1x128xf32>
    %4 = vector.broadcast %3 : vector<1x128xf32> to vector<8x128xf32>
    %5 = arith.addf %2, %4 : vector<8x128xf32>
    %cst_5 = arith.constant 0.000000e+00 : f32
    %6 = vector.broadcast %cst_5 : f32 to vector<8x128xf32>
    %7 = arith.maximumf %5, %6 : vector<8x128xf32>
    %c0_6 = arith.constant 0 : index
    %c0_7 = arith.constant 0 : index
    %8 = vector.load %arg4[%c0_6, %c0_7] : memref<128x10xf32, #tpu.memory_space<vmem>>, vector<128x10xf32>
    %cst_8 = arith.constant dense<0.000000e+00> : vector<8x10xf32>
    %9 = tpu.matmul %7, %8, %cst_8 {dimension_numbers = #tpu.dot_dimension_numbers<[1], [0], [0], [1], [0, 0, 1, 1], [], []>} : vector<8x128xf32>, vector<128x10xf32>, vector<8x10xf32> -> vector<8x10xf32>
    %c0_9 = arith.constant 0 : index
    %c0_10 = arith.constant 0 : index
    %10 = vector.load %arg5[%c0_9, %c0_10] : memref<1x10xf32, #tpu.memory_space<vmem>>, vector<1x10xf32>
    %11 = vector.broadcast %10 : vector<1x10xf32> to vector<8x10xf32>
    %12 = arith.addf %9, %11 : vector<8x10xf32>
    %c0_11 = arith.constant 0 : index
    %c0_12 = arith.constant 0 : index
    %13 = vector.load %arg6[%c0_11, %c0_12] : memref<8x10xf32, #tpu.memory_space<vmem>>, vector<8x10xf32>
    tpu.vector_store %arg6[%c0_11, %c0_12], %12 {strides = array<i32>} : memref<8x10xf32, #tpu.memory_space<vmem>>, vector<8x10xf32>,
    return
  }
  func.func @transform_0(%arg0: i32) -> (i32, i32) {
    %c0_i32 = arith.constant 0 : i32
    %c0_i32_0 = arith.constant 0 : i32
    return %arg0, %c0_i32 : i32, i32
  }
  func.func @transform_1(%arg0: i32) -> (i32, i32) {
    %c0_i32 = arith.constant 0 : i32
    %c0_i32_0 = arith.constant 0 : i32
    %c0_i32_1 = arith.constant 0 : i32
    return %c0_i32, %c0_i32_0 : i32, i32
  }
  func.func @transform_2(%arg0: i32) -> (i32, i32) {
    %c0_i32 = arith.constant 0 : i32
    %c0_i32_0 = arith.constant 0 : i32
    %c0_i32_1 = arith.constant 0 : i32
    return %c0_i32, %c0_i32_0 : i32, i32
  }
  func.func @transform_3(%arg0: i32) -> (i32, i32) {
    %c0_i32 = arith.constant 0 : i32
    %c0_i32_0 = arith.constant 0 : i32
    %c0_i32_1 = arith.constant 0 : i32
    return %c0_i32, %c0_i32_0 : i32, i32
  }
  func.func @transform_4(%arg0: i32) -> (i32, i32) {
    %c0_i32 = arith.constant 0 : i32
    %c0_i32_0 = arith.constant 0 : i32
    %c0_i32_1 = arith.constant 0 : i32
    return %c0_i32, %c0_i32_0 : i32, i32
  }
  func.func @transform_5(%arg0: i32) -> (i32, i32) {
    %c0_i32 = arith.constant 0 : i32
    %c0_i32_0 = arith.constant 0 : i32
    return %arg0, %c0_i32 : i32, i32
  }
}

</mosaic_0001>

<llo_original>
// kernel: colored_mnist_forward.3
$region0: #{colored_mnist_forward.3}
  #allocation0 [shape = 'u32[]', space=smem, size = 0x4, offset = 0x4, fixed_abs, tag = 'smem constant byte address 0x4 - core index']
  #allocation1 [shape = 'u32[144,128]{1,0:T(1,128)}', space=vmem, size = 0x12000, scoped, tag = 'internal scratch']
  %s0 = inlined_call_operand.vmem [shape: f32[2,27,1024], index: 0, kind: input, shape index: {}]
  %s1 = inlined_call_operand.vmem [shape: f32[32,27], index: 1, kind: input, shape index: {}]
  %s2 = inlined_call_operand.vmem [shape: f32[32,1], index: 2, kind: input, shape index: {}]
  %s3 = inlined_call_operand.vmem [shape: f32[2,32,256], index: 3, kind: output, shape index: {}]
  %s4 = sld [smem:[#allocation0]]
  $region45: #{colored_mnist_forward.3} parent=0
    _
  %s6 = ssub.s32 1, %s4
  %s7 = scalar_select 0, %s6, %s4
  loop: start=0, step=1, limit=4
  $region2: #{colored_mnist_forward.3} parent=0 // loop_pre_header
    _
  $region3: #{colored_mnist_forward.3} parent=0 // loop_header
    %s9 = sphi 0, %s13
    %p10 = scmp.ge.s32.totalorder %s9, 4
    %s19 = sphi 0, %s21
    %s22 = sphi 0, %s19
    %s23 = sphi 0, %s22
    %s39 = sphi 0, %s23
    %s43 = sphi 0, %s43
    %s45 = sphi 0, %s43
    %s46 = sphi 0, %s45
    %s60 = sphi 0, %s46
    %s64 = sphi 0, %s64
    %s66 = sphi 0, %s64
    %s67 = sphi 0, %s66
    %s81 = sphi 0, %s67
    %s87 = sphi 0, %s89
    %s90 = sphi 0, %s87
    %s91 = sphi 0, %s90
    %s107 = sphi 0, %s91
  $region4: #{colored_mnist_forward.3} parent=0 // loop_header_branch
    %12 = sbr.rel (%p10) target = $region8
  $region5: #{colored_mnist_forward.3} parent=0 // loop_body
    %s14 = ssub.s32 %s9, 1
    %s15 = ssub.s32 %s9, 2
    %s16 = sadd.s32 %s9, 1
    %s17 = ssub.s32 %s9, %s16
    %p18 = scmp.eq.s32.totalorder %s17, 0
    %s20 = sadd.s32 %s19, 1
    %s21 = scalar_select %p18, %s19, %s20
    %p24 = pneg %p18
    %p25 = scmp.eq.s32.totalorder %s9, 1
    %p26 = por %p24, %p25
    %p27 = scmp.ne.s32.totalorder %s19, %s22
    %p28 = scmp.eq.s32.totalorder %s9, 0
    %p29 = por %p27, %p28
    %p30 = scmp.ne.s32.totalorder %s19, %s22
    %p31 = scmp.eq.s32.totalorder %s14, 1
    %p32 = por %p30, %p31
    %p33 = scmp.ne.s32.totalorder %s22, %s23
    %p34 = scmp.eq.s32.totalorder %s14, 0
    %p35 = por %p33, %p34
    %p36 = scmp.ne.s32.totalorder %s22, %s23
    %p37 = scmp.eq.s32.totalorder %s15, 1
    %p38 = por %p36, %p37
    %p40 = scmp.ne.s32.totalorder %s23, %s39
    %p41 = scmp.eq.s32.totalorder %s15, 0
    %p42 = por %p40, %p41
    %s44 = sadd.s32 %s43, 1
    %p47 = scmp.eq.s32.totalorder %s9, 1
    %p48 = scmp.ne.s32.totalorder %s43, %s45
    %p49 = scmp.eq.s32.totalorder %s9, 0
    %p50 = por %p48, %p49
    %p51 = scmp.ne.s32.totalorder %s43, %s45
    %p52 = scmp.eq.s32.totalorder %s14, 1
    %p53 = por %p51, %p52
    %p54 = scmp.ne.s32.totalorder %s45, %s46
    %p55 = scmp.eq.s32.totalorder %s14, 0
    %p56 = por %p54, %p55
    %p57 = scmp.ne.s32.totalorder %s45, %s46
    %p58 = scmp.eq.s32.totalorder %s15, 1
    %p59 = por %p57, %p58
    %p61 = scmp.ne.s32.totalorder %s46, %s60
    %p62 = scmp.eq.s32.totalorder %s15, 0
    %p63 = por %p61, %p62
    %s65 = sadd.s32 %s64, 1
    %p68 = scmp.eq.s32.totalorder %s9, 1
    %p69 = scmp.ne.s32.totalorder %s64, %s66
    %p70 = scmp.eq.s32.totalorder %s9, 0
    %p71 = por %p69, %p70
    %p72 = scmp.ne.s32.totalorder %s64, %s66
    %p73 = scmp.eq.s32.totalorder %s14, 1
    %p74 = por %p72, %p73
    %p75 = scmp.ne.s32.totalorder %s66, %s67
    %p76 = scmp.eq.s32.totalorder %s14, 0
    %p77 = por %p75, %p76
    %p78 = scmp.ne.s32.totalorder %s66, %s67
    %p79 = scmp.eq.s32.totalorder %s15, 1
    %p80 = por %p78, %p79
    %p82 = scmp.ne.s32.totalorder %s67, %s81
    %p83 = scmp.eq.s32.totalorder %s15, 0
    %p84 = por %p82, %p83
    %s85 = ssub.s32 %s9, %s16
    %p86 = scmp.eq.s32.totalorder %s85, 0
    %s88 = sadd.s32 %s87, 1
    %s89 = scalar_select %p86, %s87, %s88
    %p92 = pneg %p86
    %p93 = scmp.eq.s32.totalorder %s9, 1
    %p94 = por %p92, %p93
    %p95 = scmp.ne.s32.totalorder %s87, %s90
    %p96 = scmp.eq.s32.totalorder %s9, 0
    %p97 = por %p95, %p96
    %p98 = scmp.ne.s32.totalorder %s87, %s90
    %p99 = scmp.eq.s32.totalorder %s14, 1
    %p100 = por %p98, %p99
    %p101 = scmp.ne.s32.totalorder %s90, %s91
    %p102 = scmp.eq.s32.totalorder %s14, 0
    %p103 = por %p101, %p102
    %p104 = scmp.ne.s32.totalorder %s90, %s91
    %p105 = scmp.eq.s32.totalorder %s15, 1
    %p106 = por %p104, %p105
    %p108 = scmp.ne.s32.totalorder %s91, %s107
    %p109 = scmp.eq.s32.totalorder %s15, 0
    %p110 = por %p108, %p109
    %p111 = scmp.le.s32.totalorder 1, %s9
    %p112 = scmp.lt.s32.totalorder %s9, 3
    %p113 = pnand %p111, %p112
    %p114 = pneg %p113
    // Predicated region
    $region9: #{colored_mnist_forward.3} parent=5 // pred_check
      _
    $region10: #{colored_mnist_forward.3} parent=5 // pred_check_branch
      %116 = sbr.rel (%p113) target = $region12
    $region11: #{colored_mnist_forward.3} parent=5 // pred_region
      %s117 = ssub.s32 %s9, 1
      // Predicated region
      $region13: #{colored_mnist_forward.3} parent=11 // pred_check
        %p118 = pneg %p56
      $region14: #{colored_mnist_forward.3} parent=11 // pred_check_branch
        %120 = sbr.rel (%p118) target = $region16
      $region15: #{colored_mnist_forward.3} parent=11 // pred_region
        _
      $region16: #{colored_mnist_forward.3} parent=11 // pred_fallthru
        _
      // Predicated region
      $region17: #{colored_mnist_forward.3} parent=11 // pred_check
        %p121 = pneg %p77
      $region18: #{colored_mnist_forward.3} parent=11 // pred_check_branch
        %123 = sbr.rel (%p121) target = $region20
      $region19: #{colored_mnist_forward.3} parent=11 // pred_region
        _
      $region20: #{colored_mnist_forward.3} parent=11 // pred_fallthru
        _
    $region12: #{colored_mnist_forward.3} parent=5 // pred_fallthru
      _
    %p124 = scmp.lt.s32.totalorder %s9, 2
    // Predicated region
    $region21: #{colored_mnist_forward.3} parent=5 // pred_check
      %p125 = pneg %p124
    $region22: #{colored_mnist_forward.3} parent=5 // pred_check_branch
      %127 = sbr.rel (%p125) target = $region24
    $region23: #{colored_mnist_forward.3} parent=5 // pred_region
      // Predicated region
      $region25: #{colored_mnist_forward.3} parent=23 // pred_check
        %p128 = pneg %p29
      $region26: #{colored_mnist_forward.3} parent=23 // pred_check_branch
        %130 = sbr.rel (%p128) target = $region28
      $region27: #{colored_mnist_forward.3} parent=23 // pred_region
        %p131 = scmp.lt.s32.totalorder %s9, 1
        %s132 = scalar_select %p131, %s9, 1
        %s133 = smul.addr %s132, 32
        %s134 = smul.addr %s133, 8
        %s135 = scalar_lea.vmem %s0, %s134
      $region28: #{colored_mnist_forward.3} parent=23 // pred_fallthru
        _
    $region24: #{colored_mnist_forward.3} parent=5 // pred_fallthru
      _
    %p136 = scmp.le.s32.totalorder 1, %s9
    %p137 = scmp.lt.s32.totalorder %s9, 3
    %p138 = pnand %p136, %p137
    %p139 = pneg %p138
    // Predicated region
    $region29: #{colored_mnist_forward.3} parent=5 // pred_check
      _
    $region30: #{colored_mnist_forward.3} parent=5 // pred_check_branch
      %141 = sbr.rel (%p138) target = $region32
    $region31: #{colored_mnist_forward.3} parent=5 // pred_region
      %s142 = ssub.s32 %s9, 1
      %p143 = scmp.lt.s32.totalorder %s14, 1
      %s144 = scalar_select %p143, %s14, 1
      %s145 = smul.addr %s144, 32
      %s146 = smul.addr %s145, 8
      %s147 = scalar_lea.vmem %s0, %s146
      %p148 = pneg %p35
      %p149 = pneg %p32
      %p150 = pneg %p56
      %p151 = pneg %p53
      %p152 = pneg %p77
      %p153 = pneg %p74
      %p154 = pneg %p103
      %p155 = pneg %p100
      %p156 = scmp.lt.s32.totalorder %s14, 1
      %s157 = scalar_select %p156, %s14, 1
      %s158 = smul.addr %s157, 8
      %s159 = smul.addr %s158, 8
      %s160 = scalar_lea.vmem %s3, %s159
      %p161 = scmp.lt.s32.totalorder %s14, 1
      %s162 = scalar_select %p161, %s14, 1
      %s163 = smul.addr %s162, 32
      %s164 = smul.addr %s163, 8
      %s165 = scalar_lea.vmem %s0, %s164
      %p166 = scmp.lt.s32.totalorder %s14, 1
      %s167 = scalar_select %p166, %s14, 1
      %s168 = smul.addr %s167, 8
      %s169 = smul.addr %s168, 8
      %s170 = scalar_lea.vmem %s3, %s169
      %v171 = vld [vmem:[%s1] sm:$0xff]
      %v172 = vld [vmem:[%s1 + $0x8] sm:$0xff]
      %v173 = vld [vmem:[%s1 + $0x10] sm:$0xff]
      %v174 = vld [vmem:[%s1 + $0x18] sm:$0xff]
      %v175 = vld [vmem:[%s2] sm:$0xff]
      %v176 = vld [vmem:[%s2 + $0x8] sm:$0xff]
      %v177 = vld [vmem:[%s2 + $0x10] sm:$0xff]
      %v178 = vld [vmem:[%s2 + $0x18] sm:$0xff]
      %v179 = vld [vmem:[%s165] sm:$0xff]
      %v180 = vld [vmem:[%s165 + $0x8] sm:$0xff]
      %v181 = vld [vmem:[%s165 + $0x10] sm:$0xff]
      %v182 = vld [vmem:[%s165 + $0x18] sm:$0xff]
      %v183 = vld [vmem:[%s165 + $0x20] sm:$0xff]
      %v184 = vld [vmem:[%s165 + $0x28] sm:$0xff]
      %v185 = vld [vmem:[%s165 + $0x30] sm:$0xff]
      %v186 = vld [vmem:[%s165 + $0x38] sm:$0xff]
      %v187 = vld [vmem:[%s165 + $0x40] sm:$0xff]
      %v188 = vld [vmem:[%s165 + $0x48] sm:$0xff]
      %v189 = vld [vmem:[%s165 + $0x50] sm:$0xff]
      %v190 = vld [vmem:[%s165 + $0x58] sm:$0xff]
      %v191 = vld [vmem:[%s165 + $0x60] sm:$0xff]
      %v192 = vld [vmem:[%s165 + $0x68] sm:$0xff]
      %v193 = vld [vmem:[%s165 + $0x70] sm:$0xff]
      %v194 = vld [vmem:[%s165 + $0x78] sm:$0xff]
      %v195 = vld [vmem:[%s165 + $0x80] sm:$0xff]
      %v196 = vld [vmem:[%s165 + $0x88] sm:$0xff]
      %v197 = vld [vmem:[%s165 + $0x90] sm:$0xff]
      %v198 = vld [vmem:[%s165 + $0x98] sm:$0xff]
      %v199 = vld [vmem:[%s165 + $0xa0] sm:$0xff]
      %v200 = vld [vmem:[%s165 + $0xa8] sm:$0xff]
      %v201 = vld [vmem:[%s165 + $0xb0] sm:$0xff]
      %v202 = vld [vmem:[%s165 + $0xb8] sm:$0xff]
      %v203 = vld [vmem:[%s165 + $0xc0] sm:$0x7]
      %v204 = vld [vmem:[%s165 + $0xc8] sm:$0x7]
      %v205 = vld [vmem:[%s165 + $0xd0] sm:$0x7]
      %v206 = vld [vmem:[%s165 + $0xd8] sm:$0x7]
      %v207 = vld [vmem:[%s165 + $0xe0] sm:$0x7]
      %v208 = vld [vmem:[%s165 + $0xe8] sm:$0x7]
      %v209 = vld [vmem:[%s165 + $0xf0] sm:$0x7]
      %v210 = vld [vmem:[%s165 + $0xf8] sm:$0x7]
      %vm211 = vcmask 220160
      %v213 = vsel %vm211, %v171, 0
      %v216 = vsel %vm211, %v172, 0
      %v219 = vsel %vm211, %v173, 0
      %v222 = vsel %vm211, %v174, 0
      %vm224 = vcmask 1042432
      %v226 = vsel %vm224, %v203, 0
      %v229 = vsel %vm224, %v204, 0
      %v232 = vsel %vm224, %v205, 0
      %v235 = vsel %vm224, %v206, 0
      %v238 = vsel %vm224, %v207, 0
      %v241 = vsel %vm224, %v208, 0
      %v244 = vsel %vm224, %v209, 0
      %v247 = vsel %vm224, %v210, 0
      %249 = vmatprep.subr.mxu0 %v180
      %250 = vmatpush1.msra.mxu0 %v179
      %251 = vmatprep.subr.mxu0 %v188
      %252 = vmatpush1.msra.mxu0 %v187
      %253 = vmatprep.subr.mxu0 %v196
      %254 = vmatpush1.msra.mxu0 %v195
      %255 = vmatprep.subr.mxu0 %v229
      %256 = vmatpush1.msra.mxu0 %v226
      %257 = vmatprep.subr.mxu0 0.0
      %258 = vmatpush1.msra.mxu0 0.0
      %259 = vmatprep.subr.mxu0 0.0
      %260 = vmatpush1.msra.mxu0 0.0
      %261 = vmatprep.subr.mxu0 0.0
      %262 = vmatpush1.msra.mxu0 0.0
      %263 = vmatprep.subr.mxu0 0.0
      %264 = vmatpush1.msra.mxu0 0.0
      %265 = vmatprep.subr.mxu0 0.0
      %266 = vmatpush1.msra.mxu0 0.0
      %267 = vmatprep.subr.mxu0 0.0
      %268 = vmatpush1.msra.mxu0 0.0
      %269 = vmatprep.subr.mxu0 0.0
      %270 = vmatpush1.msra.mxu0 0.0
      %271 = vmatprep.subr.mxu0 0.0
      %272 = vmatpush1.msra.mxu0 0.0
      %273 = vmatprep.subr.mxu0 0.0
      %274 = vmatpush1.msra.mxu0 0.0
      %275 = vmatprep.subr.mxu0 0.0
      %276 = vmatpush1.msra.mxu0 0.0
      %277 = vmatprep.subr.mxu0 0.0
      %278 = vmatpush1.msra.mxu0 0.0
      %279 = vmatprep.subr.mxu0 0.0
      %280 = vmatpush1.msra.mxu0 0.0
      %281 = vmatprep.subr.mxu0 0.0
      %282 = vmatpush1.msra.mxu0 0.0
      %283 = vmatprep.subr.mxu0 0.0
      %284 = vmatpush1.msra.mxu0 0.0
      %285 = vmatprep.subr.mxu0 0.0
      %286 = vmatpush1.msra.mxu0 0.0
      %287 = vmatprep.subr.mxu0 0.0
      %288 = vmatpush1.msra.mxu0 0.0
      %289 = vmatprep.subr.mxu0 0.0
      %290 = vmatpush1.msra.mxu0 0.0
      %291 = vmatprep.subr.mxu0 0.0
      %292 = vmatpush1.msra.mxu0 0.0
      %293 = vmatprep.subr.mxu0 0.0
      %294 = vmatpush1.msra.mxu0 0.0
      %295 = vmatprep.subr.mxu0 0.0
      %296 = vmatpush1.msra.mxu0 0.0
      %297 = vmatprep.subr.mxu0 0.0
      %298 = vmatpush1.msra.mxu0 0.0
      %299 = vmatprep.subr.mxu0 0.0
      %300 = vmatpush1.msra.mxu0 0.0
      %301 = vmatprep.subr.mxu0 0.0
      %302 = vmatpush1.msra.mxu0 0.0
      %303 = vmatprep.subr.mxu0 0.0
      %304 = vmatpush1.msra.mxu0 0.0
      %305 = vmatprep.subr.mxu0 0.0
      %306 = vmatpush1.msra.mxu0 0.0
      %307 = vmatprep.subr.mxu0 0.0
      %308 = vmatpush1.msra.mxu0 0.0
      %309 = vmatprep.subr.mxu0 0.0
      %310 = vmatpush1.msra.mxu0 0.0
      %311 = vmatprep.subr.mxu0 0.0
      %312 = vmatpush1.msra.mxu0 0.0
      %313 = vmatprep.mubr.f32.mxu0 0.0
      %314 = vmatmul.mubr.f32.gmra.mrb[0].mxu0 %v213
      %v315 = vpop.f32.mrb[0].mxu0
      %v316 = vadd.f32 0.0, %v315
      %v317 = vpop.f32.mrb[0].mxu0
      %v318 = vadd.f32 0.0, %v317
      %319 = vmatprep.mubr.f32.mxu0 0.0
      %320 = vmatmul.mubr.f32.gmra.mrb[0].mxu0 %v216
      %v321 = vpop.f32.mrb[0].mxu0
      %v322 = vadd.f32 0.0, %v321
      %v323 = vpop.f32.mrb[0].mxu0
      %v324 = vadd.f32 0.0, %v323
      %325 = vmatprep.mubr.f32.mxu0 0.0
      %326 = vmatmul.mubr.f32.gmra.mrb[0].mxu0 %v219
      %v327 = vpop.f32.mrb[0].mxu0
      %v328 = vadd.f32 0.0, %v327
      %v329 = vpop.f32.mrb[0].mxu0
      %v330 = vadd.f32 0.0, %v329
      %331 = vmatprep.mubr.f32.mxu0 0.0
      %332 = vmatmul.mubr.f32.gmra.mrb[0].mxu0 %v222
      %v333 = vpop.f32.mrb[0].mxu0
      %v334 = vadd.f32 0.0, %v333
      %v335 = vpop.f32.mrb[0].mxu0
      %v336 = vadd.f32 0.0, %v335
      %337 = vdwg.mxu0
      %338 = vmatprep.subr.mxu0 %v182
      %339 = vmatpush1.msra.mxu0 %v181
      %340 = vmatprep.subr.mxu0 %v190
      %341 = vmatpush1.msra.mxu0 %v189
      %342 = vmatprep.subr.mxu0 %v198
      %343 = vmatpush1.msra.mxu0 %v197
      %344 = vmatprep.subr.mxu0 %v235
      %345 = vmatpush1.msra.mxu0 %v232
      %346 = vmatprep.subr.mxu0 0.0
      %347 = vmatpush1.msra.mxu0 0.0
      %348 = vmatprep.subr.mxu0 0.0
      %349 = vmatpush1.msra.mxu0 0.0
      %350 = vmatprep.subr.mxu0 0.0
      %351 = vmatpush1.msra.mxu0 0.0
      %352 = vmatprep.subr.mxu0 0.0
      %353 = vmatpush1.msra.mxu0 0.0
      %354 = vmatprep.subr.mxu0 0.0
      %355 = vmatpush1.msra.mxu0 0.0
      %356 = vmatprep.subr.mxu0 0.0
      %357 = vmatpush1.msra.mxu0 0.0
      %358 = vmatprep.subr.mxu0 0.0
      %359 = vmatpush1.msra.mxu0 0.0
      %360 = vmatprep.subr.mxu0 0.0
      %361 = vmatpush1.msra.mxu0 0.0
      %362 = vmatprep.subr.mxu0 0.0
      %363 = vmatpush1.msra.mxu0 0.0
      %364 = vmatprep.subr.mxu0 0.0
      %365 = vmatpush1.msra.mxu0 0.0
      %366 = vmatprep.subr.mxu0 0.0
      %367 = vmatpush1.msra.mxu0 0.0
      %368 = vmatprep.subr.mxu0 0.0
      %369 = vmatpush1.msra.mxu0 0.0
      %370 = vmatprep.subr.mxu0 0.0
      %371 = vmatpush1.msra.mxu0 0.0
      %372 = vmatprep.subr.mxu0 0.0
      %373 = vmatpush1.msra.mxu0 0.0
      %374 = vmatprep.subr.mxu0 0.0
      %375 = vmatpush1.msra.mxu0 0.0
      %376 = vmatprep.subr.mxu0 0.0
      %377 = vmatpush1.msra.mxu0 0.0
      %378 = vmatprep.subr.mxu0 0.0
      %379 = vmatpush1.msra.mxu0 0.0
      %380 = vmatprep.subr.mxu0 0.0
      %381 = vmatpush1.msra.mxu0 0.0
      %382 = vmatprep.subr.mxu0 0.0
      %383 = vmatpush1.msra.mxu0 0.0
      %384 = vmatprep.subr.mxu0 0.0
      %385 = vmatpush1.msra.mxu0 0.0
      %386 = vmatprep.subr.mxu0 0.0
      %387 = vmatpush1.msra.mxu0 0.0
      %388 = vmatprep.subr.mxu0 0.0
      %389 = vmatpush1.msra.mxu0 0.0
      %390 = vmatprep.subr.mxu0 0.0
      %391 = vmatpush1.msra.mxu0 0.0
      %392 = vmatprep.subr.mxu0 0.0
      %393 = vmatpush1.msra.mxu0 0.0
      %394 = vmatprep.subr.mxu0 0.0
      %395 = vmatpush1.msra.mxu0 0.0
      %396 = vmatprep.subr.mxu0 0.0
      %397 = vmatpush1.msra.mxu0 0.0
      %398 = vmatprep.subr.mxu0 0.0
      %399 = vmatpush1.msra.mxu0 0.0
      %400 = vmatprep.subr.mxu0 0.0
      %401 = vmatpush1.msra.mxu0 0.0
      %402 = vmatprep.mubr.f32.mxu0 0.0
      %403 = vmatmul.mubr.f32.gmra.mrb[0].mxu0 %v213
      %v404 = vpop.f32.mrb[0].mxu0
      %v405 = vadd.f32 0.0, %v404
      %v406 = vpop.f32.mrb[0].mxu0
      %v407 = vadd.f32 0.0, %v406
      %408 = vmatprep.mubr.f32.mxu0 0.0
      %409 = vmatmul.mubr.f32.gmra.mrb[0].mxu0 %v216
      %v410 = vpop.f32.mrb[0].mxu0
      %v411 = vadd.f32 0.0, %v410
      %v412 = vpop.f32.mrb[0].mxu0
      %v413 = vadd.f32 0.0, %v412
      %414 = vmatprep.mubr.f32.mxu0 0.0
      %415 = vmatmul.mubr.f32.gmra.mrb[0].mxu0 %v219
      %v416 = vpop.f32.mrb[0].mxu0
      %v417 = vadd.f32 0.0, %v416
      %v418 = vpop.f32.mrb[0].mxu0
      %v419 = vadd.f32 0.0, %v418
      %420 = vmatprep.mubr.f32.mxu0 0.0
      %421 = vmatmul.mubr.f32.gmra.mrb[0].mxu0 %v222
      %v422 = vpop.f32.mrb[0].mxu0
      %v423 = vadd.f32 0.0, %v422
      %v424 = vpop.f32.mrb[0].mxu0
      %v425 = vadd.f32 0.0, %v424
      %426 = vdwg.mxu0
      %427 = vmatprep.subr.mxu0 %v184
      %428 = vmatpush1.msra.mxu0 %v183
      %429 = vmatprep.subr.mxu0 %v192
      %430 = vmatpush1.msra.mxu0 %v191
      %431 = vmatprep.subr.mxu0 %v200
      %432 = vmatpush1.msra.mxu0 %v199
      %433 = vmatprep.subr.mxu0 %v241
      %434 = vmatpush1.msra.mxu0 %v238
      %435 = vmatprep.subr.mxu0 0.0
      %436 = vmatpush1.msra.mxu0 0.0
      %437 = vmatprep.subr.mxu0 0.0
      %438 = vmatpush1.msra.mxu0 0.0
      %439 = vmatprep.subr.mxu0 0.0
      %440 = vmatpush1.msra.mxu0 0.0
      %441 = vmatprep.subr.mxu0 0.0
      %442 = vmatpush1.msra.mxu0 0.0
      %443 = vmatprep.subr.mxu0 0.0
      %444 = vmatpush1.msra.mxu0 0.0
      %445 = vmatprep.subr.mxu0 0.0
      %446 = vmatpush1.msra.mxu0 0.0
      %447 = vmatprep.subr.mxu0 0.0
      %448 = vmatpush1.msra.mxu0 0.0
      %449 = vmatprep.subr.mxu0 0.0
      %450 = vmatpush1.msra.mxu0 0.0
      %451 = vmatprep.subr.mxu0 0.0
      %452 = vmatpush1.msra.mxu0 0.0
      %453 = vmatprep.subr.mxu0 0.0
      %454 = vmatpush1.msra.mxu0 0.0
      %455 = vmatprep.subr.mxu0 0.0
      %456 = vmatpush1.msra.mxu0 0.0
      %457 = vmatprep.subr.mxu0 0.0
      %458 = vmatpush1.msra.mxu0 0.0
      %459 = vmatprep.subr.mxu0 0.0
      %460 = vmatpush1.msra.mxu0 0.0
      %461 = vmatprep.subr.mxu0 0.0
      %462 = vmatpush1.msra.mxu0 0.0
      %463 = vmatprep.subr.mxu0 0.0
      %464 = vmatpush1.msra.mxu0 0.0
      %465 = vmatprep.subr.mxu0 0.0
      %466 = vmatpush1.msra.mxu0 0.0
      %467 = vmatprep.subr.mxu0 0.0
      %468 = vmatpush1.msra.mxu0 0.0
      %469 = vmatprep.subr.mxu0 0.0
      %470 = vmatpush1.msra.mxu0 0.0
      %471 = vmatprep.subr.mxu0 0.0
      %472 = vmatpush1.msra.mxu0 0.0
      %473 = vmatprep.subr.mxu0 0.0
      %474 = vmatpush1.msra.mxu0 0.0
      %475 = vmatprep.subr.mxu0 0.0
      %476 = vmatpush1.msra.mxu0 0.0
      %477 = vmatprep.subr.mxu0 0.0
      %478 = vmatpush1.msra.mxu0 0.0
      %479 = vmatprep.subr.mxu0 0.0
      %480 = vmatpush1.msra.mxu0 0.0
      %481 = vmatprep.subr.mxu0 0.0
      %482 = vmatpush1.msra.mxu0 0.0
      %483 = vmatprep.subr.mxu0 0.0
      %484 = vmatpush1.msra.mxu0 0.0
      %485 = vmatprep.subr.mxu0 0.0
      %486 = vmatpush1.msra.mxu0 0.0
      %487 = vmatprep.subr.mxu0 0.0
      %488 = vmatpush1.msra.mxu0 0.0
      %489 = vmatprep.subr.mxu0 0.0
      %490 = vmatpush1.msra.mxu0 0.0
      %491 = vmatprep.mubr.f32.mxu0 0.0
      %492 = vmatmul.mubr.f32.gmra.mrb[0].mxu0 %v213
      %v493 = vpop.f32.mrb[0].mxu0
      %v494 = vadd.f32 0.0, %v493
      %v495 = vpop.f32.mrb[0].mxu0
      %v496 = vadd.f32 0.0, %v495
      %497 = vmatprep.mubr.f32.mxu0 0.0
      %498 = vmatmul.mubr.f32.gmra.mrb[0].mxu0 %v216
      %v499 = vpop.f32.mrb[0].mxu0
      %v500 = vadd.f32 0.0, %v499
      %v501 = vpop.f32.mrb[0].mxu0
      %v502 = vadd.f32 0.0, %v501
      %503 = vmatprep.mubr.f32.mxu0 0.0
      %504 = vmatmul.mubr.f32.gmra.mrb[0].mxu0 %v219
      %v505 = vpop.f32.mrb[0].mxu0
      %v506 = vadd.f32 0.0, %v505
      %v507 = vpop.f32.mrb[0].mxu0
      %v508 = vadd.f32 0.0, %v507
      %509 = vmatprep.mubr.f32.mxu0 0.0
      %510 = vmatmul.mubr.f32.gmra.mrb[0].mxu0 %v222
      %v511 = vpop.f32.mrb[0].mxu0
      %v512 = vadd.f32 0.0, %v511
      %v513 = vpop.f32.mrb[0].mxu0
      %v514 = vadd.f32 0.0, %v513
      %515 = vdwg.mxu0
      %516 = vmatprep.subr.mxu0 %v186
      %517 = vmatpush1.msra.mxu0 %v185
      %518 = vmatprep.subr.mxu0 %v194
      %519 = vmatpush1.msra.mxu0 %v193
      %520 = vmatprep.subr.mxu0 %v202
      %521 = vmatpush1.msra.mxu0 %v201
      %522 = vmatprep.subr.mxu0 %v247
      %523 = vmatpush1.msra.mxu0 %v244
      %524 = vmatprep.subr.mxu0 0.0
      %525 = vmatpush1.msra.mxu0 0.0
      %526 = vmatprep.subr.mxu0 0.0
      %527 = vmatpush1.msra.mxu0 0.0
      %528 = vmatprep.subr.mxu0 0.0
      %529 = vmatpush1.msra.mxu0 0.0
      %530 = vmatprep.subr.mxu0 0.0
      %531 = vmatpush1.msra.mxu0 0.0
      %532 = vmatprep.subr.mxu0 0.0
      %533 = vmatpush1.msra.mxu0 0.0
      %534 = vmatprep.subr.mxu0 0.0
      %535 = vmatpush1.msra.mxu0 0.0
      %536 = vmatprep.subr.mxu0 0.0
      %537 = vmatpush1.msra.mxu0 0.0
      %538 = vmatprep.subr.mxu0 0.0
      %539 = vmatpush1.msra.mxu0 0.0
      %540 = vmatprep.subr.mxu0 0.0
      %541 = vmatpush1.msra.mxu0 0.0
      %542 = vmatprep.subr.mxu0 0.0
      %543 = vmatpush1.msra.mxu0 0.0
      %544 = vmatprep.subr.mxu0 0.0
      %545 = vmatpush1.msra.mxu0 0.0
      %546 = vmatprep.subr.mxu0 0.0
      %547 = vmatpush1.msra.mxu0 0.0
      %548 = vmatprep.subr.mxu0 0.0
      %549 = vmatpush1.msra.mxu0 0.0
      %550 = vmatprep.subr.mxu0 0.0
      %551 = vmatpush1.msra.mxu0 0.0
      %552 = vmatprep.subr.mxu0 0.0
      %553 = vmatpush1.msra.mxu0 0.0
      %554 = vmatprep.subr.mxu0 0.0
      %555 = vmatpush1.msra.mxu0 0.0
      %556 = vmatprep.subr.mxu0 0.0
      %557 = vmatpush1.msra.mxu0 0.0
      %558 = vmatprep.subr.mxu0 0.0
      %559 = vmatpush1.msra.mxu0 0.0
      %560 = vmatprep.subr.mxu0 0.0
      %561 = vmatpush1.msra.mxu0 0.0
      %562 = vmatprep.subr.mxu0 0.0
      %563 = vmatpush1.msra.mxu0 0.0
      %564 = vmatprep.subr.mxu0 0.0
      %565 = vmatpush1.msra.mxu0 0.0
      %566 = vmatprep.subr.mxu0 0.0
      %567 = vmatpush1.msra.mxu0 0.0
      %568 = vmatprep.subr.mxu0 0.0
      %569 = vmatpush1.msra.mxu0 0.0
      %570 = vmatprep.subr.mxu0 0.0
      %571 = vmatpush1.msra.mxu0 0.0
      %572 = vmatprep.subr.mxu0 0.0
      %573 = vmatpush1.msra.mxu0 0.0
      %574 = vmatprep.subr.mxu0 0.0
      %575 = vmatpush1.msra.mxu0 0.0
      %576 = vmatprep.subr.mxu0 0.0
      %577 = vmatpush1.msra.mxu0 0.0
      %578 = vmatprep.subr.mxu0 0.0
      %579 = vmatpush1.msra.mxu0 0.0
      %580 = vmatprep.mubr.f32.mxu0 0.0
      %581 = vmatmul.mubr.f32.gmra.mrb[0].mxu0 %v213
      %v582 = vpop.f32.mrb[0].mxu0
      %v583 = vadd.f32 0.0, %v582
      %v584 = vpop.f32.mrb[0].mxu0
      %v585 = vadd.f32 0.0, %v584
      %586 = vmatprep.mubr.f32.mxu0 0.0
      %587 = vmatmul.mubr.f32.gmra.mrb[0].mxu0 %v216
      %v588 = vpop.f32.mrb[0].mxu0
      %v589 = vadd.f32 0.0, %v588
      %v590 = vpop.f32.mrb[0].mxu0
      %v591 = vadd.f32 0.0, %v590
      %592 = vmatprep.mubr.f32.mxu0 0.0
      %593 = vmatmul.mubr.f32.gmra.mrb[0].mxu0 %v219
      %v594 = vpop.f32.mrb[0].mxu0
      %v595 = vadd.f32 0.0, %v594
      %v596 = vpop.f32.mrb[0].mxu0
      %v597 = vadd.f32 0.0, %v596
      %598 = vmatprep.mubr.f32.mxu0 0.0
      %599 = vmatmul.mubr.f32.gmra.mrb[0].mxu0 %v222
      %v600 = vpop.f32.mrb[0].mxu0
      %v601 = vadd.f32 0.0, %v600
      %v602 = vpop.f32.mrb[0].mxu0
      %v603 = vadd.f32 0.0, %v602
      %604 = vdwg.mxu0
      %v605 = vmax.f32 %v316, %v405
      %v606 = vmax.f32 %v318, %v407
      %v607 = vmax.f32 %v322, %v411
      %v608 = vmax.f32 %v324, %v413
      %v609 = vmax.f32 %v328, %v417
      %v610 = vmax.f32 %v330, %v419
      %v611 = vmax.f32 %v334, %v423
      %v612 = vmax.f32 %v336, %v425
      %v613 = vmax.f32 %v494, %v583
      %v614 = vmax.f32 %v496, %v585
      %v615 = vmax.f32 %v500, %v589
      %v616 = vmax.f32 %v502, %v591
      %v617 = vmax.f32 %v506, %v595
      %v618 = vmax.f32 %v508, %v597
      %v619 = vmax.f32 %v512, %v601
      %v620 = vmax.f32 %v514, %v603
      %v621 = vmax.f32 %v605, %v613
      %v622 = vmax.f32 %v606, %v614
      %v623 = vmax.f32 %v607, %v615
      %v624 = vmax.f32 %v608, %v616
      %v625 = vmax.f32 %v609, %v617
      %v626 = vmax.f32 %v610, %v618
      %v627 = vmax.f32 %v611, %v619
      %v628 = vmax.f32 %v612, %v620
      %630 = vset.pattern.permute.xlu0 0
      %631 = vperm.xlu0 %630, %v175
      %v632 = vpop.permute.xlu0 %631
      %635 = vset.pattern.permute.xlu0 0
      %636 = vperm.xlu0 %635, %v176
      %v637 = vpop.permute.xlu0 %636
      %640 = vset.pattern.permute.xlu0 0
      %641 = vperm.xlu0 %640, %v177
      %v642 = vpop.permute.xlu0 %641
      %645 = vset.pattern.permute.xlu0 0
      %646 = vperm.xlu0 %645, %v178
      %v647 = vpop.permute.xlu0 %646
      %v649 = vadd.f32 %v621, %v632
      %v650 = vadd.f32 %v622, %v632
      %v651 = vadd.f32 %v623, %v637
      %v652 = vadd.f32 %v624, %v637
      %v653 = vadd.f32 %v625, %v642
      %v654 = vadd.f32 %v626, %v642
      %v655 = vadd.f32 %v627, %v647
      %v656 = vadd.f32 %v628, %v647
      %v657 = vmax.f32 %v649, 0.0
      %v658 = vmax.f32 %v650, 0.0
      %v659 = vmax.f32 %v651, 0.0
      %v660 = vmax.f32 %v652, 0.0
      %v661 = vmax.f32 %v653, 0.0
      %v662 = vmax.f32 %v654, 0.0
      %v663 = vmax.f32 %v655, 0.0
      %v664 = vmax.f32 %v656, 0.0
      %665 = vst [vmem:[%s170] sm:$0xff] %v657
      %666 = vst [vmem:[%s170 + $0x8] sm:$0xff] %v658
      %667 = vst [vmem:[%s170 + $0x10] sm:$0xff] %v659
      %668 = vst [vmem:[%s170 + $0x18] sm:$0xff] %v660
      %669 = vst [vmem:[%s170 + $0x20] sm:$0xff] %v661
      %670 = vst [vmem:[%s170 + $0x28] sm:$0xff] %v662
      %671 = vst [vmem:[%s170 + $0x30] sm:$0xff] %v663
      %672 = vst [vmem:[%s170 + $0x38] sm:$0xff] %v664
      %p673 = scmp.lt.s32.totalorder %s14, 1
      %s674 = scalar_select %p673, %s14, 1
      %s675 = smul.addr %s674, 8
      %s676 = smul.addr %s675, 8
      %s677 = scalar_lea.vmem %s3, %s676
      // Predicated region
      $region33: #{colored_mnist_forward.3} parent=31 // pred_check
        %p678 = pneg %p100
      $region34: #{colored_mnist_forward.3} parent=31 // pred_check_branch
        %680 = sbr.rel (%p678) target = $region36
      $region35: #{colored_mnist_forward.3} parent=31 // pred_region
        _
      $region36: #{colored_mnist_forward.3} parent=31 // pred_fallthru
        _
    $region32: #{colored_mnist_forward.3} parent=5 // pred_fallthru
      _
    %p681 = scmp.le.s32.totalorder 2, %s9
    // Predicated region
    $region37: #{colored_mnist_forward.3} parent=5 // pred_check
      %p682 = pneg %p681
    $region38: #{colored_mnist_forward.3} parent=5 // pred_check_branch
      %684 = sbr.rel (%p682) target = $region40
    $region39: #{colored_mnist_forward.3} parent=5 // pred_region
      %s685 = ssub.s32 %s9, 2
      // Predicated region
      $region41: #{colored_mnist_forward.3} parent=39 // pred_check
        %p686 = pneg %p106
      $region42: #{colored_mnist_forward.3} parent=39 // pred_check_branch
        %688 = sbr.rel (%p686) target = $region44
      $region43: #{colored_mnist_forward.3} parent=39 // pred_region
        %p689 = scmp.lt.s32.totalorder %s15, 1
        %s690 = scalar_select %p689, %s15, 1
        %s691 = smul.addr %s690, 8
        %s692 = smul.addr %s691, 8
        %s693 = scalar_lea.vmem %s3, %s692
      $region44: #{colored_mnist_forward.3} parent=39 // pred_fallthru
        _
    $region40: #{colored_mnist_forward.3} parent=5 // pred_fallthru
      _
  $region6: #{colored_mnist_forward.3} parent=0 // loop_footer
    %s13 = sadd.s32 1, %s9
  $region7: #{colored_mnist_forward.3} parent=0 // loop_footer_branch
    %8 = sbr.rel target = $region3
  $region8: #{colored_mnist_forward.3} parent=0 // loop_exit
    _

// kernel: colored_mnist_forward.4
$region0: #{colored_mnist_forward.4}
  #allocation0 [shape = 'u32[]', space=smem, size = 0x4, offset = 0x4, fixed_abs, tag = 'smem constant byte address 0x4 - core index']
  #allocation1 [shape = 'u32[144,128]{1,0:T(1,128)}', space=vmem, size = 0x12000, scoped, tag = 'internal scratch']
  %s0 = inlined_call_operand.vmem [shape: f32[2,288,512], index: 0, kind: input, shape index: {}]
  %s1 = inlined_call_operand.vmem [shape: f32[64,288], index: 1, kind: input, shape index: {}]
  %s2 = inlined_call_operand.vmem [shape: f32[64,1], index: 2, kind: input, shape index: {}]
  %s3 = inlined_call_operand.vmem [shape: f32[2,64,128], index: 3, kind: output, shape index: {}]
  %s4 = sld [smem:[#allocation0]]
  $region45: #{colored_mnist_forward.4} parent=0
    _
  %s6 = ssub.s32 1, %s4
  %s7 = scalar_select 0, %s6, %s4
  loop: start=0, step=1, limit=4
  $region2: #{colored_mnist_forward.4} parent=0 // loop_pre_header
    _
  $region3: #{colored_mnist_forward.4} parent=0 // loop_header
    %s9 = sphi 0, %s13
    %p10 = scmp.ge.s32.totalorder %s9, 4
    %s19 = sphi 0, %s21
    %s22 = sphi 0, %s19
    %s23 = sphi 0, %s22
    %s39 = sphi 0, %s23
    %s43 = sphi 0, %s43
    %s45 = sphi 0, %s43
    %s46 = sphi 0, %s45
    %s60 = sphi 0, %s46
    %s64 = sphi 0, %s64
    %s66 = sphi 0, %s64
    %s67 = sphi 0, %s66
    %s81 = sphi 0, %s67
    %s87 = sphi 0, %s89
    %s90 = sphi 0, %s87
    %s91 = sphi 0, %s90
    %s107 = sphi 0, %s91
  $region4: #{colored_mnist_forward.4} parent=0 // loop_header_branch
    %12 = sbr.rel (%p10) target = $region8
  $region5: #{colored_mnist_forward.4} parent=0 // loop_body
    %s14 = ssub.s32 %s9, 1
    %s15 = ssub.s32 %s9, 2
    %s16 = sadd.s32 %s9, 1
    %s17 = ssub.s32 %s9, %s16
    %p18 = scmp.eq.s32.totalorder %s17, 0
    %s20 = sadd.s32 %s19, 1
    %s21 = scalar_select %p18, %s19, %s20
    %p24 = pneg %p18
    %p25 = scmp.eq.s32.totalorder %s9, 1
    %p26 = por %p24, %p25
    %p27 = scmp.ne.s32.totalorder %s19, %s22
    %p28 = scmp.eq.s32.totalorder %s9, 0
    %p29 = por %p27, %p28
    %p30 = scmp.ne.s32.totalorder %s19, %s22
    %p31 = scmp.eq.s32.totalorder %s14, 1
    %p32 = por %p30, %p31
    %p33 = scmp.ne.s32.totalorder %s22, %s23
    %p34 = scmp.eq.s32.totalorder %s14, 0
    %p35 = por %p33, %p34
    %p36 = scmp.ne.s32.totalorder %s22, %s23
    %p37 = scmp.eq.s32.totalorder %s15, 1
    %p38 = por %p36, %p37
    %p40 = scmp.ne.s32.totalorder %s23, %s39
    %p41 = scmp.eq.s32.totalorder %s15, 0
    %p42 = por %p40, %p41
    %s44 = sadd.s32 %s43, 1
    %p47 = scmp.eq.s32.totalorder %s9, 1
    %p48 = scmp.ne.s32.totalorder %s43, %s45
    %p49 = scmp.eq.s32.totalorder %s9, 0
    %p50 = por %p48, %p49
    %p51 = scmp.ne.s32.totalorder %s43, %s45
    %p52 = scmp.eq.s32.totalorder %s14, 1
    %p53 = por %p51, %p52
    %p54 = scmp.ne.s32.totalorder %s45, %s46
    %p55 = scmp.eq.s32.totalorder %s14, 0
    %p56 = por %p54, %p55
    %p57 = scmp.ne.s32.totalorder %s45, %s46
    %p58 = scmp.eq.s32.totalorder %s15, 1
    %p59 = por %p57, %p58
    %p61 = scmp.ne.s32.totalorder %s46, %s60
    %p62 = scmp.eq.s32.totalorder %s15, 0
    %p63 = por %p61, %p62
    %s65 = sadd.s32 %s64, 1
    %p68 = scmp.eq.s32.totalorder %s9, 1
    %p69 = scmp.ne.s32.totalorder %s64, %s66
    %p70 = scmp.eq.s32.totalorder %s9, 0
    %p71 = por %p69, %p70
    %p72 = scmp.ne.s32.totalorder %s64, %s66
    %p73 = scmp.eq.s32.totalorder %s14, 1
    %p74 = por %p72, %p73
    %p75 = scmp.ne.s32.totalorder %s66, %s67
    %p76 = scmp.eq.s32.totalorder %s14, 0
    %p77 = por %p75, %p76
    %p78 = scmp.ne.s32.totalorder %s66, %s67
    %p79 = scmp.eq.s32.totalorder %s15, 1
    %p80 = por %p78, %p79
    %p82 = scmp.ne.s32.totalorder %s67, %s81
    %p83 = scmp.eq.s32.totalorder %s15, 0
    %p84 = por %p82, %p83
    %s85 = ssub.s32 %s9, %s16
    %p86 = scmp.eq.s32.totalorder %s85, 0
    %s88 = sadd.s32 %s87, 1
    %s89 = scalar_select %p86, %s87, %s88
    %p92 = pneg %p86
    %p93 = scmp.eq.s32.totalorder %s9, 1
    %p94 = por %p92, %p93
    %p95 = scmp.ne.s32.totalorder %s87, %s90
    %p96 = scmp.eq.s32.totalorder %s9, 0
    %p97 = por %p95, %p96
    %p98 = scmp.ne.s32.totalorder %s87, %s90
    %p99 = scmp.eq.s32.totalorder %s14, 1
    %p100 = por %p98, %p99
    %p101 = scmp.ne.s32.totalorder %s90, %s91
    %p102 = scmp.eq.s32.totalorder %s14, 0
    %p103 = por %p101, %p102
    %p104 = scmp.ne.s32.totalorder %s90, %s91
    %p105 = scmp.eq.s32.totalorder %s15, 1
    %p106 = por %p104, %p105
    %p108 = scmp.ne.s32.totalorder %s91, %s107
    %p109 = scmp.eq.s32.totalorder %s15, 0
    %p110 = por %p108, %p109
    %p111 = scmp.le.s32.totalorder 1, %s9
    %p112 = scmp.lt.s32.totalorder %s9, 3
    %p113 = pnand %p111, %p112
    %p114 = pneg %p113
    // Predicated region
    $region9: #{colored_mnist_forward.4} parent=5 // pred_check
      _
    $region10: #{colored_mnist_forward.4} parent=5 // pred_check_branch
      %116 = sbr.rel (%p113) target = $region12
    $region11: #{colored_mnist_forward.4} parent=5 // pred_region
      %s117 = ssub.s32 %s9, 1
      // Predicated region
      $region13: #{colored_mnist_forward.4} parent=11 // pred_check
        %p118 = pneg %p56
      $region14: #{colored_mnist_forward.4} parent=11 // pred_check_branch
        %120 = sbr.rel (%p118) target = $region16
      $region15: #{colored_mnist_forward.4} parent=11 // pred_region
        _
      $region16: #{colored_mnist_forward.4} parent=11 // pred_fallthru
        _
      // Predicated region
      $region17: #{colored_mnist_forward.4} parent=11 // pred_check
        %p121 = pneg %p77
      $region18: #{colored_mnist_forward.4} parent=11 // pred_check_branch
        %123 = sbr.rel (%p121) target = $region20
      $region19: #{colored_mnist_forward.4} parent=11 // pred_region
        _
      $region20: #{colored_mnist_forward.4} parent=11 // pred_fallthru
        _
    $region12: #{colored_mnist_forward.4} parent=5 // pred_fallthru
      _
    %p124 = scmp.lt.s32.totalorder %s9, 2
    // Predicated region
    $region21: #{colored_mnist_forward.4} parent=5 // pred_check
      %p125 = pneg %p124
    $region22: #{colored_mnist_forward.4} parent=5 // pred_check_branch
      %127 = sbr.rel (%p125) target = $region24
    $region23: #{colored_mnist_forward.4} parent=5 // pred_region
      // Predicated region
      $region25: #{colored_mnist_forward.4} parent=23 // pred_check
        %p128 = pneg %p29
      $region26: #{colored_mnist_forward.4} parent=23 // pred_check_branch
        %130 = sbr.rel (%p128) target = $region28
      $region27: #{colored_mnist_forward.4} parent=23 // pred_region
        %p131 = scmp.lt.s32.totalorder %s9, 1
        %s132 = scalar_select %p131, %s9, 1
        %s133 = smul.addr %s132, 144
        %s134 = smul.addr %s133, 8
        %s135 = scalar_lea.vmem %s0, %s134
      $region28: #{colored_mnist_forward.4} parent=23 // pred_fallthru
        _
    $region24: #{colored_mnist_forward.4} parent=5 // pred_fallthru
      _
    %p136 = scmp.le.s32.totalorder 1, %s9
    %p137 = scmp.lt.s32.totalorder %s9, 3
    %p138 = pnand %p136, %p137
    %p139 = pneg %p138
    // Predicated region
    $region29: #{colored_mnist_forward.4} parent=5 // pred_check
      _
    $region30: #{colored_mnist_forward.4} parent=5 // pred_check_branch
      %141 = sbr.rel (%p138) target = $region32
    $region31: #{colored_mnist_forward.4} parent=5 // pred_region
      %s142 = ssub.s32 %s9, 1
      %p143 = scmp.lt.s32.totalorder %s14, 1
      %s144 = scalar_select %p143, %s14, 1
      %s145 = smul.addr %s144, 144
      %s146 = smul.addr %s145, 8
      %s147 = scalar_lea.vmem %s0, %s146
      %p148 = pneg %p35
      %p149 = pneg %p32
      %p150 = pneg %p56
      %p151 = pneg %p53
      %p152 = pneg %p77
      %p153 = pneg %p74
      %p154 = pneg %p103
      %p155 = pneg %p100
      %p156 = scmp.lt.s32.totalorder %s14, 1
      %s157 = scalar_select %p156, %s14, 1
      %s158 = smul.addr %s157, 8
      %s159 = smul.addr %s158, 8
      %s160 = scalar_lea.vmem %s3, %s159
      %p161 = scmp.lt.s32.totalorder %s14, 1
      %s162 = scalar_select %p161, %s14, 1
      %s163 = smul.addr %s162, 144
      %s164 = smul.addr %s163, 8
      %s165 = scalar_lea.vmem %s0, %s164
      %p166 = scmp.lt.s32.totalorder %s14, 1
      %s167 = scalar_select %p166, %s14, 1
      %s168 = smul.addr %s167, 8
      %s169 = smul.addr %s168, 8
      %s170 = scalar_lea.vmem %s3, %s169
      %v171 = vld [vmem:[%s1] sm:$0xff]
      %v172 = vld [vmem:[%s1 + $0x8] sm:$0xff]
      %v173 = vld [vmem:[%s1 + $0x10] sm:$0xff]
      %v174 = vld [vmem:[%s1 + $0x18] sm:$0xff]
      %v175 = vld [vmem:[%s1 + $0x20] sm:$0xff]
      %v176 = vld [vmem:[%s1 + $0x28] sm:$0xff]
      %v177 = vld [vmem:[%s1 + $0x30] sm:$0xff]
      %v178 = vld [vmem:[%s1 + $0x38] sm:$0xff]
      %v179 = vld [vmem:[%s1 + $0x40] sm:$0xff]
      %v180 = vld [vmem:[%s1 + $0x48] sm:$0xff]
      %v181 = vld [vmem:[%s1 + $0x50] sm:$0xff]
      %v182 = vld [vmem:[%s1 + $0x58] sm:$0xff]
      %v183 = vld [vmem:[%s1 + $0x60] sm:$0xff]
      %v184 = vld [vmem:[%s1 + $0x68] sm:$0xff]
      %v185 = vld [vmem:[%s1 + $0x70] sm:$0xff]
      %v186 = vld [vmem:[%s1 + $0x78] sm:$0xff]
      %v187 = vld [vmem:[%s1 + $0x80] sm:$0xff]
      %v188 = vld [vmem:[%s1 + $0x88] sm:$0xff]
      %v189 = vld [vmem:[%s1 + $0x90] sm:$0xff]
      %v190 = vld [vmem:[%s1 + $0x98] sm:$0xff]
      %v191 = vld [vmem:[%s1 + $0xa0] sm:$0xff]
      %v192 = vld [vmem:[%s1 + $0xa8] sm:$0xff]
      %v193 = vld [vmem:[%s1 + $0xb0] sm:$0xff]
      %v194 = vld [vmem:[%s1 + $0xb8] sm:$0xff]
      %v195 = vld [vmem:[%s2] sm:$0xff]
      %v196 = vld [vmem:[%s2 + $0x8] sm:$0xff]
      %v197 = vld [vmem:[%s2 + $0x10] sm:$0xff]
      %v198 = vld [vmem:[%s2 + $0x18] sm:$0xff]
      %v199 = vld [vmem:[%s2 + $0x20] sm:$0xff]
      %v200 = vld [vmem:[%s2 + $0x28] sm:$0xff]
      %v201 = vld [vmem:[%s2 + $0x30] sm:$0xff]
      %v202 = vld [vmem:[%s2 + $0x38] sm:$0xff]
      %v203 = vld [vmem:[%s165] sm:$0xff]
      %v204 = vld [vmem:[%s165 + $0x8] sm:$0xff]
      %v205 = vld [vmem:[%s165 + $0x10] sm:$0xff]
      %v206 = vld [vmem:[%s165 + $0x18] sm:$0xff]
      %v207 = vld [vmem:[%s165 + $0x20] sm:$0xff]
      %v208 = vld [vmem:[%s165 + $0x28] sm:$0xff]
      %v209 = vld [vmem:[%s165 + $0x30] sm:$0xff]
      %v210 = vld [vmem:[%s165 + $0x38] sm:$0xff]
      %v211 = vld [vmem:[%s165 + $0x40] sm:$0xff]
      %v212 = vld [vmem:[%s165 + $0x48] sm:$0xff]
      %v213 = vld [vmem:[%s165 + $0x50] sm:$0xff]
      %v214 = vld [vmem:[%s165 + $0x58] sm:$0xff]
      %v215 = vld [vmem:[%s165 + $0x60] sm:$0xff]
      %v216 = vld [vmem:[%s165 + $0x68] sm:$0xff]
      %v217 = vld [vmem:[%s165 + $0x70] sm:$0xff]
      %v218 = vld [vmem:[%s165 + $0x78] sm:$0xff]
      %v219 = vld [vmem:[%s165 + $0x80] sm:$0xff]
      %v220 = vld [vmem:[%s165 + $0x88] sm:$0xff]
      %v221 = vld [vmem:[%s165 + $0x90] sm:$0xff]
      %v222 = vld [vmem:[%s165 + $0x98] sm:$0xff]
      %v223 = vld [vmem:[%s165 + $0xa0] sm:$0xff]
      %v224 = vld [vmem:[%s165 + $0xa8] sm:$0xff]
      %v225 = vld [vmem:[%s165 + $0xb0] sm:$0xff]
      %v226 = vld [vmem:[%s165 + $0xb8] sm:$0xff]
      %v227 = vld [vmem:[%s165 + $0xc0] sm:$0xff]
      %v228 = vld [vmem:[%s165 + $0xc8] sm:$0xff]
      %v229 = vld [vmem:[%s165 + $0xd0] sm:$0xff]
      %v230 = vld [vmem:[%s165 + $0xd8] sm:$0xff]
      %v231 = vld [vmem:[%s165 + $0xe0] sm:$0xff]
      %v232 = vld [vmem:[%s165 + $0xe8] sm:$0xff]
      %v233 = vld [vmem:[%s165 + $0xf0] sm:$0xff]
      %v234 = vld [vmem:[%s165 + $0xf8] sm:$0xff]
      %v235 = vld [vmem:[%s165 + $0x100] sm:$0xff]
      %v236 = vld [vmem:[%s165 + $0x108] sm:$0xff]
      %v237 = vld [vmem:[%s165 + $0x110] sm:$0xff]
      %v238 = vld [vmem:[%s165 + $0x118] sm:$0xff]
      %v239 = vld [vmem:[%s165 + $0x120] sm:$0xff]
      %v240 = vld [vmem:[%s165 + $0x128] sm:$0xff]
      %v241 = vld [vmem:[%s165 + $0x130] sm:$0xff]
      %v242 = vld [vmem:[%s165 + $0x138] sm:$0xff]
      %v243 = vld [vmem:[%s165 + $0x140] sm:$0xff]
      %v244 = vld [vmem:[%s165 + $0x148] sm:$0xff]
      %v245 = vld [vmem:[%s165 + $0x150] sm:$0xff]
      %v246 = vld [vmem:[%s165 + $0x158] sm:$0xff]
      %v247 = vld [vmem:[%s165 + $0x160] sm:$0xff]
      %v248 = vld [vmem:[%s165 + $0x168] sm:$0xff]
      %v249 = vld [vmem:[%s165 + $0x170] sm:$0xff]
      %v250 = vld [vmem:[%s165 + $0x178] sm:$0xff]
      %v251 = vld [vmem:[%s165 + $0x180] sm:$0xff]
      %v252 = vld [vmem:[%s165 + $0x188] sm:$0xff]
      %v253 = vld [vmem:[%s165 + $0x190] sm:$0xff]
      %v254 = vld [vmem:[%s165 + $0x198] sm:$0xff]
      %v255 = vld [vmem:[%s165 + $0x1a0] sm:$0xff]
      %v256 = vld [vmem:[%s165 + $0x1a8] sm:$0xff]
      %v257 = vld [vmem:[%s165 + $0x1b0] sm:$0xff]
      %v258 = vld [vmem:[%s165 + $0x1b8] sm:$0xff]
      %v259 = vld [vmem:[%s165 + $0x1c0] sm:$0xff]
      %v260 = vld [vmem:[%s165 + $0x1c8] sm:$0xff]
      %v261 = vld [vmem:[%s165 + $0x1d0] sm:$0xff]
      %v262 = vld [vmem:[%s165 + $0x1d8] sm:$0xff]
      %v263 = vld [vmem:[%s165 + $0x1e0] sm:$0xff]
      %v264 = vld [vmem:[%s165 + $0x1e8] sm:$0xff]
      %v265 = vld [vmem:[%s165 + $0x1f0] sm:$0xff]
      %v266 = vld [vmem:[%s165 + $0x1f8] sm:$0xff]
      %v267 = vld [vmem:[%s165 + $0x200] sm:$0xff]
      %v268 = vld [vmem:[%s165 + $0x208] sm:$0xff]
      %v269 = vld [vmem:[%s165 + $0x210] sm:$0xff]
      %v270 = vld [vmem:[%s165 + $0x218] sm:$0xff]
      %v271 = vld [vmem:[%s165 + $0x220] sm:$0xff]
      %v272 = vld [vmem:[%s165 + $0x228] sm:$0xff]
      %v273 = vld [vmem:[%s165 + $0x230] sm:$0xff]
      %v274 = vld [vmem:[%s165 + $0x238] sm:$0xff]
      %v275 = vld [vmem:[%s165 + $0x240] sm:$0xff]
      %v276 = vld [vmem:[%s165 + $0x248] sm:$0xff]
      %v277 = vld [vmem:[%s165 + $0x250] sm:$0xff]
      %v278 = vld [vmem:[%s165 + $0x258] sm:$0xff]
      %v279 = vld [vmem:[%s165 + $0x260] sm:$0xff]
      %v280 = vld [vmem:[%s165 + $0x268] sm:$0xff]
      %v281 = vld [vmem:[%s165 + $0x270] sm:$0xff]
      %v282 = vld [vmem:[%s165 + $0x278] sm:$0xff]
      %v283 = vld [vmem:[%s165 + $0x280] sm:$0xff]
      %v284 = vld [vmem:[%s165 + $0x288] sm:$0xff]
      %v285 = vld [vmem:[%s165 + $0x290] sm:$0xff]
      %v286 = vld [vmem:[%s165 + $0x298] sm:$0xff]
      %v287 = vld [vmem:[%s165 + $0x2a0] sm:$0xff]
      %v288 = vld [vmem:[%s165 + $0x2a8] sm:$0xff]
      %v289 = vld [vmem:[%s165 + $0x2b0] sm:$0xff]
      %v290 = vld [vmem:[%s165 + $0x2b8] sm:$0xff]
      %v291 = vld [vmem:[%s165 + $0x2c0] sm:$0xff]
      %v292 = vld [vmem:[%s165 + $0x2c8] sm:$0xff]
      %v293 = vld [vmem:[%s165 + $0x2d0] sm:$0xff]
      %v294 = vld [vmem:[%s165 + $0x2d8] sm:$0xff]
      %v295 = vld [vmem:[%s165 + $0x2e0] sm:$0xff]
      %v296 = vld [vmem:[%s165 + $0x2e8] sm:$0xff]
      %v297 = vld [vmem:[%s165 + $0x2f0] sm:$0xff]
      %v298 = vld [vmem:[%s165 + $0x2f8] sm:$0xff]
      %v299 = vld [vmem:[%s165 + $0x300] sm:$0xff]
      %v300 = vld [vmem:[%s165 + $0x308] sm:$0xff]
      %v301 = vld [vmem:[%s165 + $0x310] sm:$0xff]
      %v302 = vld [vmem:[%s165 + $0x318] sm:$0xff]
      %v303 = vld [vmem:[%s165 + $0x320] sm:$0xff]
      %v304 = vld [vmem:[%s165 + $0x328] sm:$0xff]
      %v305 = vld [vmem:[%s165 + $0x330] sm:$0xff]
      %v306 = vld [vmem:[%s165 + $0x338] sm:$0xff]
      %v307 = vld [vmem:[%s165 + $0x340] sm:$0xff]
      %v308 = vld [vmem:[%s165 + $0x348] sm:$0xff]
      %v309 = vld [vmem:[%s165 + $0x350] sm:$0xff]
      %v310 = vld [vmem:[%s165 + $0x358] sm:$0xff]
      %v311 = vld [vmem:[%s165 + $0x360] sm:$0xff]
      %v312 = vld [vmem:[%s165 + $0x368] sm:$0xff]
      %v313 = vld [vmem:[%s165 + $0x370] sm:$0xff]
      %v314 = vld [vmem:[%s165 + $0x378] sm:$0xff]
      %v315 = vld [vmem:[%s165 + $0x380] sm:$0xff]
      %v316 = vld [vmem:[%s165 + $0x388] sm:$0xff]
      %v317 = vld [vmem:[%s165 + $0x390] sm:$0xff]
      %v318 = vld [vmem:[%s165 + $0x398] sm:$0xff]
      %v319 = vld [vmem:[%s165 + $0x3a0] sm:$0xff]
      %v320 = vld [vmem:[%s165 + $0x3a8] sm:$0xff]
      %v321 = vld [vmem:[%s165 + $0x3b0] sm:$0xff]
      %v322 = vld [vmem:[%s165 + $0x3b8] sm:$0xff]
      %v323 = vld [vmem:[%s165 + $0x3c0] sm:$0xff]
      %v324 = vld [vmem:[%s165 + $0x3c8] sm:$0xff]
      %v325 = vld [vmem:[%s165 + $0x3d0] sm:$0xff]
      %v326 = vld [vmem:[%s165 + $0x3d8] sm:$0xff]
      %v327 = vld [vmem:[%s165 + $0x3e0] sm:$0xff]
      %v328 = vld [vmem:[%s165 + $0x3e8] sm:$0xff]
      %v329 = vld [vmem:[%s165 + $0x3f0] sm:$0xff]
      %v330 = vld [vmem:[%s165 + $0x3f8] sm:$0xff]
      %v331 = vld [vmem:[%s165 + $0x400] sm:$0xff]
      %v332 = vld [vmem:[%s165 + $0x408] sm:$0xff]
      %v333 = vld [vmem:[%s165 + $0x410] sm:$0xff]
      %v334 = vld [vmem:[%s165 + $0x418] sm:$0xff]
      %v335 = vld [vmem:[%s165 + $0x420] sm:$0xff]
      %v336 = vld [vmem:[%s165 + $0x428] sm:$0xff]
      %v337 = vld [vmem:[%s165 + $0x430] sm:$0xff]
      %v338 = vld [vmem:[%s165 + $0x438] sm:$0xff]
      %v339 = vld [vmem:[%s165 + $0x440] sm:$0xff]
      %v340 = vld [vmem:[%s165 + $0x448] sm:$0xff]
      %v341 = vld [vmem:[%s165 + $0x450] sm:$0xff]
      %v342 = vld [vmem:[%s165 + $0x458] sm:$0xff]
      %v343 = vld [vmem:[%s165 + $0x460] sm:$0xff]
      %v344 = vld [vmem:[%s165 + $0x468] sm:$0xff]
      %v345 = vld [vmem:[%s165 + $0x470] sm:$0xff]
      %v346 = vld [vmem:[%s165 + $0x478] sm:$0xff]
      %vm347 = vcmask 261120
      %v349 = vsel %vm347, %v173, 0
      %v352 = vsel %vm347, %v176, 0
      %v355 = vsel %vm347, %v179, 0
      %v358 = vsel %vm347, %v182, 0
      %v361 = vsel %vm347, %v185, 0
      %v364 = vsel %vm347, %v188, 0
      %v367 = vsel %vm347, %v191, 0
      %v370 = vsel %vm347, %v194, 0
      %372 = vmatprep.subr.mxu0 %v204
      %373 = vmatpush1.msra.mxu0 %v203
      %374 = vmatprep.subr.mxu0 %v208
      %375 = vmatpush1.msra.mxu0 %v207
      %376 = vmatprep.subr.mxu0 %v212
      %377 = vmatpush1.msra.mxu0 %v211
      %378 = vmatprep.subr.mxu0 %v216
      %379 = vmatpush1.msra.mxu0 %v215
      %380 = vmatprep.subr.mxu0 %v220
      %381 = vmatpush1.msra.mxu0 %v219
      %382 = vmatprep.subr.mxu0 %v224
      %383 = vmatpush1.msra.mxu0 %v223
      %384 = vmatprep.subr.mxu0 %v228
      %385 = vmatpush1.msra.mxu0 %v227
      %386 = vmatprep.subr.mxu0 %v232
      %387 = vmatpush1.msra.mxu0 %v231
      %388 = vmatprep.subr.mxu0 %v236
      %389 = vmatpush1.msra.mxu0 %v235
      %390 = vmatprep.subr.mxu0 %v240
      %391 = vmatpush1.msra.mxu0 %v239
      %392 = vmatprep.subr.mxu0 %v244
      %393 = vmatpush1.msra.mxu0 %v243
      %394 = vmatprep.subr.mxu0 %v248
      %395 = vmatpush1.msra.mxu0 %v247
      %396 = vmatprep.subr.mxu0 %v252
      %397 = vmatpush1.msra.mxu0 %v251
      %398 = vmatprep.subr.mxu0 %v256
      %399 = vmatpush1.msra.mxu0 %v255
      %400 = vmatprep.subr.mxu0 %v260
      %401 = vmatpush1.msra.mxu0 %v259
      %402 = vmatprep.subr.mxu0 %v264
      %403 = vmatpush1.msra.mxu0 %v263
      %404 = vmatprep.subr.mxu0 %v268
      %405 = vmatpush1.msra.mxu0 %v267
      %406 = vmatprep.subr.mxu0 %v272
      %407 = vmatpush1.msra.mxu0 %v271
      %408 = vmatprep.subr.mxu0 %v276
      %409 = vmatpush1.msra.mxu0 %v275
      %410 = vmatprep.subr.mxu0 %v280
      %411 = vmatpush1.msra.mxu0 %v279
      %412 = vmatprep.subr.mxu0 %v284
      %413 = vmatpush1.msra.mxu0 %v283
      %414 = vmatprep.subr.mxu0 %v288
      %415 = vmatpush1.msra.mxu0 %v287
      %416 = vmatprep.subr.mxu0 %v292
      %417 = vmatpush1.msra.mxu0 %v291
      %418 = vmatprep.subr.mxu0 %v296
      %419 = vmatpush1.msra.mxu0 %v295
      %420 = vmatprep.subr.mxu0 %v300
      %421 = vmatpush1.msra.mxu0 %v299
      %422 = vmatprep.subr.mxu0 %v304
      %423 = vmatpush1.msra.mxu0 %v303
      %424 = vmatprep.subr.mxu0 %v308
      %425 = vmatpush1.msra.mxu0 %v307
      %426 = vmatprep.subr.mxu0 %v312
      %427 = vmatpush1.msra.mxu0 %v311
      %428 = vmatprep.subr.mxu0 %v316
      %429 = vmatpush1.msra.mxu0 %v315
      %430 = vmatprep.subr.mxu0 %v320
      %431 = vmatpush1.msra.mxu0 %v319
      %432 = vmatprep.subr.mxu0 %v324
      %433 = vmatpush1.msra.mxu0 %v323
      %434 = vmatprep.subr.mxu0 %v328
      %435 = vmatpush1.msra.mxu0 %v327
      %436 = vmatprep.mubr.f32.mxu0 %v172
      %437 = vmatmul.mubr.f32.gmra.mrb[0].mxu0 %v171
      %v438 = vpop.f32.mrb[0].mxu0
      %v439 = vadd.f32 0.0, %v438
      %v440 = vpop.f32.mrb[0].mxu0
      %v441 = vadd.f32 0.0, %v440
      %442 = vmatprep.mubr.f32.mxu0 %v175
      %443 = vmatmul.mubr.f32.gmra.mrb[0].mxu0 %v174
      %v444 = vpop.f32.mrb[0].mxu0
      %v445 = vadd.f32 0.0, %v444
      %v446 = vpop.f32.mrb[0].mxu0
      %v447 = vadd.f32 0.0, %v446
      %448 = vmatprep.mubr.f32.mxu0 %v178
      %449 = vmatmul.mubr.f32.gmra.mrb[0].mxu0 %v177
      %v450 = vpop.f32.mrb[0].mxu0
      %v451 = vadd.f32 0.0, %v450
      %v452 = vpop.f32.mrb[0].mxu0
      %v453 = vadd.f32 0.0, %v452
      %454 = vmatprep.mubr.f32.mxu0 %v181
      %455 = vmatmul.mubr.f32.gmra.mrb[0].mxu0 %v180
      %v456 = vpop.f32.mrb[0].mxu0
      %v457 = vadd.f32 0.0, %v456
      %v458 = vpop.f32.mrb[0].mxu0
      %v459 = vadd.f32 0.0, %v458
      %460 = vmatprep.mubr.f32.mxu0 %v184
      %461 = vmatmul.mubr.f32.gmra.mrb[0].mxu0 %v183
      %v462 = vpop.f32.mrb[0].mxu0
      %v463 = vadd.f32 0.0, %v462
      %v464 = vpop.f32.mrb[0].mxu0
      %v465 = vadd.f32 0.0, %v464
      %466 = vmatprep.mubr.f32.mxu0 %v187
      %467 = vmatmul.mubr.f32.gmra.mrb[0].mxu0 %v186
      %v468 = vpop.f32.mrb[0].mxu0
      %v469 = vadd.f32 0.0, %v468
      %v470 = vpop.f32.mrb[0].mxu0
      %v471 = vadd.f32 0.0, %v470
      %472 = vmatprep.mubr.f32.mxu0 %v190
      %473 = vmatmul.mubr.f32.gmra.mrb[0].mxu0 %v189
      %v474 = vpop.f32.mrb[0].mxu0
      %v475 = vadd.f32 0.0, %v474
      %v476 = vpop.f32.mrb[0].mxu0
      %v477 = vadd.f32 0.0, %v476
      %478 = vmatprep.mubr.f32.mxu0 %v193
      %479 = vmatmul.mubr.f32.gmra.mrb[0].mxu0 %v192
      %v480 = vpop.f32.mrb[0].mxu0
      %v481 = vadd.f32 0.0, %v480
      %v482 = vpop.f32.mrb[0].mxu0
      %v483 = vadd.f32 0.0, %v482
      %484 = vdwg.mxu0
      %485 = vmatprep.subr.mxu0 %v332
      %486 = vmatpush1.msra.mxu0 %v331
      %487 = vmatprep.subr.mxu0 %v336
      %488 = vmatpush1.msra.mxu0 %v335
      %489 = vmatprep.subr.mxu0 %v340
      %490 = vmatpush1.msra.mxu0 %v339
      %491 = vmatprep.subr.mxu0 %v344
      %492 = vmatpush1.msra.mxu0 %v343
      %493 = vmatprep.subr.mxu0 0.0
      %494 = vmatpush1.msra.mxu0 0.0
      %495 = vmatprep.subr.mxu0 0.0
      %496 = vmatpush1.msra.mxu0 0.0
      %497 = vmatprep.subr.mxu0 0.0
      %498 = vmatpush1.msra.mxu0 0.0
      %499 = vmatprep.subr.mxu0 0.0
      %500 = vmatpush1.msra.mxu0 0.0
      %501 = vmatprep.subr.mxu0 0.0
      %502 = vmatpush1.msra.mxu0 0.0
      %503 = vmatprep.subr.mxu0 0.0
      %504 = vmatpush1.msra.mxu0 0.0
      %505 = vmatprep.subr.mxu0 0.0
      %506 = vmatpush1.msra.mxu0 0.0
      %507 = vmatprep.subr.mxu0 0.0
      %508 = vmatpush1.msra.mxu0 0.0
      %509 = vmatprep.subr.mxu0 0.0
      %510 = vmatpush1.msra.mxu0 0.0
      %511 = vmatprep.subr.mxu0 0.0
      %512 = vmatpush1.msra.mxu0 0.0
      %513 = vmatprep.subr.mxu0 0.0
      %514 = vmatpush1.msra.mxu0 0.0
      %515 = vmatprep.subr.mxu0 0.0
      %516 = vmatpush1.msra.mxu0 0.0
      %517 = vmatprep.subr.mxu0 0.0
      %518 = vmatpush1.msra.mxu0 0.0
      %519 = vmatprep.subr.mxu0 0.0
      %520 = vmatpush1.msra.mxu0 0.0
      %521 = vmatprep.subr.mxu0 0.0
      %522 = vmatpush1.msra.mxu0 0.0
      %523 = vmatprep.subr.mxu0 0.0
      %524 = vmatpush1.msra.mxu0 0.0
      %525 = vmatprep.subr.mxu0 0.0
      %526 = vmatpush1.msra.mxu0 0.0
      %527 = vmatprep.subr.mxu0 0.0
      %528 = vmatpush1.msra.mxu0 0.0
      %529 = vmatprep.subr.mxu0 0.0
      %530 = vmatpush1.msra.mxu0 0.0
      %531 = vmatprep.subr.mxu0 0.0
      %532 = vmatpush1.msra.mxu0 0.0
      %533 = vmatprep.subr.mxu0 0.0
      %534 = vmatpush1.msra.mxu0 0.0
      %535 = vmatprep.subr.mxu0 0.0
      %536 = vmatpush1.msra.mxu0 0.0
      %537 = vmatprep.subr.mxu0 0.0
      %538 = vmatpush1.msra.mxu0 0.0
      %539 = vmatprep.subr.mxu0 0.0
      %540 = vmatpush1.msra.mxu0 0.0
      %541 = vmatprep.subr.mxu0 0.0
      %542 = vmatpush1.msra.mxu0 0.0
      %543 = vmatprep.subr.mxu0 0.0
      %544 = vmatpush1.msra.mxu0 0.0
      %545 = vmatprep.subr.mxu0 0.0
      %546 = vmatpush1.msra.mxu0 0.0
      %547 = vmatprep.subr.mxu0 0.0
      %548 = vmatpush1.msra.mxu0 0.0
      %549 = vmatprep.mubr.f32.mxu0 0.0
      %550 = vmatmul.mubr.f32.gmra.mrb[0].mxu0 %v349
      %v551 = vpop.f32.mrb[0].mxu0
      %v552 = vadd.f32 %v439, %v551
      %v553 = vpop.f32.mrb[0].mxu0
      %v554 = vadd.f32 %v441, %v553
      %555 = vmatprep.mubr.f32.mxu0 0.0
      %556 = vmatmul.mubr.f32.gmra.mrb[0].mxu0 %v352
      %v557 = vpop.f32.mrb[0].mxu0
      %v558 = vadd.f32 %v445, %v557
      %v559 = vpop.f32.mrb[0].mxu0
      %v560 = vadd.f32 %v447, %v559
      %561 = vmatprep.mubr.f32.mxu0 0.0
      %562 = vmatmul.mubr.f32.gmra.mrb[0].mxu0 %v355
      %v563 = vpop.f32.mrb[0].mxu0
      %v564 = vadd.f32 %v451, %v563
      %v565 = vpop.f32.mrb[0].mxu0
      %v566 = vadd.f32 %v453, %v565
      %567 = vmatprep.mubr.f32.mxu0 0.0
      %568 = vmatmul.mubr.f32.gmra.mrb[0].mxu0 %v358
      %v569 = vpop.f32.mrb[0].mxu0
      %v570 = vadd.f32 %v457, %v569
      %v571 = vpop.f32.mrb[0].mxu0
      %v572 = vadd.f32 %v459, %v571
      %573 = vmatprep.mubr.f32.mxu0 0.0
      %574 = vmatmul.mubr.f32.gmra.mrb[0].mxu0 %v361
      %v575 = vpop.f32.mrb[0].mxu0
      %v576 = vadd.f32 %v463, %v575
      %v577 = vpop.f32.mrb[0].mxu0
      %v578 = vadd.f32 %v465, %v577
      %579 = vmatprep.mubr.f32.mxu0 0.0
      %580 = vmatmul.mubr.f32.gmra.mrb[0].mxu0 %v364
      %v581 = vpop.f32.mrb[0].mxu0
      %v582 = vadd.f32 %v469, %v581
      %v583 = vpop.f32.mrb[0].mxu0
      %v584 = vadd.f32 %v471, %v583
      %585 = vmatprep.mubr.f32.mxu0 0.0
      %586 = vmatmul.mubr.f32.gmra.mrb[0].mxu0 %v367
      %v587 = vpop.f32.mrb[0].mxu0
      %v588 = vadd.f32 %v475, %v587
      %v589 = vpop.f32.mrb[0].mxu0
      %v590 = vadd.f32 %v477, %v589
      %591 = vmatprep.mubr.f32.mxu0 0.0
      %592 = vmatmul.mubr.f32.gmra.mrb[0].mxu0 %v370
      %v593 = vpop.f32.mrb[0].mxu0
      %v594 = vadd.f32 %v481, %v593
      %v595 = vpop.f32.mrb[0].mxu0
      %v596 = vadd.f32 %v483, %v595
      %597 = vdwg.mxu0
      %598 = vmatprep.subr.mxu0 %v206
      %599 = vmatpush1.msra.mxu0 %v205
      %600 = vmatprep.subr.mxu0 %v210
      %601 = vmatpush1.msra.mxu0 %v209
      %602 = vmatprep.subr.mxu0 %v214
      %603 = vmatpush1.msra.mxu0 %v213
      %604 = vmatprep.subr.mxu0 %v218
      %605 = vmatpush1.msra.mxu0 %v217
      %606 = vmatprep.subr.mxu0 %v222
      %607 = vmatpush1.msra.mxu0 %v221
      %608 = vmatprep.subr.mxu0 %v226
      %609 = vmatpush1.msra.mxu0 %v225
      %610 = vmatprep.subr.mxu0 %v230
      %611 = vmatpush1.msra.mxu0 %v229
      %612 = vmatprep.subr.mxu0 %v234
      %613 = vmatpush1.msra.mxu0 %v233
      %614 = vmatprep.subr.mxu0 %v238
      %615 = vmatpush1.msra.mxu0 %v237
      %616 = vmatprep.subr.mxu0 %v242
      %617 = vmatpush1.msra.mxu0 %v241
      %618 = vmatprep.subr.mxu0 %v246
      %619 = vmatpush1.msra.mxu0 %v245
      %620 = vmatprep.subr.mxu0 %v250
      %621 = vmatpush1.msra.mxu0 %v249
      %622 = vmatprep.subr.mxu0 %v254
      %623 = vmatpush1.msra.mxu0 %v253
      %624 = vmatprep.subr.mxu0 %v258
      %625 = vmatpush1.msra.mxu0 %v257
      %626 = vmatprep.subr.mxu0 %v262
      %627 = vmatpush1.msra.mxu0 %v261
      %628 = vmatprep.subr.mxu0 %v266
      %629 = vmatpush1.msra.mxu0 %v265
      %630 = vmatprep.subr.mxu0 %v270
      %631 = vmatpush1.msra.mxu0 %v269
      %632 = vmatprep.subr.mxu0 %v274
      %633 = vmatpush1.msra.mxu0 %v273
      %634 = vmatprep.subr.mxu0 %v278
      %635 = vmatpush1.msra.mxu0 %v277
      %636 = vmatprep.subr.mxu0 %v282
      %637 = vmatpush1.msra.mxu0 %v281
      %638 = vmatprep.subr.mxu0 %v286
      %639 = vmatpush1.msra.mxu0 %v285
      %640 = vmatprep.subr.mxu0 %v290
      %641 = vmatpush1.msra.mxu0 %v289
      %642 = vmatprep.subr.mxu0 %v294
      %643 = vmatpush1.msra.mxu0 %v293
      %644 = vmatprep.subr.mxu0 %v298
      %645 = vmatpush1.msra.mxu0 %v297
      %646 = vmatprep.subr.mxu0 %v302
      %647 = vmatpush1.msra.mxu0 %v301
      %648 = vmatprep.subr.mxu0 %v306
      %649 = vmatpush1.msra.mxu0 %v305
      %650 = vmatprep.subr.mxu0 %v310
      %651 = vmatpush1.msra.mxu0 %v309
      %652 = vmatprep.subr.mxu0 %v314
      %653 = vmatpush1.msra.mxu0 %v313
      %654 = vmatprep.subr.mxu0 %v318
      %655 = vmatpush1.msra.mxu0 %v317
      %656 = vmatprep.subr.mxu0 %v322
      %657 = vmatpush1.msra.mxu0 %v321
      %658 = vmatprep.subr.mxu0 %v326
      %659 = vmatpush1.msra.mxu0 %v325
      %660 = vmatprep.subr.mxu0 %v330
      %661 = vmatpush1.msra.mxu0 %v329
      %662 = vmatprep.mubr.f32.mxu0 %v172
      %663 = vmatmul.mubr.f32.gmra.mrb[0].mxu0 %v171
      %v664 = vpop.f32.mrb[0].mxu0
      %v665 = vadd.f32 0.0, %v664
      %v666 = vpop.f32.mrb[0].mxu0
      %v667 = vadd.f32 0.0, %v666
      %668 = vmatprep.mubr.f32.mxu0 %v175
      %669 = vmatmul.mubr.f32.gmra.mrb[0].mxu0 %v174
      %v670 = vpop.f32.mrb[0].mxu0
      %v671 = vadd.f32 0.0, %v670
      %v672 = vpop.f32.mrb[0].mxu0
      %v673 = vadd.f32 0.0, %v672
      %674 = vmatprep.mubr.f32.mxu0 %v178
      %675 = vmatmul.mubr.f32.gmra.mrb[0].mxu0 %v177
      %v676 = vpop.f32.mrb[0].mxu0
      %v677 = vadd.f32 0.0, %v676
      %v678 = vpop.f32.mrb[0].mxu0
      %v679 = vadd.f32 0.0, %v678
      %680 = vmatprep.mubr.f32.mxu0 %v181
      %681 = vmatmul.mubr.f32.gmra.mrb[0].mxu0 %v180
      %v682 = vpop.f32.mrb[0].mxu0
      %v683 = vadd.f32 0.0, %v682
      %v684 = vpop.f32.mrb[0].mxu0
      %v685 = vadd.f32 0.0, %v684
      %686 = vmatprep.mubr.f32.mxu0 %v184
      %687 = vmatmul.mubr.f32.gmra.mrb[0].mxu0 %v183
      %v688 = vpop.f32.mrb[0].mxu0
      %v689 = vadd.f32 0.0, %v688
      %v690 = vpop.f32.mrb[0].mxu0
      %v691 = vadd.f32 0.0, %v690
      %692 = vmatprep.mubr.f32.mxu0 %v187
      %693 = vmatmul.mubr.f32.gmra.mrb[0].mxu0 %v186
      %v694 = vpop.f32.mrb[0].mxu0
      %v695 = vadd.f32 0.0, %v694
      %v696 = vpop.f32.mrb[0].mxu0
      %v697 = vadd.f32 0.0, %v696
      %698 = vmatprep.mubr.f32.mxu0 %v190
      %699 = vmatmul.mubr.f32.gmra.mrb[0].mxu0 %v189
      %v700 = vpop.f32.mrb[0].mxu0
      %v701 = vadd.f32 0.0, %v700
      %v702 = vpop.f32.mrb[0].mxu0
      %v703 = vadd.f32 0.0, %v702
      %704 = vmatprep.mubr.f32.mxu0 %v193
      %705 = vmatmul.mubr.f32.gmra.mrb[0].mxu0 %v192
      %v706 = vpop.f32.mrb[0].mxu0
      %v707 = vadd.f32 0.0, %v706
      %v708 = vpop.f32.mrb[0].mxu0
      %v709 = vadd.f32 0.0, %v708
      %710 = vdwg.mxu0
      %711 = vmatprep.subr.mxu0 %v334
      %712 = vmatpush1.msra.mxu0 %v333
      %713 = vmatprep.subr.mxu0 %v338
      %714 = vmatpush1.msra.mxu0 %v337
      %715 = vmatprep.subr.mxu0 %v342
      %716 = vmatpush1.msra.mxu0 %v341
      %717 = vmatprep.subr.mxu0 %v346
      %718 = vmatpush1.msra.mxu0 %v345
      %719 = vmatprep.subr.mxu0 0.0
      %720 = vmatpush1.msra.mxu0 0.0
      %721 = vmatprep.subr.mxu0 0.0
      %722 = vmatpush1.msra.mxu0 0.0
      %723 = vmatprep.subr.mxu0 0.0
      %724 = vmatpush1.msra.mxu0 0.0
      %725 = vmatprep.subr.mxu0 0.0
      %726 = vmatpush1.msra.mxu0 0.0
      %727 = vmatprep.subr.mxu0 0.0
      %728 = vmatpush1.msra.mxu0 0.0
      %729 = vmatprep.subr.mxu0 0.0
      %730 = vmatpush1.msra.mxu0 0.0
      %731 = vmatprep.subr.mxu0 0.0
      %732 = vmatpush1.msra.mxu0 0.0
      %733 = vmatprep.subr.mxu0 0.0
      %734 = vmatpush1.msra.mxu0 0.0
      %735 = vmatprep.subr.mxu0 0.0
      %736 = vmatpush1.msra.mxu0 0.0
      %737 = vmatprep.subr.mxu0 0.0
      %738 = vmatpush1.msra.mxu0 0.0
      %739 = vmatprep.subr.mxu0 0.0
      %740 = vmatpush1.msra.mxu0 0.0
      %741 = vmatprep.subr.mxu0 0.0
      %742 = vmatpush1.msra.mxu0 0.0
      %743 = vmatprep.subr.mxu0 0.0
      %744 = vmatpush1.msra.mxu0 0.0
      %745 = vmatprep.subr.mxu0 0.0
      %746 = vmatpush1.msra.mxu0 0.0
      %747 = vmatprep.subr.mxu0 0.0
      %748 = vmatpush1.msra.mxu0 0.0
      %749 = vmatprep.subr.mxu0 0.0
      %750 = vmatpush1.msra.mxu0 0.0
      %751 = vmatprep.subr.mxu0 0.0
      %752 = vmatpush1.msra.mxu0 0.0
      %753 = vmatprep.subr.mxu0 0.0
      %754 = vmatpush1.msra.mxu0 0.0
      %755 = vmatprep.subr.mxu0 0.0
      %756 = vmatpush1.msra.mxu0 0.0
      %757 = vmatprep.subr.mxu0 0.0
      %758 = vmatpush1.msra.mxu0 0.0
      %759 = vmatprep.subr.mxu0 0.0
      %760 = vmatpush1.msra.mxu0 0.0
      %761 = vmatprep.subr.mxu0 0.0
      %762 = vmatpush1.msra.mxu0 0.0
      %763 = vmatprep.subr.mxu0 0.0
      %764 = vmatpush1.msra.mxu0 0.0
      %765 = vmatprep.subr.mxu0 0.0
      %766 = vmatpush1.msra.mxu0 0.0
      %767 = vmatprep.subr.mxu0 0.0
      %768 = vmatpush1.msra.mxu0 0.0
      %769 = vmatprep.subr.mxu0 0.0
      %770 = vmatpush1.msra.mxu0 0.0
      %771 = vmatprep.subr.mxu0 0.0
      %772 = vmatpush1.msra.mxu0 0.0
      %773 = vmatprep.subr.mxu0 0.0
      %774 = vmatpush1.msra.mxu0 0.0
      %775 = vmatprep.mubr.f32.mxu0 0.0
      %776 = vmatmul.mubr.f32.gmra.mrb[0].mxu0 %v349
      %v777 = vpop.f32.mrb[0].mxu0
      %v778 = vadd.f32 %v665, %v777
      %v779 = vpop.f32.mrb[0].mxu0
      %v780 = vadd.f32 %v667, %v779
      %781 = vmatprep.mubr.f32.mxu0 0.0
      %782 = vmatmul.mubr.f32.gmra.mrb[0].mxu0 %v352
      %v783 = vpop.f32.mrb[0].mxu0
      %v784 = vadd.f32 %v671, %v783
      %v785 = vpop.f32.mrb[0].mxu0
      %v786 = vadd.f32 %v673, %v785
      %787 = vmatprep.mubr.f32.mxu0 0.0
      %788 = vmatmul.mubr.f32.gmra.mrb[0].mxu0 %v355
      %v789 = vpop.f32.mrb[0].mxu0
      %v790 = vadd.f32 %v677, %v789
      %v791 = vpop.f32.mrb[0].mxu0
      %v792 = vadd.f32 %v679, %v791
      %793 = vmatprep.mubr.f32.mxu0 0.0
      %794 = vmatmul.mubr.f32.gmra.mrb[0].mxu0 %v358
      %v795 = vpop.f32.mrb[0].mxu0
      %v796 = vadd.f32 %v683, %v795
      %v797 = vpop.f32.mrb[0].mxu0
      %v798 = vadd.f32 %v685, %v797
      %799 = vmatprep.mubr.f32.mxu0 0.0
      %800 = vmatmul.mubr.f32.gmra.mrb[0].mxu0 %v361
      %v801 = vpop.f32.mrb[0].mxu0
      %v802 = vadd.f32 %v689, %v801
      %v803 = vpop.f32.mrb[0].mxu0
      %v804 = vadd.f32 %v691, %v803
      %805 = vmatprep.mubr.f32.mxu0 0.0
      %806 = vmatmul.mubr.f32.gmra.mrb[0].mxu0 %v364
      %v807 = vpop.f32.mrb[0].mxu0
      %v808 = vadd.f32 %v695, %v807
      %v809 = vpop.f32.mrb[0].mxu0
      %v810 = vadd.f32 %v697, %v809
      %811 = vmatprep.mubr.f32.mxu0 0.0
      %812 = vmatmul.mubr.f32.gmra.mrb[0].mxu0 %v367
      %v813 = vpop.f32.mrb[0].mxu0
      %v814 = vadd.f32 %v701, %v813
      %v815 = vpop.f32.mrb[0].mxu0
      %v816 = vadd.f32 %v703, %v815
      %817 = vmatprep.mubr.f32.mxu0 0.0
      %818 = vmatmul.mubr.f32.gmra.mrb[0].mxu0 %v370
      %v819 = vpop.f32.mrb[0].mxu0
      %v820 = vadd.f32 %v707, %v819
      %v821 = vpop.f32.mrb[0].mxu0
      %v822 = vadd.f32 %v709, %v821
      %823 = vdwg.mxu0
      %v824 = vmax.f32 %v552, %v554
      %v825 = vmax.f32 %v558, %v560
      %v826 = vmax.f32 %v564, %v566
      %v827 = vmax.f32 %v570, %v572
      %v828 = vmax.f32 %v576, %v578
      %v829 = vmax.f32 %v582, %v584
      %v830 = vmax.f32 %v588, %v590
      %v831 = vmax.f32 %v594, %v596
      %v832 = vmax.f32 %v778, %v780
      %v833 = vmax.f32 %v784, %v786
      %v834 = vmax.f32 %v790, %v792
      %v835 = vmax.f32 %v796, %v798
      %v836 = vmax.f32 %v802, %v804
      %v837 = vmax.f32 %v808, %v810
      %v838 = vmax.f32 %v814, %v816
      %v839 = vmax.f32 %v820, %v822
      %v840 = vmax.f32 %v824, %v832
      %v841 = vmax.f32 %v825, %v833
      %v842 = vmax.f32 %v826, %v834
      %v843 = vmax.f32 %v827, %v835
      %v844 = vmax.f32 %v828, %v836
      %v845 = vmax.f32 %v829, %v837
      %v846 = vmax.f32 %v830, %v838
      %v847 = vmax.f32 %v831, %v839
      %849 = vset.pattern.permute.xlu0 0
      %850 = vperm.xlu0 %849, %v195
      %v851 = vpop.permute.xlu0 %850
      %854 = vset.pattern.permute.xlu0 0
      %855 = vperm.xlu0 %854, %v196
      %v856 = vpop.permute.xlu0 %855
      %859 = vset.pattern.permute.xlu0 0
      %860 = vperm.xlu0 %859, %v197
      %v861 = vpop.permute.xlu0 %860
      %864 = vset.pattern.permute.xlu0 0
      %865 = vperm.xlu0 %864, %v198
      %v866 = vpop.permute.xlu0 %865
      %869 = vset.pattern.permute.xlu0 0
      %870 = vperm.xlu0 %869, %v199
      %v871 = vpop.permute.xlu0 %870
      %874 = vset.pattern.permute.xlu0 0
      %875 = vperm.xlu0 %874, %v200
      %v876 = vpop.permute.xlu0 %875
      %879 = vset.pattern.permute.xlu0 0
      %880 = vperm.xlu0 %879, %v201
      %v881 = vpop.permute.xlu0 %880
      %884 = vset.pattern.permute.xlu0 0
      %885 = vperm.xlu0 %884, %v202
      %v886 = vpop.permute.xlu0 %885
      %v888 = vadd.f32 %v840, %v851
      %v889 = vadd.f32 %v841, %v856
      %v890 = vadd.f32 %v842, %v861
      %v891 = vadd.f32 %v843, %v866
      %v892 = vadd.f32 %v844, %v871
      %v893 = vadd.f32 %v845, %v876
      %v894 = vadd.f32 %v846, %v881
      %v895 = vadd.f32 %v847, %v886
      %v896 = vmax.f32 %v888, 0.0
      %v897 = vmax.f32 %v889, 0.0
      %v898 = vmax.f32 %v890, 0.0
      %v899 = vmax.f32 %v891, 0.0
      %v900 = vmax.f32 %v892, 0.0
      %v901 = vmax.f32 %v893, 0.0
      %v902 = vmax.f32 %v894, 0.0
      %v903 = vmax.f32 %v895, 0.0
      %904 = vst [vmem:[%s170] sm:$0xff] %v896
      %905 = vst [vmem:[%s170 + $0x8] sm:$0xff] %v897
      %906 = vst [vmem:[%s170 + $0x10] sm:$0xff] %v898
      %907 = vst [vmem:[%s170 + $0x18] sm:$0xff] %v899
      %908 = vst [vmem:[%s170 + $0x20] sm:$0xff] %v900
      %909 = vst [vmem:[%s170 + $0x28] sm:$0xff] %v901
      %910 = vst [vmem:[%s170 + $0x30] sm:$0xff] %v902
      %911 = vst [vmem:[%s170 + $0x38] sm:$0xff] %v903
      %p912 = scmp.lt.s32.totalorder %s14, 1
      %s913 = scalar_select %p912, %s14, 1
      %s914 = smul.addr %s913, 8
      %s915 = smul.addr %s914, 8
      %s916 = scalar_lea.vmem %s3, %s915
      // Predicated region
      $region33: #{colored_mnist_forward.4} parent=31 // pred_check
        %p917 = pneg %p100
      $region34: #{colored_mnist_forward.4} parent=31 // pred_check_branch
        %919 = sbr.rel (%p917) target = $region36
      $region35: #{colored_mnist_forward.4} parent=31 // pred_region
        _
      $region36: #{colored_mnist_forward.4} parent=31 // pred_fallthru
        _
    $region32: #{colored_mnist_forward.4} parent=5 // pred_fallthru
      _
    %p920 = scmp.le.s32.totalorder 2, %s9
    // Predicated region
    $region37: #{colored_mnist_forward.4} parent=5 // pred_check
      %p921 = pneg %p920
    $region38: #{colored_mnist_forward.4} parent=5 // pred_check_branch
      %923 = sbr.rel (%p921) target = $region40
    $region39: #{colored_mnist_forward.4} parent=5 // pred_region
      %s924 = ssub.s32 %s9, 2
      // Predicated region
      $region41: #{colored_mnist_forward.4} parent=39 // pred_check
        %p925 = pneg %p106
      $region42: #{colored_mnist_forward.4} parent=39 // pred_check_branch
        %927 = sbr.rel (%p925) target = $region44
      $region43: #{colored_mnist_forward.4} parent=39 // pred_region
        %p928 = scmp.lt.s32.totalorder %s15, 1
        %s929 = scalar_select %p928, %s15, 1
        %s930 = smul.addr %s929, 8
        %s931 = smul.addr %s930, 8
        %s932 = scalar_lea.vmem %s3, %s931
      $region44: #{colored_mnist_forward.4} parent=39 // pred_fallthru
        _
    $region40: #{colored_mnist_forward.4} parent=5 // pred_fallthru
      _
  $region6: #{colored_mnist_forward.4} parent=0 // loop_footer
    %s13 = sadd.s32 1, %s9
  $region7: #{colored_mnist_forward.4} parent=0 // loop_footer_branch
    %8 = sbr.rel target = $region3
  $region8: #{colored_mnist_forward.4} parent=0 // loop_exit
    _

// kernel: colored_mnist_forward.5
$region0: #{colored_mnist_forward.5}
  #allocation0 [shape = 'u32[]', space=smem, size = 0x4, offset = 0x4, fixed_abs, tag = 'smem constant byte address 0x4 - core index']
  #allocation1 [shape = 'u32[144,128]{1,0:T(1,128)}', space=vmem, size = 0x12000, scoped, tag = 'internal scratch']
  %s0 = inlined_call_operand.vmem [shape: f32[8,3136], index: 0, kind: input, shape index: {}]
  %s1 = inlined_call_operand.vmem [shape: f32[3136,128], index: 1, kind: input, shape index: {}]
  %s2 = inlined_call_operand.vmem [shape: f32[1,128], index: 2, kind: input, shape index: {}]
  %s3 = inlined_call_operand.vmem [shape: f32[128,10], index: 3, kind: input, shape index: {}]
  %s4 = inlined_call_operand.vmem [shape: f32[1,10], index: 4, kind: input, shape index: {}]
  %s5 = inlined_call_operand.vmem [shape: f32[8,10], index: 5, kind: output, shape index: {}]
  %s6 = sld [smem:[#allocation0]]
  $region30: #{colored_mnist_forward.5} parent=0
    _
  %s8 = ssub.s32 1, %s6
  %s9 = scalar_select 0, %s8, %s6
  // Predicated region
  $region2: #{colored_mnist_forward.5} parent=0 // pred_check
    _
  $region3: #{colored_mnist_forward.5} parent=0 // pred_check_branch
    %11 = sbr.rel (0) target = $region5
  $region4: #{colored_mnist_forward.5} parent=0 // pred_region
    _
  $region5: #{colored_mnist_forward.5} parent=0 // pred_fallthru
    _
  // Predicated region
  $region6: #{colored_mnist_forward.5} parent=0 // pred_check
    _
  $region7: #{colored_mnist_forward.5} parent=0 // pred_check_branch
    %13 = sbr.rel (0) target = $region9
  $region8: #{colored_mnist_forward.5} parent=0 // pred_region
    _
  $region9: #{colored_mnist_forward.5} parent=0 // pred_fallthru
    _
  // Predicated region
  $region10: #{colored_mnist_forward.5} parent=0 // pred_check
    _
  $region11: #{colored_mnist_forward.5} parent=0 // pred_check_branch
    %15 = sbr.rel (0) target = $region13
  $region12: #{colored_mnist_forward.5} parent=0 // pred_region
    _
  $region13: #{colored_mnist_forward.5} parent=0 // pred_fallthru
    _
  // Predicated region
  $region14: #{colored_mnist_forward.5} parent=0 // pred_check
    _
  $region15: #{colored_mnist_forward.5} parent=0 // pred_check_branch
    %17 = sbr.rel (0) target = $region17
  $region16: #{colored_mnist_forward.5} parent=0 // pred_region
    _
  $region17: #{colored_mnist_forward.5} parent=0 // pred_fallthru
    _
  // Predicated region
  $region18: #{colored_mnist_forward.5} parent=0 // pred_check
    _
  $region19: #{colored_mnist_forward.5} parent=0 // pred_check_branch
    %19 = sbr.rel (0) target = $region21
  $region20: #{colored_mnist_forward.5} parent=0 // pred_region
    _
  $region21: #{colored_mnist_forward.5} parent=0 // pred_fallthru
    _
  %v20 = vld [vmem:[%s0] sm:$0xff]
  %v21 = vld [vmem:[%s0 + $0x8] sm:$0xff]
  %v22 = vld [vmem:[%s0 + $0x10] sm:$0xff]
  %v23 = vld [vmem:[%s0 + $0x18] sm:$0xff]
  %v24 = vld [vmem:[%s0 + $0x20] sm:$0xff]
  %v25 = vld [vmem:[%s0 + $0x28] sm:$0xff]
  %v26 = vld [vmem:[%s0 + $0x30] sm:$0xff]
  %v27 = vld [vmem:[%s0 + $0x38] sm:$0xff]
  %v28 = vld [vmem:[%s0 + $0x40] sm:$0xff]
  %v29 = vld [vmem:[%s0 + $0x48] sm:$0xff]
  %v30 = vld [vmem:[%s0 + $0x50] sm:$0xff]
  %v31 = vld [vmem:[%s0 + $0x58] sm:$0xff]
  %v32 = vld [vmem:[%s0 + $0x60] sm:$0xff]
  %v33 = vld [vmem:[%s0 + $0x68] sm:$0xff]
  %v34 = vld [vmem:[%s0 + $0x70] sm:$0xff]
  %v35 = vld [vmem:[%s0 + $0x78] sm:$0xff]
  %v36 = vld [vmem:[%s0 + $0x80] sm:$0xff]
  %v37 = vld [vmem:[%s0 + $0x88] sm:$0xff]
  %v38 = vld [vmem:[%s0 + $0x90] sm:$0xff]
  %v39 = vld [vmem:[%s0 + $0x98] sm:$0xff]
  %v40 = vld [vmem:[%s0 + $0xa0] sm:$0xff]
  %v41 = vld [vmem:[%s0 + $0xa8] sm:$0xff]
  %v42 = vld [vmem:[%s0 + $0xb0] sm:$0xff]
  %v43 = vld [vmem:[%s0 + $0xb8] sm:$0xff]
  %v44 = vld [vmem:[%s0 + $0xc0] sm:$0xff]
  %v45 = vld [vmem:[%s1] sm:$0xff]
  %v46 = vld [vmem:[%s1 + $0x8] sm:$0xff]
  %v47 = vld [vmem:[%s1 + $0x10] sm:$0xff]
  %v48 = vld [vmem:[%s1 + $0x18] sm:$0xff]
  %v49 = vld [vmem:[%s1 + $0x20] sm:$0xff]
  %v50 = vld [vmem:[%s1 + $0x28] sm:$0xff]
  %v51 = vld [vmem:[%s1 + $0x30] sm:$0xff]
  %v52 = vld [vmem:[%s1 + $0x38] sm:$0xff]
  %v53 = vld [vmem:[%s1 + $0x40] sm:$0xff]
  %v54 = vld [vmem:[%s1 + $0x48] sm:$0xff]
  %v55 = vld [vmem:[%s1 + $0x50] sm:$0xff]
  %v56 = vld [vmem:[%s1 + $0x58] sm:$0xff]
  %v57 = vld [vmem:[%s1 + $0x60] sm:$0xff]
  %v58 = vld [vmem:[%s1 + $0x68] sm:$0xff]
  %v59 = vld [vmem:[%s1 + $0x70] sm:$0xff]
  %v60 = vld [vmem:[%s1 + $0x78] sm:$0xff]
  %v61 = vld [vmem:[%s1 + $0x80] sm:$0xff]
  %v62 = vld [vmem:[%s1 + $0x88] sm:$0xff]
  %v63 = vld [vmem:[%s1 + $0x90] sm:$0xff]
  %v64 = vld [vmem:[%s1 + $0x98] sm:$0xff]
  %v65 = vld [vmem:[%s1 + $0xa0] sm:$0xff]
  %v66 = vld [vmem:[%s1 + $0xa8] sm:$0xff]
  %v67 = vld [vmem:[%s1 + $0xb0] sm:$0xff]
  %v68 = vld [vmem:[%s1 + $0xb8] sm:$0xff]
  %v69 = vld [vmem:[%s1 + $0xc0] sm:$0xff]
  %v70 = vld [vmem:[%s1 + $0xc8] sm:$0xff]
  %v71 = vld [vmem:[%s1 + $0xd0] sm:$0xff]
  %v72 = vld [vmem:[%s1 + $0xd8] sm:$0xff]
  %v73 = vld [vmem:[%s1 + $0xe0] sm:$0xff]
  %v74 = vld [vmem:[%s1 + $0xe8] sm:$0xff]
  %v75 = vld [vmem:[%s1 + $0xf0] sm:$0xff]
  %v76 = vld [vmem:[%s1 + $0xf8] sm:$0xff]
  %v77 = vld [vmem:[%s1 + $0x100] sm:$0xff]
  %v78 = vld [vmem:[%s1 + $0x108] sm:$0xff]
  %v79 = vld [vmem:[%s1 + $0x110] sm:$0xff]
  %v80 = vld [vmem:[%s1 + $0x118] sm:$0xff]
  %v81 = vld [vmem:[%s1 + $0x120] sm:$0xff]
  %v82 = vld [vmem:[%s1 + $0x128] sm:$0xff]
  %v83 = vld [vmem:[%s1 + $0x130] sm:$0xff]
  %v84 = vld [vmem:[%s1 + $0x138] sm:$0xff]
  %v85 = vld [vmem:[%s1 + $0x140] sm:$0xff]
  %v86 = vld [vmem:[%s1 + $0x148] sm:$0xff]
  %v87 = vld [vmem:[%s1 + $0x150] sm:$0xff]
  %v88 = vld [vmem:[%s1 + $0x158] sm:$0xff]
  %v89 = vld [vmem:[%s1 + $0x160] sm:$0xff]
  %v90 = vld [vmem:[%s1 + $0x168] sm:$0xff]
  %v91 = vld [vmem:[%s1 + $0x170] sm:$0xff]
  %v92 = vld [vmem:[%s1 + $0x178] sm:$0xff]
  %v93 = vld [vmem:[%s1 + $0x180] sm:$0xff]
  %v94 = vld [vmem:[%s1 + $0x188] sm:$0xff]
  %v95 = vld [vmem:[%s1 + $0x190] sm:$0xff]
  %v96 = vld [vmem:[%s1 + $0x198] sm:$0xff]
  %v97 = vld [vmem:[%s1 + $0x1a0] sm:$0xff]
  %v98 = vld [vmem:[%s1 + $0x1a8] sm:$0xff]
  %v99 = vld [vmem:[%s1 + $0x1b0] sm:$0xff]
  %v100 = vld [vmem:[%s1 + $0x1b8] sm:$0xff]
  %v101 = vld [vmem:[%s1 + $0x1c0] sm:$0xff]
  %v102 = vld [vmem:[%s1 + $0x1c8] sm:$0xff]
  %v103 = vld [vmem:[%s1 + $0x1d0] sm:$0xff]
  %v104 = vld [vmem:[%s1 + $0x1d8] sm:$0xff]
  %v105 = vld [vmem:[%s1 + $0x1e0] sm:$0xff]
  %v106 = vld [vmem:[%s1 + $0x1e8] sm:$0xff]
  %v107 = vld [vmem:[%s1 + $0x1f0] sm:$0xff]
  %v108 = vld [vmem:[%s1 + $0x1f8] sm:$0xff]
  %v109 = vld [vmem:[%s1 + $0x200] sm:$0xff]
  %v110 = vld [vmem:[%s1 + $0x208] sm:$0xff]
  %v111 = vld [vmem:[%s1 + $0x210] sm:$0xff]
  %v112 = vld [vmem:[%s1 + $0x218] sm:$0xff]
  %v113 = vld [vmem:[%s1 + $0x220] sm:$0xff]
  %v114 = vld [vmem:[%s1 + $0x228] sm:$0xff]
  %v115 = vld [vmem:[%s1 + $0x230] sm:$0xff]
  %v116 = vld [vmem:[%s1 + $0x238] sm:$0xff]
  %v117 = vld [vmem:[%s1 + $0x240] sm:$0xff]
  %v118 = vld [vmem:[%s1 + $0x248] sm:$0xff]
  %v119 = vld [vmem:[%s1 + $0x250] sm:$0xff]
  %v120 = vld [vmem:[%s1 + $0x258] sm:$0xff]
  %v121 = vld [vmem:[%s1 + $0x260] sm:$0xff]
  %v122 = vld [vmem:[%s1 + $0x268] sm:$0xff]
  %v123 = vld [vmem:[%s1 + $0x270] sm:$0xff]
  %v124 = vld [vmem:[%s1 + $0x278] sm:$0xff]
  %v125 = vld [vmem:[%s1 + $0x280] sm:$0xff]
  %v126 = vld [vmem:[%s1 + $0x288] sm:$0xff]
  %v127 = vld [vmem:[%s1 + $0x290] sm:$0xff]
  %v128 = vld [vmem:[%s1 + $0x298] sm:$0xff]
  %v129 = vld [vmem:[%s1 + $0x2a0] sm:$0xff]
  %v130 = vld [vmem:[%s1 + $0x2a8] sm:$0xff]
  %v131 = vld [vmem:[%s1 + $0x2b0] sm:$0xff]
  %v132 = vld [vmem:[%s1 + $0x2b8] sm:$0xff]
  %v133 = vld [vmem:[%s1 + $0x2c0] sm:$0xff]
  %v134 = vld [vmem:[%s1 + $0x2c8] sm:$0xff]
  %v135 = vld [vmem:[%s1 + $0x2d0] sm:$0xff]
  %v136 = vld [vmem:[%s1 + $0x2d8] sm:$0xff]
  %v137 = vld [vmem:[%s1 + $0x2e0] sm:$0xff]
  %v138 = vld [vmem:[%s1 + $0x2e8] sm:$0xff]
  %v139 = vld [vmem:[%s1 + $0x2f0] sm:$0xff]
  %v140 = vld [vmem:[%s1 + $0x2f8] sm:$0xff]
  %v141 = vld [vmem:[%s1 + $0x300] sm:$0xff]
  %v142 = vld [vmem:[%s1 + $0x308] sm:$0xff]
  %v143 = vld [vmem:[%s1 + $0x310] sm:$0xff]
  %v144 = vld [vmem:[%s1 + $0x318] sm:$0xff]
  %v145 = vld [vmem:[%s1 + $0x320] sm:$0xff]
  %v146 = vld [vmem:[%s1 + $0x328] sm:$0xff]
  %v147 = vld [vmem:[%s1 + $0x330] sm:$0xff]
  %v148 = vld [vmem:[%s1 + $0x338] sm:$0xff]
  %v149 = vld [vmem:[%s1 + $0x340] sm:$0xff]
  %v150 = vld [vmem:[%s1 + $0x348] sm:$0xff]
  %v151 = vld [vmem:[%s1 + $0x350] sm:$0xff]
  %v152 = vld [vmem:[%s1 + $0x358] sm:$0xff]
  %v153 = vld [vmem:[%s1 + $0x360] sm:$0xff]
  %v154 = vld [vmem:[%s1 + $0x368] sm:$0xff]
  %v155 = vld [vmem:[%s1 + $0x370] sm:$0xff]
  %v156 = vld [vmem:[%s1 + $0x378] sm:$0xff]
  %v157 = vld [vmem:[%s1 + $0x380] sm:$0xff]
  %v158 = vld [vmem:[%s1 + $0x388] sm:$0xff]
  %v159 = vld [vmem:[%s1 + $0x390] sm:$0xff]
  %v160 = vld [vmem:[%s1 + $0x398] sm:$0xff]
  %v161 = vld [vmem:[%s1 + $0x3a0] sm:$0xff]
  %v162 = vld [vmem:[%s1 + $0x3a8] sm:$0xff]
  %v163 = vld [vmem:[%s1 + $0x3b0] sm:$0xff]
  %v164 = vld [vmem:[%s1 + $0x3b8] sm:$0xff]
  %v165 = vld [vmem:[%s1 + $0x3c0] sm:$0xff]
  %v166 = vld [vmem:[%s1 + $0x3c8] sm:$0xff]
  %v167 = vld [vmem:[%s1 + $0x3d0] sm:$0xff]
  %v168 = vld [vmem:[%s1 + $0x3d8] sm:$0xff]
  %v169 = vld [vmem:[%s1 + $0x3e0] sm:$0xff]
  %v170 = vld [vmem:[%s1 + $0x3e8] sm:$0xff]
  %v171 = vld [vmem:[%s1 + $0x3f0] sm:$0xff]
  %v172 = vld [vmem:[%s1 + $0x3f8] sm:$0xff]
  %v173 = vld [vmem:[%s1 + $0x400] sm:$0xff]
  %v174 = vld [vmem:[%s1 + $0x408] sm:$0xff]
  %v175 = vld [vmem:[%s1 + $0x410] sm:$0xff]
  %v176 = vld [vmem:[%s1 + $0x418] sm:$0xff]
  %v177 = vld [vmem:[%s1 + $0x420] sm:$0xff]
  %v178 = vld [vmem:[%s1 + $0x428] sm:$0xff]
  %v179 = vld [vmem:[%s1 + $0x430] sm:$0xff]
  %v180 = vld [vmem:[%s1 + $0x438] sm:$0xff]
  %v181 = vld [vmem:[%s1 + $0x440] sm:$0xff]
  %v182 = vld [vmem:[%s1 + $0x448] sm:$0xff]
  %v183 = vld [vmem:[%s1 + $0x450] sm:$0xff]
  %v184 = vld [vmem:[%s1 + $0x458] sm:$0xff]
  %v185 = vld [vmem:[%s1 + $0x460] sm:$0xff]
  %v186 = vld [vmem:[%s1 + $0x468] sm:$0xff]
  %v187 = vld [vmem:[%s1 + $0x470] sm:$0xff]
  %v188 = vld [vmem:[%s1 + $0x478] sm:$0xff]
  %v189 = vld [vmem:[%s1 + $0x480] sm:$0xff]
  %v190 = vld [vmem:[%s1 + $0x488] sm:$0xff]
  %v191 = vld [vmem:[%s1 + $0x490] sm:$0xff]
  %v192 = vld [vmem:[%s1 + $0x498] sm:$0xff]
  %v193 = vld [vmem:[%s1 + $0x4a0] sm:$0xff]
  %v194 = vld [vmem:[%s1 + $0x4a8] sm:$0xff]
  %v195 = vld [vmem:[%s1 + $0x4b0] sm:$0xff]
  %v196 = vld [vmem:[%s1 + $0x4b8] sm:$0xff]
  %v197 = vld [vmem:[%s1 + $0x4c0] sm:$0xff]
  %v198 = vld [vmem:[%s1 + $0x4c8] sm:$0xff]
  %v199 = vld [vmem:[%s1 + $0x4d0] sm:$0xff]
  %v200 = vld [vmem:[%s1 + $0x4d8] sm:$0xff]
  %v201 = vld [vmem:[%s1 + $0x4e0] sm:$0xff]
  %v202 = vld [vmem:[%s1 + $0x4e8] sm:$0xff]
  %v203 = vld [vmem:[%s1 + $0x4f0] sm:$0xff]
  %v204 = vld [vmem:[%s1 + $0x4f8] sm:$0xff]
  %v205 = vld [vmem:[%s1 + $0x500] sm:$0xff]
  %v206 = vld [vmem:[%s1 + $0x508] sm:$0xff]
  %v207 = vld [vmem:[%s1 + $0x510] sm:$0xff]
  %v208 = vld [vmem:[%s1 + $0x518] sm:$0xff]
  %v209 = vld [vmem:[%s1 + $0x520] sm:$0xff]
  %v210 = vld [vmem:[%s1 + $0x528] sm:$0xff]
  %v211 = vld [vmem:[%s1 + $0x530] sm:$0xff]
  %v212 = vld [vmem:[%s1 + $0x538] sm:$0xff]
  %v213 = vld [vmem:[%s1 + $0x540] sm:$0xff]
  %v214 = vld [vmem:[%s1 + $0x548] sm:$0xff]
  %v215 = vld [vmem:[%s1 + $0x550] sm:$0xff]
  %v216 = vld [vmem:[%s1 + $0x558] sm:$0xff]
  %v217 = vld [vmem:[%s1 + $0x560] sm:$0xff]
  %v218 = vld [vmem:[%s1 + $0x568] sm:$0xff]
  %v219 = vld [vmem:[%s1 + $0x570] sm:$0xff]
  %v220 = vld [vmem:[%s1 + $0x578] sm:$0xff]
  %v221 = vld [vmem:[%s1 + $0x580] sm:$0xff]
  %v222 = vld [vmem:[%s1 + $0x588] sm:$0xff]
  %v223 = vld [vmem:[%s1 + $0x590] sm:$0xff]
  %v224 = vld [vmem:[%s1 + $0x598] sm:$0xff]
  %v225 = vld [vmem:[%s1 + $0x5a0] sm:$0xff]
  %v226 = vld [vmem:[%s1 + $0x5a8] sm:$0xff]
  %v227 = vld [vmem:[%s1 + $0x5b0] sm:$0xff]
  %v228 = vld [vmem:[%s1 + $0x5b8] sm:$0xff]
  %v229 = vld [vmem:[%s1 + $0x5c0] sm:$0xff]
  %v230 = vld [vmem:[%s1 + $0x5c8] sm:$0xff]
  %v231 = vld [vmem:[%s1 + $0x5d0] sm:$0xff]
  %v232 = vld [vmem:[%s1 + $0x5d8] sm:$0xff]
  %v233 = vld [vmem:[%s1 + $0x5e0] sm:$0xff]
  %v234 = vld [vmem:[%s1 + $0x5e8] sm:$0xff]
  %v235 = vld [vmem:[%s1 + $0x5f0] sm:$0xff]
  %v236 = vld [vmem:[%s1 + $0x5f8] sm:$0xff]
  %v237 = vld [vmem:[%s1 + $0x600] sm:$0xff]
  %v238 = vld [vmem:[%s1 + $0x608] sm:$0xff]
  %v239 = vld [vmem:[%s1 + $0x610] sm:$0xff]
  %v240 = vld [vmem:[%s1 + $0x618] sm:$0xff]
  %v241 = vld [vmem:[%s1 + $0x620] sm:$0xff]
  %v242 = vld [vmem:[%s1 + $0x628] sm:$0xff]
  %v243 = vld [vmem:[%s1 + $0x630] sm:$0xff]
  %v244 = vld [vmem:[%s1 + $0x638] sm:$0xff]
  %v245 = vld [vmem:[%s1 + $0x640] sm:$0xff]
  %v246 = vld [vmem:[%s1 + $0x648] sm:$0xff]
  %v247 = vld [vmem:[%s1 + $0x650] sm:$0xff]
  %v248 = vld [vmem:[%s1 + $0x658] sm:$0xff]
  %v249 = vld [vmem:[%s1 + $0x660] sm:$0xff]
  %v250 = vld [vmem:[%s1 + $0x668] sm:$0xff]
  %v251 = vld [vmem:[%s1 + $0x670] sm:$0xff]
  %v252 = vld [vmem:[%s1 + $0x678] sm:$0xff]
  %v253 = vld [vmem:[%s1 + $0x680] sm:$0xff]
  %v254 = vld [vmem:[%s1 + $0x688] sm:$0xff]
  %v255 = vld [vmem:[%s1 + $0x690] sm:$0xff]
  %v256 = vld [vmem:[%s1 + $0x698] sm:$0xff]
  %v257 = vld [vmem:[%s1 + $0x6a0] sm:$0xff]
  %v258 = vld [vmem:[%s1 + $0x6a8] sm:$0xff]
  %v259 = vld [vmem:[%s1 + $0x6b0] sm:$0xff]
  %v260 = vld [vmem:[%s1 + $0x6b8] sm:$0xff]
  %v261 = vld [vmem:[%s1 + $0x6c0] sm:$0xff]
  %v262 = vld [vmem:[%s1 + $0x6c8] sm:$0xff]
  %v263 = vld [vmem:[%s1 + $0x6d0] sm:$0xff]
  %v264 = vld [vmem:[%s1 + $0x6d8] sm:$0xff]
  %v265 = vld [vmem:[%s1 + $0x6e0] sm:$0xff]
  %v266 = vld [vmem:[%s1 + $0x6e8] sm:$0xff]
  %v267 = vld [vmem:[%s1 + $0x6f0] sm:$0xff]
  %v268 = vld [vmem:[%s1 + $0x6f8] sm:$0xff]
  %v269 = vld [vmem:[%s1 + $0x700] sm:$0xff]
  %v270 = vld [vmem:[%s1 + $0x708] sm:$0xff]
  %v271 = vld [vmem:[%s1 + $0x710] sm:$0xff]
  %v272 = vld [vmem:[%s1 + $0x718] sm:$0xff]
  %v273 = vld [vmem:[%s1 + $0x720] sm:$0xff]
  %v274 = vld [vmem:[%s1 + $0x728] sm:$0xff]
  %v275 = vld [vmem:[%s1 + $0x730] sm:$0xff]
  %v276 = vld [vmem:[%s1 + $0x738] sm:$0xff]
  %v277 = vld [vmem:[%s1 + $0x740] sm:$0xff]
  %v278 = vld [vmem:[%s1 + $0x748] sm:$0xff]
  %v279 = vld [vmem:[%s1 + $0x750] sm:$0xff]
  %v280 = vld [vmem:[%s1 + $0x758] sm:$0xff]
  %v281 = vld [vmem:[%s1 + $0x760] sm:$0xff]
  %v282 = vld [vmem:[%s1 + $0x768] sm:$0xff]
  %v283 = vld [vmem:[%s1 + $0x770] sm:$0xff]
  %v284 = vld [vmem:[%s1 + $0x778] sm:$0xff]
  %v285 = vld [vmem:[%s1 + $0x780] sm:$0xff]
  %v286 = vld [vmem:[%s1 + $0x788] sm:$0xff]
  %v287 = vld [vmem:[%s1 + $0x790] sm:$0xff]
  %v288 = vld [vmem:[%s1 + $0x798] sm:$0xff]
  %v289 = vld [vmem:[%s1 + $0x7a0] sm:$0xff]
  %v290 = vld [vmem:[%s1 + $0x7a8] sm:$0xff]
  %v291 = vld [vmem:[%s1 + $0x7b0] sm:$0xff]
  %v292 = vld [vmem:[%s1 + $0x7b8] sm:$0xff]
  %v293 = vld [vmem:[%s1 + $0x7c0] sm:$0xff]
  %v294 = vld [vmem:[%s1 + $0x7c8] sm:$0xff]
  %v295 = vld [vmem:[%s1 + $0x7d0] sm:$0xff]
  %v296 = vld [vmem:[%s1 + $0x7d8] sm:$0xff]
  %v297 = vld [vmem:[%s1 + $0x7e0] sm:$0xff]
  %v298 = vld [vmem:[%s1 + $0x7e8] sm:$0xff]
  %v299 = vld [vmem:[%s1 + $0x7f0] sm:$0xff]
  %v300 = vld [vmem:[%s1 + $0x7f8] sm:$0xff]
  %v301 = vld [vmem:[%s1 + $0x800] sm:$0xff]
  %v302 = vld [vmem:[%s1 + $0x808] sm:$0xff]
  %v303 = vld [vmem:[%s1 + $0x810] sm:$0xff]
  %v304 = vld [vmem:[%s1 + $0x818] sm:$0xff]
  %v305 = vld [vmem:[%s1 + $0x820] sm:$0xff]
  %v306 = vld [vmem:[%s1 + $0x828] sm:$0xff]
  %v307 = vld [vmem:[%s1 + $0x830] sm:$0xff]
  %v308 = vld [vmem:[%s1 + $0x838] sm:$0xff]
  %v309 = vld [vmem:[%s1 + $0x840] sm:$0xff]
  %v310 = vld [vmem:[%s1 + $0x848] sm:$0xff]
  %v311 = vld [vmem:[%s1 + $0x850] sm:$0xff]
  %v312 = vld [vmem:[%s1 + $0x858] sm:$0xff]
  %v313 = vld [vmem:[%s1 + $0x860] sm:$0xff]
  %v314 = vld [vmem:[%s1 + $0x868] sm:$0xff]
  %v315 = vld [vmem:[%s1 + $0x870] sm:$0xff]
  %v316 = vld [vmem:[%s1 + $0x878] sm:$0xff]
  %v317 = vld [vmem:[%s1 + $0x880] sm:$0xff]
  %v318 = vld [vmem:[%s1 + $0x888] sm:$0xff]
  %v319 = vld [vmem:[%s1 + $0x890] sm:$0xff]
  %v320 = vld [vmem:[%s1 + $0x898] sm:$0xff]
  %v321 = vld [vmem:[%s1 + $0x8a0] sm:$0xff]
  %v322 = vld [vmem:[%s1 + $0x8a8] sm:$0xff]
  %v323 = vld [vmem:[%s1 + $0x8b0] sm:$0xff]
  %v324 = vld [vmem:[%s1 + $0x8b8] sm:$0xff]
  %v325 = vld [vmem:[%s1 + $0x8c0] sm:$0xff]
  %v326 = vld [vmem:[%s1 + $0x8c8] sm:$0xff]
  %v327 = vld [vmem:[%s1 + $0x8d0] sm:$0xff]
  %v328 = vld [vmem:[%s1 + $0x8d8] sm:$0xff]
  %v329 = vld [vmem:[%s1 + $0x8e0] sm:$0xff]
  %v330 = vld [vmem:[%s1 + $0x8e8] sm:$0xff]
  %v331 = vld [vmem:[%s1 + $0x8f0] sm:$0xff]
  %v332 = vld [vmem:[%s1 + $0x8f8] sm:$0xff]
  %v333 = vld [vmem:[%s1 + $0x900] sm:$0xff]
  %v334 = vld [vmem:[%s1 + $0x908] sm:$0xff]
  %v335 = vld [vmem:[%s1 + $0x910] sm:$0xff]
  %v336 = vld [vmem:[%s1 + $0x918] sm:$0xff]
  %v337 = vld [vmem:[%s1 + $0x920] sm:$0xff]
  %v338 = vld [vmem:[%s1 + $0x928] sm:$0xff]
  %v339 = vld [vmem:[%s1 + $0x930] sm:$0xff]
  %v340 = vld [vmem:[%s1 + $0x938] sm:$0xff]
  %v341 = vld [vmem:[%s1 + $0x940] sm:$0xff]
  %v342 = vld [vmem:[%s1 + $0x948] sm:$0xff]
  %v343 = vld [vmem:[%s1 + $0x950] sm:$0xff]
  %v344 = vld [vmem:[%s1 + $0x958] sm:$0xff]
  %v345 = vld [vmem:[%s1 + $0x960] sm:$0xff]
  %v346 = vld [vmem:[%s1 + $0x968] sm:$0xff]
  %v347 = vld [vmem:[%s1 + $0x970] sm:$0xff]
  %v348 = vld [vmem:[%s1 + $0x978] sm:$0xff]
  %v349 = vld [vmem:[%s1 + $0x980] sm:$0xff]
  %v350 = vld [vmem:[%s1 + $0x988] sm:$0xff]
  %v351 = vld [vmem:[%s1 + $0x990] sm:$0xff]
  %v352 = vld [vmem:[%s1 + $0x998] sm:$0xff]
  %v353 = vld [vmem:[%s1 + $0x9a0] sm:$0xff]
  %v354 = vld [vmem:[%s1 + $0x9a8] sm:$0xff]
  %v355 = vld [vmem:[%s1 + $0x9b0] sm:$0xff]
  %v356 = vld [vmem:[%s1 + $0x9b8] sm:$0xff]
  %v357 = vld [vmem:[%s1 + $0x9c0] sm:$0xff]
  %v358 = vld [vmem:[%s1 + $0x9c8] sm:$0xff]
  %v359 = vld [vmem:[%s1 + $0x9d0] sm:$0xff]
  %v360 = vld [vmem:[%s1 + $0x9d8] sm:$0xff]
  %v361 = vld [vmem:[%s1 + $0x9e0] sm:$0xff]
  %v362 = vld [vmem:[%s1 + $0x9e8] sm:$0xff]
  %v363 = vld [vmem:[%s1 + $0x9f0] sm:$0xff]
  %v364 = vld [vmem:[%s1 + $0x9f8] sm:$0xff]
  %v365 = vld [vmem:[%s1 + $0xa00] sm:$0xff]
  %v366 = vld [vmem:[%s1 + $0xa08] sm:$0xff]
  %v367 = vld [vmem:[%s1 + $0xa10] sm:$0xff]
  %v368 = vld [vmem:[%s1 + $0xa18] sm:$0xff]
  %v369 = vld [vmem:[%s1 + $0xa20] sm:$0xff]
  %v370 = vld [vmem:[%s1 + $0xa28] sm:$0xff]
  %v371 = vld [vmem:[%s1 + $0xa30] sm:$0xff]
  %v372 = vld [vmem:[%s1 + $0xa38] sm:$0xff]
  %v373 = vld [vmem:[%s1 + $0xa40] sm:$0xff]
  %v374 = vld [vmem:[%s1 + $0xa48] sm:$0xff]
  %v375 = vld [vmem:[%s1 + $0xa50] sm:$0xff]
  %v376 = vld [vmem:[%s1 + $0xa58] sm:$0xff]
  %v377 = vld [vmem:[%s1 + $0xa60] sm:$0xff]
  %v378 = vld [vmem:[%s1 + $0xa68] sm:$0xff]
  %v379 = vld [vmem:[%s1 + $0xa70] sm:$0xff]
  %v380 = vld [vmem:[%s1 + $0xa78] sm:$0xff]
  %v381 = vld [vmem:[%s1 + $0xa80] sm:$0xff]
  %v382 = vld [vmem:[%s1 + $0xa88] sm:$0xff]
  %v383 = vld [vmem:[%s1 + $0xa90] sm:$0xff]
  %v384 = vld [vmem:[%s1 + $0xa98] sm:$0xff]
  %v385 = vld [vmem:[%s1 + $0xaa0] sm:$0xff]
  %v386 = vld [vmem:[%s1 + $0xaa8] sm:$0xff]
  %v387 = vld [vmem:[%s1 + $0xab0] sm:$0xff]
  %v388 = vld [vmem:[%s1 + $0xab8] sm:$0xff]
  %v389 = vld [vmem:[%s1 + $0xac0] sm:$0xff]
  %v390 = vld [vmem:[%s1 + $0xac8] sm:$0xff]
  %v391 = vld [vmem:[%s1 + $0xad0] sm:$0xff]
  %v392 = vld [vmem:[%s1 + $0xad8] sm:$0xff]
  %v393 = vld [vmem:[%s1 + $0xae0] sm:$0xff]
  %v394 = vld [vmem:[%s1 + $0xae8] sm:$0xff]
  %v395 = vld [vmem:[%s1 + $0xaf0] sm:$0xff]
  %v396 = vld [vmem:[%s1 + $0xaf8] sm:$0xff]
  %v397 = vld [vmem:[%s1 + $0xb00] sm:$0xff]
  %v398 = vld [vmem:[%s1 + $0xb08] sm:$0xff]
  %v399 = vld [vmem:[%s1 + $0xb10] sm:$0xff]
  %v400 = vld [vmem:[%s1 + $0xb18] sm:$0xff]
  %v401 = vld [vmem:[%s1 + $0xb20] sm:$0xff]
  %v402 = vld [vmem:[%s1 + $0xb28] sm:$0xff]
  %v403 = vld [vmem:[%s1 + $0xb30] sm:$0xff]
  %v404 = vld [vmem:[%s1 + $0xb38] sm:$0xff]
  %v405 = vld [vmem:[%s1 + $0xb40] sm:$0xff]
  %v406 = vld [vmem:[%s1 + $0xb48] sm:$0xff]
  %v407 = vld [vmem:[%s1 + $0xb50] sm:$0xff]
  %v408 = vld [vmem:[%s1 + $0xb58] sm:$0xff]
  %v409 = vld [vmem:[%s1 + $0xb60] sm:$0xff]
  %v410 = vld [vmem:[%s1 + $0xb68] sm:$0xff]
  %v411 = vld [vmem:[%s1 + $0xb70] sm:$0xff]
  %v412 = vld [vmem:[%s1 + $0xb78] sm:$0xff]
  %v413 = vld [vmem:[%s1 + $0xb80] sm:$0xff]
  %v414 = vld [vmem:[%s1 + $0xb88] sm:$0xff]
  %v415 = vld [vmem:[%s1 + $0xb90] sm:$0xff]
  %v416 = vld [vmem:[%s1 + $0xb98] sm:$0xff]
  %v417 = vld [vmem:[%s1 + $0xba0] sm:$0xff]
  %v418 = vld [vmem:[%s1 + $0xba8] sm:$0xff]
  %v419 = vld [vmem:[%s1 + $0xbb0] sm:$0xff]
  %v420 = vld [vmem:[%s1 + $0xbb8] sm:$0xff]
  %v421 = vld [vmem:[%s1 + $0xbc0] sm:$0xff]
  %v422 = vld [vmem:[%s1 + $0xbc8] sm:$0xff]
  %v423 = vld [vmem:[%s1 + $0xbd0] sm:$0xff]
  %v424 = vld [vmem:[%s1 + $0xbd8] sm:$0xff]
  %v425 = vld [vmem:[%s1 + $0xbe0] sm:$0xff]
  %v426 = vld [vmem:[%s1 + $0xbe8] sm:$0xff]
  %v427 = vld [vmem:[%s1 + $0xbf0] sm:$0xff]
  %v428 = vld [vmem:[%s1 + $0xbf8] sm:$0xff]
  %v429 = vld [vmem:[%s1 + $0xc00] sm:$0xff]
  %v430 = vld [vmem:[%s1 + $0xc08] sm:$0xff]
  %v431 = vld [vmem:[%s1 + $0xc10] sm:$0xff]
  %v432 = vld [vmem:[%s1 + $0xc18] sm:$0xff]
  %v433 = vld [vmem:[%s1 + $0xc20] sm:$0xff]
  %v434 = vld [vmem:[%s1 + $0xc28] sm:$0xff]
  %v435 = vld [vmem:[%s1 + $0xc30] sm:$0xff]
  %v436 = vld [vmem:[%s1 + $0xc38] sm:$0xff]
  %v437 = vld [vmem:[%s2] sm:$0x1]
  %v439 = vlaneseq
  %v440 = vshrl.u32 %v439, 7
  %v441 = vsub.s32 0, %v440
  %v442 = vrot.slane %v437, %v441
  %vm444 = vcmask 523264
  %v446 = vsel %vm444, %v44, 0
  %448 = vmatprep.subr.mxu0 0.0
  %449 = vmatpush1.msra.mxu0 %v45
  %450 = vmatprep.subr.mxu0 0.0
  %451 = vmatpush1.msra.mxu0 %v46
  %452 = vmatprep.subr.mxu0 0.0
  %453 = vmatpush1.msra.mxu0 %v47
  %454 = vmatprep.subr.mxu0 0.0
  %455 = vmatpush1.msra.mxu0 %v48
  %456 = vmatprep.subr.mxu0 0.0
  %457 = vmatpush1.msra.mxu0 %v49
  %458 = vmatprep.subr.mxu0 0.0
  %459 = vmatpush1.msra.mxu0 %v50
  %460 = vmatprep.subr.mxu0 0.0
  %461 = vmatpush1.msra.mxu0 %v51
  %462 = vmatprep.subr.mxu0 0.0
  %463 = vmatpush1.msra.mxu0 %v52
  %464 = vmatprep.subr.mxu0 0.0
  %465 = vmatpush1.msra.mxu0 %v53
  %466 = vmatprep.subr.mxu0 0.0
  %467 = vmatpush1.msra.mxu0 %v54
  %468 = vmatprep.subr.mxu0 0.0
  %469 = vmatpush1.msra.mxu0 %v55
  %470 = vmatprep.subr.mxu0 0.0
  %471 = vmatpush1.msra.mxu0 %v56
  %472 = vmatprep.subr.mxu0 0.0
  %473 = vmatpush1.msra.mxu0 %v57
  %474 = vmatprep.subr.mxu0 0.0
  %475 = vmatpush1.msra.mxu0 %v58
  %476 = vmatprep.subr.mxu0 0.0
  %477 = vmatpush1.msra.mxu0 %v59
  %478 = vmatprep.subr.mxu0 0.0
  %479 = vmatpush1.msra.mxu0 %v60
  %480 = vmatprep.subr.mxu0 0.0
  %481 = vmatpush1.msra.mxu0 %v61
  %482 = vmatprep.subr.mxu0 0.0
  %483 = vmatpush1.msra.mxu0 %v62
  %484 = vmatprep.subr.mxu0 0.0
  %485 = vmatpush1.msra.mxu0 %v63
  %486 = vmatprep.subr.mxu0 0.0
  %487 = vmatpush1.msra.mxu0 %v64
  %488 = vmatprep.subr.mxu0 0.0
  %489 = vmatpush1.msra.mxu0 %v65
  %490 = vmatprep.subr.mxu0 0.0
  %491 = vmatpush1.msra.mxu0 %v66
  %492 = vmatprep.subr.mxu0 0.0
  %493 = vmatpush1.msra.mxu0 %v67
  %494 = vmatprep.subr.mxu0 0.0
  %495 = vmatpush1.msra.mxu0 %v68
  %496 = vmatprep.subr.mxu0 0.0
  %497 = vmatpush1.msra.mxu0 %v69
  %498 = vmatprep.subr.mxu0 0.0
  %499 = vmatpush1.msra.mxu0 %v70
  %500 = vmatprep.subr.mxu0 0.0
  %501 = vmatpush1.msra.mxu0 %v71
  %502 = vmatprep.subr.mxu0 0.0
  %503 = vmatpush1.msra.mxu0 %v72
  %504 = vmatprep.subr.mxu0 0.0
  %505 = vmatpush1.msra.mxu0 %v73
  %506 = vmatprep.subr.mxu0 0.0
  %507 = vmatpush1.msra.mxu0 %v74
  %508 = vmatprep.subr.mxu0 0.0
  %509 = vmatpush1.msra.mxu0 %v75
  %510 = vmatprep.subr.mxu0 0.0
  %511 = vmatpush1.msra.mxu0 %v76
  %512 = vmatprep.mubr.f32.mxu0 %v21
  %513 = vmatmul.mubr.f32.gmra.mrb[0].mxu0 %v20
  %v514 = vpop.f32.mrb[0].mxu0
  %v515 = vadd.f32 %v442, %v514
  %v516 = vpop.f32.mrb[0].mxu0
  %517 = vdwg.mxu0
  %518 = vmatprep.subr.mxu0 0.0
  %519 = vmatpush1.msra.mxu0 %v77
  %520 = vmatprep.subr.mxu0 0.0
  %521 = vmatpush1.msra.mxu0 %v78
  %522 = vmatprep.subr.mxu0 0.0
  %523 = vmatpush1.msra.mxu0 %v79
  %524 = vmatprep.subr.mxu0 0.0
  %525 = vmatpush1.msra.mxu0 %v80
  %526 = vmatprep.subr.mxu0 0.0
  %527 = vmatpush1.msra.mxu0 %v81
  %528 = vmatprep.subr.mxu0 0.0
  %529 = vmatpush1.msra.mxu0 %v82
  %530 = vmatprep.subr.mxu0 0.0
  %531 = vmatpush1.msra.mxu0 %v83
  %532 = vmatprep.subr.mxu0 0.0
  %533 = vmatpush1.msra.mxu0 %v84
  %534 = vmatprep.subr.mxu0 0.0
  %535 = vmatpush1.msra.mxu0 %v85
  %536 = vmatprep.subr.mxu0 0.0
  %537 = vmatpush1.msra.mxu0 %v86
  %538 = vmatprep.subr.mxu0 0.0
  %539 = vmatpush1.msra.mxu0 %v87
  %540 = vmatprep.subr.mxu0 0.0
  %541 = vmatpush1.msra.mxu0 %v88
  %542 = vmatprep.subr.mxu0 0.0
  %543 = vmatpush1.msra.mxu0 %v89
  %544 = vmatprep.subr.mxu0 0.0
  %545 = vmatpush1.msra.mxu0 %v90
  %546 = vmatprep.subr.mxu0 0.0
  %547 = vmatpush1.msra.mxu0 %v91
  %548 = vmatprep.subr.mxu0 0.0
  %549 = vmatpush1.msra.mxu0 %v92
  %550 = vmatprep.subr.mxu0 0.0
  %551 = vmatpush1.msra.mxu0 %v93
  %552 = vmatprep.subr.mxu0 0.0
  %553 = vmatpush1.msra.mxu0 %v94
  %554 = vmatprep.subr.mxu0 0.0
  %555 = vmatpush1.msra.mxu0 %v95
  %556 = vmatprep.subr.mxu0 0.0
  %557 = vmatpush1.msra.mxu0 %v96
  %558 = vmatprep.subr.mxu0 0.0
  %559 = vmatpush1.msra.mxu0 %v97
  %560 = vmatprep.subr.mxu0 0.0
  %561 = vmatpush1.msra.mxu0 %v98
  %562 = vmatprep.subr.mxu0 0.0
  %563 = vmatpush1.msra.mxu0 %v99
  %564 = vmatprep.subr.mxu0 0.0
  %565 = vmatpush1.msra.mxu0 %v100
  %566 = vmatprep.subr.mxu0 0.0
  %567 = vmatpush1.msra.mxu0 %v101
  %568 = vmatprep.subr.mxu0 0.0
  %569 = vmatpush1.msra.mxu0 %v102
  %570 = vmatprep.subr.mxu0 0.0
  %571 = vmatpush1.msra.mxu0 %v103
  %572 = vmatprep.subr.mxu0 0.0
  %573 = vmatpush1.msra.mxu0 %v104
  %574 = vmatprep.subr.mxu0 0.0
  %575 = vmatpush1.msra.mxu0 %v105
  %576 = vmatprep.subr.mxu0 0.0
  %577 = vmatpush1.msra.mxu0 %v106
  %578 = vmatprep.subr.mxu0 0.0
  %579 = vmatpush1.msra.mxu0 %v107
  %580 = vmatprep.subr.mxu0 0.0
  %581 = vmatpush1.msra.mxu0 %v108
  %582 = vmatprep.mubr.f32.mxu0 %v23
  %583 = vmatmul.mubr.f32.gmra.mrb[0].mxu0 %v22
  %v584 = vpop.f32.mrb[0].mxu0
  %v585 = vadd.f32 %v515, %v584
  %v586 = vpop.f32.mrb[0].mxu0
  %587 = vdwg.mxu0
  %588 = vmatprep.subr.mxu0 0.0
  %589 = vmatpush1.msra.mxu0 %v109
  %590 = vmatprep.subr.mxu0 0.0
  %591 = vmatpush1.msra.mxu0 %v110
  %592 = vmatprep.subr.mxu0 0.0
  %593 = vmatpush1.msra.mxu0 %v111
  %594 = vmatprep.subr.mxu0 0.0
  %595 = vmatpush1.msra.mxu0 %v112
  %596 = vmatprep.subr.mxu0 0.0
  %597 = vmatpush1.msra.mxu0 %v113
  %598 = vmatprep.subr.mxu0 0.0
  %599 = vmatpush1.msra.mxu0 %v114
  %600 = vmatprep.subr.mxu0 0.0
  %601 = vmatpush1.msra.mxu0 %v115
  %602 = vmatprep.subr.mxu0 0.0
  %603 = vmatpush1.msra.mxu0 %v116
  %604 = vmatprep.subr.mxu0 0.0
  %605 = vmatpush1.msra.mxu0 %v117
  %606 = vmatprep.subr.mxu0 0.0
  %607 = vmatpush1.msra.mxu0 %v118
  %608 = vmatprep.subr.mxu0 0.0
  %609 = vmatpush1.msra.mxu0 %v119
  %610 = vmatprep.subr.mxu0 0.0
  %611 = vmatpush1.msra.mxu0 %v120
  %612 = vmatprep.subr.mxu0 0.0
  %613 = vmatpush1.msra.mxu0 %v121
  %614 = vmatprep.subr.mxu0 0.0
  %615 = vmatpush1.msra.mxu0 %v122
  %616 = vmatprep.subr.mxu0 0.0
  %617 = vmatpush1.msra.mxu0 %v123
  %618 = vmatprep.subr.mxu0 0.0
  %619 = vmatpush1.msra.mxu0 %v124
  %620 = vmatprep.subr.mxu0 0.0
  %621 = vmatpush1.msra.mxu0 %v125
  %622 = vmatprep.subr.mxu0 0.0
  %623 = vmatpush1.msra.mxu0 %v126
  %624 = vmatprep.subr.mxu0 0.0
  %625 = vmatpush1.msra.mxu0 %v127
  %626 = vmatprep.subr.mxu0 0.0
  %627 = vmatpush1.msra.mxu0 %v128
  %628 = vmatprep.subr.mxu0 0.0
  %629 = vmatpush1.msra.mxu0 %v129
  %630 = vmatprep.subr.mxu0 0.0
  %631 = vmatpush1.msra.mxu0 %v130
  %632 = vmatprep.subr.mxu0 0.0
  %633 = vmatpush1.msra.mxu0 %v131
  %634 = vmatprep.subr.mxu0 0.0
  %635 = vmatpush1.msra.mxu0 %v132
  %636 = vmatprep.subr.mxu0 0.0
  %637 = vmatpush1.msra.mxu0 %v133
  %638 = vmatprep.subr.mxu0 0.0
  %639 = vmatpush1.msra.mxu0 %v134
  %640 = vmatprep.subr.mxu0 0.0
  %641 = vmatpush1.msra.mxu0 %v135
  %642 = vmatprep.subr.mxu0 0.0
  %643 = vmatpush1.msra.mxu0 %v136
  %644 = vmatprep.subr.mxu0 0.0
  %645 = vmatpush1.msra.mxu0 %v137
  %646 = vmatprep.subr.mxu0 0.0
  %647 = vmatpush1.msra.mxu0 %v138
  %648 = vmatprep.subr.mxu0 0.0
  %649 = vmatpush1.msra.mxu0 %v139
  %650 = vmatprep.subr.mxu0 0.0
  %651 = vmatpush1.msra.mxu0 %v140
  %652 = vmatprep.mubr.f32.mxu0 %v25
  %653 = vmatmul.mubr.f32.gmra.mrb[0].mxu0 %v24
  %v654 = vpop.f32.mrb[0].mxu0
  %v655 = vadd.f32 %v585, %v654
  %v656 = vpop.f32.mrb[0].mxu0
  %657 = vdwg.mxu0
  %658 = vmatprep.subr.mxu0 0.0
  %659 = vmatpush1.msra.mxu0 %v141
  %660 = vmatprep.subr.mxu0 0.0
  %661 = vmatpush1.msra.mxu0 %v142
  %662 = vmatprep.subr.mxu0 0.0
  %663 = vmatpush1.msra.mxu0 %v143
  %664 = vmatprep.subr.mxu0 0.0
  %665 = vmatpush1.msra.mxu0 %v144
  %666 = vmatprep.subr.mxu0 0.0
  %667 = vmatpush1.msra.mxu0 %v145
  %668 = vmatprep.subr.mxu0 0.0
  %669 = vmatpush1.msra.mxu0 %v146
  %670 = vmatprep.subr.mxu0 0.0
  %671 = vmatpush1.msra.mxu0 %v147
  %672 = vmatprep.subr.mxu0 0.0
  %673 = vmatpush1.msra.mxu0 %v148
  %674 = vmatprep.subr.mxu0 0.0
  %675 = vmatpush1.msra.mxu0 %v149
  %676 = vmatprep.subr.mxu0 0.0
  %677 = vmatpush1.msra.mxu0 %v150
  %678 = vmatprep.subr.mxu0 0.0
  %679 = vmatpush1.msra.mxu0 %v151
  %680 = vmatprep.subr.mxu0 0.0
  %681 = vmatpush1.msra.mxu0 %v152
  %682 = vmatprep.subr.mxu0 0.0
  %683 = vmatpush1.msra.mxu0 %v153
  %684 = vmatprep.subr.mxu0 0.0
  %685 = vmatpush1.msra.mxu0 %v154
  %686 = vmatprep.subr.mxu0 0.0
  %687 = vmatpush1.msra.mxu0 %v155
  %688 = vmatprep.subr.mxu0 0.0
  %689 = vmatpush1.msra.mxu0 %v156
  %690 = vmatprep.subr.mxu0 0.0
  %691 = vmatpush1.msra.mxu0 %v157
  %692 = vmatprep.subr.mxu0 0.0
  %693 = vmatpush1.msra.mxu0 %v158
  %694 = vmatprep.subr.mxu0 0.0
  %695 = vmatpush1.msra.mxu0 %v159
  %696 = vmatprep.subr.mxu0 0.0
  %697 = vmatpush1.msra.mxu0 %v160
  %698 = vmatprep.subr.mxu0 0.0
  %699 = vmatpush1.msra.mxu0 %v161
  %700 = vmatprep.subr.mxu0 0.0
  %701 = vmatpush1.msra.mxu0 %v162
  %702 = vmatprep.subr.mxu0 0.0
  %703 = vmatpush1.msra.mxu0 %v163
  %704 = vmatprep.subr.mxu0 0.0
  %705 = vmatpush1.msra.mxu0 %v164
  %706 = vmatprep.subr.mxu0 0.0
  %707 = vmatpush1.msra.mxu0 %v165
  %708 = vmatprep.subr.mxu0 0.0
  %709 = vmatpush1.msra.mxu0 %v166
  %710 = vmatprep.subr.mxu0 0.0
  %711 = vmatpush1.msra.mxu0 %v167
  %712 = vmatprep.subr.mxu0 0.0
  %713 = vmatpush1.msra.mxu0 %v168
  %714 = vmatprep.subr.mxu0 0.0
  %715 = vmatpush1.msra.mxu0 %v169
  %716 = vmatprep.subr.mxu0 0.0
  %717 = vmatpush1.msra.mxu0 %v170
  %718 = vmatprep.subr.mxu0 0.0
  %719 = vmatpush1.msra.mxu0 %v171
  %720 = vmatprep.subr.mxu0 0.0
  %721 = vmatpush1.msra.mxu0 %v172
  %722 = vmatprep.mubr.f32.mxu0 %v27
  %723 = vmatmul.mubr.f32.gmra.mrb[0].mxu0 %v26
  %v724 = vpop.f32.mrb[0].mxu0
  %v725 = vadd.f32 %v655, %v724
  %v726 = vpop.f32.mrb[0].mxu0
  %727 = vdwg.mxu0
  %728 = vmatprep.subr.mxu0 0.0
  %729 = vmatpush1.msra.mxu0 %v173
  %730 = vmatprep.subr.mxu0 0.0
  %731 = vmatpush1.msra.mxu0 %v174
  %732 = vmatprep.subr.mxu0 0.0
  %733 = vmatpush1.msra.mxu0 %v175
  %734 = vmatprep.subr.mxu0 0.0
  %735 = vmatpush1.msra.mxu0 %v176
  %736 = vmatprep.subr.mxu0 0.0
  %737 = vmatpush1.msra.mxu0 %v177
  %738 = vmatprep.subr.mxu0 0.0
  %739 = vmatpush1.msra.mxu0 %v178
  %740 = vmatprep.subr.mxu0 0.0
  %741 = vmatpush1.msra.mxu0 %v179
  %742 = vmatprep.subr.mxu0 0.0
  %743 = vmatpush1.msra.mxu0 %v180
  %744 = vmatprep.subr.mxu0 0.0
  %745 = vmatpush1.msra.mxu0 %v181
  %746 = vmatprep.subr.mxu0 0.0
  %747 = vmatpush1.msra.mxu0 %v182
  %748 = vmatprep.subr.mxu0 0.0
  %749 = vmatpush1.msra.mxu0 %v183
  %750 = vmatprep.subr.mxu0 0.0
  %751 = vmatpush1.msra.mxu0 %v184
  %752 = vmatprep.subr.mxu0 0.0
  %753 = vmatpush1.msra.mxu0 %v185
  %754 = vmatprep.subr.mxu0 0.0
  %755 = vmatpush1.msra.mxu0 %v186
  %756 = vmatprep.subr.mxu0 0.0
  %757 = vmatpush1.msra.mxu0 %v187
  %758 = vmatprep.subr.mxu0 0.0
  %759 = vmatpush1.msra.mxu0 %v188
  %760 = vmatprep.subr.mxu0 0.0
  %761 = vmatpush1.msra.mxu0 %v189
  %762 = vmatprep.subr.mxu0 0.0
  %763 = vmatpush1.msra.mxu0 %v190
  %764 = vmatprep.subr.mxu0 0.0
  %765 = vmatpush1.msra.mxu0 %v191
  %766 = vmatprep.subr.mxu0 0.0
  %767 = vmatpush1.msra.mxu0 %v192
  %768 = vmatprep.subr.mxu0 0.0
  %769 = vmatpush1.msra.mxu0 %v193
  %770 = vmatprep.subr.mxu0 0.0
  %771 = vmatpush1.msra.mxu0 %v194
  %772 = vmatprep.subr.mxu0 0.0
  %773 = vmatpush1.msra.mxu0 %v195
  %774 = vmatprep.subr.mxu0 0.0
  %775 = vmatpush1.msra.mxu0 %v196
  %776 = vmatprep.subr.mxu0 0.0
  %777 = vmatpush1.msra.mxu0 %v197
  %778 = vmatprep.subr.mxu0 0.0
  %779 = vmatpush1.msra.mxu0 %v198
  %780 = vmatprep.subr.mxu0 0.0
  %781 = vmatpush1.msra.mxu0 %v199
  %782 = vmatprep.subr.mxu0 0.0
  %783 = vmatpush1.msra.mxu0 %v200
  %784 = vmatprep.subr.mxu0 0.0
  %785 = vmatpush1.msra.mxu0 %v201
  %786 = vmatprep.subr.mxu0 0.0
  %787 = vmatpush1.msra.mxu0 %v202
  %788 = vmatprep.subr.mxu0 0.0
  %789 = vmatpush1.msra.mxu0 %v203
  %790 = vmatprep.subr.mxu0 0.0
  %791 = vmatpush1.msra.mxu0 %v204
  %792 = vmatprep.mubr.f32.mxu0 %v29
  %793 = vmatmul.mubr.f32.gmra.mrb[0].mxu0 %v28
  %v794 = vpop.f32.mrb[0].mxu0
  %v795 = vadd.f32 %v725, %v794
  %v796 = vpop.f32.mrb[0].mxu0
  %797 = vdwg.mxu0
  %798 = vmatprep.subr.mxu0 0.0
  %799 = vmatpush1.msra.mxu0 %v205
  %800 = vmatprep.subr.mxu0 0.0
  %801 = vmatpush1.msra.mxu0 %v206
  %802 = vmatprep.subr.mxu0 0.0
  %803 = vmatpush1.msra.mxu0 %v207
  %804 = vmatprep.subr.mxu0 0.0
  %805 = vmatpush1.msra.mxu0 %v208
  %806 = vmatprep.subr.mxu0 0.0
  %807 = vmatpush1.msra.mxu0 %v209
  %808 = vmatprep.subr.mxu0 0.0
  %809 = vmatpush1.msra.mxu0 %v210
  %810 = vmatprep.subr.mxu0 0.0
  %811 = vmatpush1.msra.mxu0 %v211
  %812 = vmatprep.subr.mxu0 0.0
  %813 = vmatpush1.msra.mxu0 %v212
  %814 = vmatprep.subr.mxu0 0.0
  %815 = vmatpush1.msra.mxu0 %v213
  %816 = vmatprep.subr.mxu0 0.0
  %817 = vmatpush1.msra.mxu0 %v214
  %818 = vmatprep.subr.mxu0 0.0
  %819 = vmatpush1.msra.mxu0 %v215
  %820 = vmatprep.subr.mxu0 0.0
  %821 = vmatpush1.msra.mxu0 %v216
  %822 = vmatprep.subr.mxu0 0.0
  %823 = vmatpush1.msra.mxu0 %v217
  %824 = vmatprep.subr.mxu0 0.0
  %825 = vmatpush1.msra.mxu0 %v218
  %826 = vmatprep.subr.mxu0 0.0
  %827 = vmatpush1.msra.mxu0 %v219
  %828 = vmatprep.subr.mxu0 0.0
  %829 = vmatpush1.msra.mxu0 %v220
  %830 = vmatprep.subr.mxu0 0.0
  %831 = vmatpush1.msra.mxu0 %v221
  %832 = vmatprep.subr.mxu0 0.0
  %833 = vmatpush1.msra.mxu0 %v222
  %834 = vmatprep.subr.mxu0 0.0
  %835 = vmatpush1.msra.mxu0 %v223
  %836 = vmatprep.subr.mxu0 0.0
  %837 = vmatpush1.msra.mxu0 %v224
  %838 = vmatprep.subr.mxu0 0.0
  %839 = vmatpush1.msra.mxu0 %v225
  %840 = vmatprep.subr.mxu0 0.0
  %841 = vmatpush1.msra.mxu0 %v226
  %842 = vmatprep.subr.mxu0 0.0
  %843 = vmatpush1.msra.mxu0 %v227
  %844 = vmatprep.subr.mxu0 0.0
  %845 = vmatpush1.msra.mxu0 %v228
  %846 = vmatprep.subr.mxu0 0.0
  %847 = vmatpush1.msra.mxu0 %v229
  %848 = vmatprep.subr.mxu0 0.0
  %849 = vmatpush1.msra.mxu0 %v230
  %850 = vmatprep.subr.mxu0 0.0
  %851 = vmatpush1.msra.mxu0 %v231
  %852 = vmatprep.subr.mxu0 0.0
  %853 = vmatpush1.msra.mxu0 %v232
  %854 = vmatprep.subr.mxu0 0.0
  %855 = vmatpush1.msra.mxu0 %v233
  %856 = vmatprep.subr.mxu0 0.0
  %857 = vmatpush1.msra.mxu0 %v234
  %858 = vmatprep.subr.mxu0 0.0
  %859 = vmatpush1.msra.mxu0 %v235
  %860 = vmatprep.subr.mxu0 0.0
  %861 = vmatpush1.msra.mxu0 %v236
  %862 = vmatprep.mubr.f32.mxu0 %v31
  %863 = vmatmul.mubr.f32.gmra.mrb[0].mxu0 %v30
  %v864 = vpop.f32.mrb[0].mxu0
  %v865 = vadd.f32 %v795, %v864
  %v866 = vpop.f32.mrb[0].mxu0
  %867 = vdwg.mxu0
  %868 = vmatprep.subr.mxu0 0.0
  %869 = vmatpush1.msra.mxu0 %v237
  %870 = vmatprep.subr.mxu0 0.0
  %871 = vmatpush1.msra.mxu0 %v238
  %872 = vmatprep.subr.mxu0 0.0
  %873 = vmatpush1.msra.mxu0 %v239
  %874 = vmatprep.subr.mxu0 0.0
  %875 = vmatpush1.msra.mxu0 %v240
  %876 = vmatprep.subr.mxu0 0.0
  %877 = vmatpush1.msra.mxu0 %v241
  %878 = vmatprep.subr.mxu0 0.0
  %879 = vmatpush1.msra.mxu0 %v242
  %880 = vmatprep.subr.mxu0 0.0
  %881 = vmatpush1.msra.mxu0 %v243
  %882 = vmatprep.subr.mxu0 0.0
  %883 = vmatpush1.msra.mxu0 %v244
  %884 = vmatprep.subr.mxu0 0.0
  %885 = vmatpush1.msra.mxu0 %v245
  %886 = vmatprep.subr.mxu0 0.0
  %887 = vmatpush1.msra.mxu0 %v246
  %888 = vmatprep.subr.mxu0 0.0
  %889 = vmatpush1.msra.mxu0 %v247
  %890 = vmatprep.subr.mxu0 0.0
  %891 = vmatpush1.msra.mxu0 %v248
  %892 = vmatprep.subr.mxu0 0.0
  %893 = vmatpush1.msra.mxu0 %v249
  %894 = vmatprep.subr.mxu0 0.0
  %895 = vmatpush1.msra.mxu0 %v250
  %896 = vmatprep.subr.mxu0 0.0
  %897 = vmatpush1.msra.mxu0 %v251
  %898 = vmatprep.subr.mxu0 0.0
  %899 = vmatpush1.msra.mxu0 %v252
  %900 = vmatprep.subr.mxu0 0.0
  %901 = vmatpush1.msra.mxu0 %v253
  %902 = vmatprep.subr.mxu0 0.0
  %903 = vmatpush1.msra.mxu0 %v254
  %904 = vmatprep.subr.mxu0 0.0
  %905 = vmatpush1.msra.mxu0 %v255
  %906 = vmatprep.subr.mxu0 0.0
  %907 = vmatpush1.msra.mxu0 %v256
  %908 = vmatprep.subr.mxu0 0.0
  %909 = vmatpush1.msra.mxu0 %v257
  %910 = vmatprep.subr.mxu0 0.0
  %911 = vmatpush1.msra.mxu0 %v258
  %912 = vmatprep.subr.mxu0 0.0
  %913 = vmatpush1.msra.mxu0 %v259
  %914 = vmatprep.subr.mxu0 0.0
  %915 = vmatpush1.msra.mxu0 %v260
  %916 = vmatprep.subr.mxu0 0.0
  %917 = vmatpush1.msra.mxu0 %v261
  %918 = vmatprep.subr.mxu0 0.0
  %919 = vmatpush1.msra.mxu0 %v262
  %920 = vmatprep.subr.mxu0 0.0
  %921 = vmatpush1.msra.mxu0 %v263
  %922 = vmatprep.subr.mxu0 0.0
  %923 = vmatpush1.msra.mxu0 %v264
  %924 = vmatprep.subr.mxu0 0.0
  %925 = vmatpush1.msra.mxu0 %v265
  %926 = vmatprep.subr.mxu0 0.0
  %927 = vmatpush1.msra.mxu0 %v266
  %928 = vmatprep.subr.mxu0 0.0
  %929 = vmatpush1.msra.mxu0 %v267
  %930 = vmatprep.subr.mxu0 0.0
  %931 = vmatpush1.msra.mxu0 %v268
  %932 = vmatprep.mubr.f32.mxu0 %v33
  %933 = vmatmul.mubr.f32.gmra.mrb[0].mxu0 %v32
  %v934 = vpop.f32.mrb[0].mxu0
  %v935 = vadd.f32 %v865, %v934
  %v936 = vpop.f32.mrb[0].mxu0
  %937 = vdwg.mxu0
  %938 = vmatprep.subr.mxu0 0.0
  %939 = vmatpush1.msra.mxu0 %v269
  %940 = vmatprep.subr.mxu0 0.0
  %941 = vmatpush1.msra.mxu0 %v270
  %942 = vmatprep.subr.mxu0 0.0
  %943 = vmatpush1.msra.mxu0 %v271
  %944 = vmatprep.subr.mxu0 0.0
  %945 = vmatpush1.msra.mxu0 %v272
  %946 = vmatprep.subr.mxu0 0.0
  %947 = vmatpush1.msra.mxu0 %v273
  %948 = vmatprep.subr.mxu0 0.0
  %949 = vmatpush1.msra.mxu0 %v274
  %950 = vmatprep.subr.mxu0 0.0
  %951 = vmatpush1.msra.mxu0 %v275
  %952 = vmatprep.subr.mxu0 0.0
  %953 = vmatpush1.msra.mxu0 %v276
  %954 = vmatprep.subr.mxu0 0.0
  %955 = vmatpush1.msra.mxu0 %v277
  %956 = vmatprep.subr.mxu0 0.0
  %957 = vmatpush1.msra.mxu0 %v278
  %958 = vmatprep.subr.mxu0 0.0
  %959 = vmatpush1.msra.mxu0 %v279
  %960 = vmatprep.subr.mxu0 0.0
  %961 = vmatpush1.msra.mxu0 %v280
  %962 = vmatprep.subr.mxu0 0.0
  %963 = vmatpush1.msra.mxu0 %v281
  %964 = vmatprep.subr.mxu0 0.0
  %965 = vmatpush1.msra.mxu0 %v282
  %966 = vmatprep.subr.mxu0 0.0
  %967 = vmatpush1.msra.mxu0 %v283
  %968 = vmatprep.subr.mxu0 0.0
  %969 = vmatpush1.msra.mxu0 %v284
  %970 = vmatprep.subr.mxu0 0.0
  %971 = vmatpush1.msra.mxu0 %v285
  %972 = vmatprep.subr.mxu0 0.0
  %973 = vmatpush1.msra.mxu0 %v286
  %974 = vmatprep.subr.mxu0 0.0
  %975 = vmatpush1.msra.mxu0 %v287
  %976 = vmatprep.subr.mxu0 0.0
  %977 = vmatpush1.msra.mxu0 %v288
  %978 = vmatprep.subr.mxu0 0.0
  %979 = vmatpush1.msra.mxu0 %v289
  %980 = vmatprep.subr.mxu0 0.0
  %981 = vmatpush1.msra.mxu0 %v290
  %982 = vmatprep.subr.mxu0 0.0
  %983 = vmatpush1.msra.mxu0 %v291
  %984 = vmatprep.subr.mxu0 0.0
  %985 = vmatpush1.msra.mxu0 %v292
  %986 = vmatprep.subr.mxu0 0.0
  %987 = vmatpush1.msra.mxu0 %v293
  %988 = vmatprep.subr.mxu0 0.0
  %989 = vmatpush1.msra.mxu0 %v294
  %990 = vmatprep.subr.mxu0 0.0
  %991 = vmatpush1.msra.mxu0 %v295
  %992 = vmatprep.subr.mxu0 0.0
  %993 = vmatpush1.msra.mxu0 %v296
  %994 = vmatprep.subr.mxu0 0.0
  %995 = vmatpush1.msra.mxu0 %v297
  %996 = vmatprep.subr.mxu0 0.0
  %997 = vmatpush1.msra.mxu0 %v298
  %998 = vmatprep.subr.mxu0 0.0
  %999 = vmatpush1.msra.mxu0 %v299
  %1000 = vmatprep.subr.mxu0 0.0
  %1001 = vmatpush1.msra.mxu0 %v300
  %1002 = vmatprep.mubr.f32.mxu0 %v35
  %1003 = vmatmul.mubr.f32.gmra.mrb[0].mxu0 %v34
  %v1004 = vpop.f32.mrb[0].mxu0
  %v1005 = vadd.f32 %v935, %v1004
  %v1006 = vpop.f32.mrb[0].mxu0
  %1007 = vdwg.mxu0
  %1008 = vmatprep.subr.mxu0 0.0
  %1009 = vmatpush1.msra.mxu0 %v301
  %1010 = vmatprep.subr.mxu0 0.0
  %1011 = vmatpush1.msra.mxu0 %v302
  %1012 = vmatprep.subr.mxu0 0.0
  %1013 = vmatpush1.msra.mxu0 %v303
  %1014 = vmatprep.subr.mxu0 0.0
  %1015 = vmatpush1.msra.mxu0 %v304
  %1016 = vmatprep.subr.mxu0 0.0
  %1017 = vmatpush1.msra.mxu0 %v305
  %1018 = vmatprep.subr.mxu0 0.0
  %1019 = vmatpush1.msra.mxu0 %v306
  %1020 = vmatprep.subr.mxu0 0.0
  %1021 = vmatpush1.msra.mxu0 %v307
  %1022 = vmatprep.subr.mxu0 0.0
  %1023 = vmatpush1.msra.mxu0 %v308
  %1024 = vmatprep.subr.mxu0 0.0
  %1025 = vmatpush1.msra.mxu0 %v309
  %1026 = vmatprep.subr.mxu0 0.0
  %1027 = vmatpush1.msra.mxu0 %v310
  %1028 = vmatprep.subr.mxu0 0.0
  %1029 = vmatpush1.msra.mxu0 %v311
  %1030 = vmatprep.subr.mxu0 0.0
  %1031 = vmatpush1.msra.mxu0 %v312
  %1032 = vmatprep.subr.mxu0 0.0
  %1033 = vmatpush1.msra.mxu0 %v313
  %1034 = vmatprep.subr.mxu0 0.0
  %1035 = vmatpush1.msra.mxu0 %v314
  %1036 = vmatprep.subr.mxu0 0.0
  %1037 = vmatpush1.msra.mxu0 %v315
  %1038 = vmatprep.subr.mxu0 0.0
  %1039 = vmatpush1.msra.mxu0 %v316
  %1040 = vmatprep.subr.mxu0 0.0
  %1041 = vmatpush1.msra.mxu0 %v317
  %1042 = vmatprep.subr.mxu0 0.0
  %1043 = vmatpush1.msra.mxu0 %v318
  %1044 = vmatprep.subr.mxu0 0.0
  %1045 = vmatpush1.msra.mxu0 %v319
  %1046 = vmatprep.subr.mxu0 0.0
  %1047 = vmatpush1.msra.mxu0 %v320
  %1048 = vmatprep.subr.mxu0 0.0
  %1049 = vmatpush1.msra.mxu0 %v321
  %1050 = vmatprep.subr.mxu0 0.0
  %1051 = vmatpush1.msra.mxu0 %v322
  %1052 = vmatprep.subr.mxu0 0.0
  %1053 = vmatpush1.msra.mxu0 %v323
  %1054 = vmatprep.subr.mxu0 0.0
  %1055 = vmatpush1.msra.mxu0 %v324
  %1056 = vmatprep.subr.mxu0 0.0
  %1057 = vmatpush1.msra.mxu0 %v325
  %1058 = vmatprep.subr.mxu0 0.0
  %1059 = vmatpush1.msra.mxu0 %v326
  %1060 = vmatprep.subr.mxu0 0.0
  %1061 = vmatpush1.msra.mxu0 %v327
  %1062 = vmatprep.subr.mxu0 0.0
  %1063 = vmatpush1.msra.mxu0 %v328
  %1064 = vmatprep.subr.mxu0 0.0
  %1065 = vmatpush1.msra.mxu0 %v329
  %1066 = vmatprep.subr.mxu0 0.0
  %1067 = vmatpush1.msra.mxu0 %v330
  %1068 = vmatprep.subr.mxu0 0.0
  %1069 = vmatpush1.msra.mxu0 %v331
  %1070 = vmatprep.subr.mxu0 0.0
  %1071 = vmatpush1.msra.mxu0 %v332
  %1072 = vmatprep.mubr.f32.mxu0 %v37
  %1073 = vmatmul.mubr.f32.gmra.mrb[0].mxu0 %v36
  %v1074 = vpop.f32.mrb[0].mxu0
  %v1075 = vadd.f32 %v1005, %v1074
  %v1076 = vpop.f32.mrb[0].mxu0
  %1077 = vdwg.mxu0
  %1078 = vmatprep.subr.mxu0 0.0
  %1079 = vmatpush1.msra.mxu0 %v333
  %1080 = vmatprep.subr.mxu0 0.0
  %1081 = vmatpush1.msra.mxu0 %v334
  %1082 = vmatprep.subr.mxu0 0.0
  %1083 = vmatpush1.msra.mxu0 %v335
  %1084 = vmatprep.subr.mxu0 0.0
  %1085 = vmatpush1.msra.mxu0 %v336
  %1086 = vmatprep.subr.mxu0 0.0
  %1087 = vmatpush1.msra.mxu0 %v337
  %1088 = vmatprep.subr.mxu0 0.0
  %1089 = vmatpush1.msra.mxu0 %v338
  %1090 = vmatprep.subr.mxu0 0.0
  %1091 = vmatpush1.msra.mxu0 %v339
  %1092 = vmatprep.subr.mxu0 0.0
  %1093 = vmatpush1.msra.mxu0 %v340
  %1094 = vmatprep.subr.mxu0 0.0
  %1095 = vmatpush1.msra.mxu0 %v341
  %1096 = vmatprep.subr.mxu0 0.0
  %1097 = vmatpush1.msra.mxu0 %v342
  %1098 = vmatprep.subr.mxu0 0.0
  %1099 = vmatpush1.msra.mxu0 %v343
  %1100 = vmatprep.subr.mxu0 0.0
  %1101 = vmatpush1.msra.mxu0 %v344
  %1102 = vmatprep.subr.mxu0 0.0
  %1103 = vmatpush1.msra.mxu0 %v345
  %1104 = vmatprep.subr.mxu0 0.0
  %1105 = vmatpush1.msra.mxu0 %v346
  %1106 = vmatprep.subr.mxu0 0.0
  %1107 = vmatpush1.msra.mxu0 %v347
  %1108 = vmatprep.subr.mxu0 0.0
  %1109 = vmatpush1.msra.mxu0 %v348
  %1110 = vmatprep.subr.mxu0 0.0
  %1111 = vmatpush1.msra.mxu0 %v349
  %1112 = vmatprep.subr.mxu0 0.0
  %1113 = vmatpush1.msra.mxu0 %v350
  %1114 = vmatprep.subr.mxu0 0.0
  %1115 = vmatpush1.msra.mxu0 %v351
  %1116 = vmatprep.subr.mxu0 0.0
  %1117 = vmatpush1.msra.mxu0 %v352
  %1118 = vmatprep.subr.mxu0 0.0
  %1119 = vmatpush1.msra.mxu0 %v353
  %1120 = vmatprep.subr.mxu0 0.0
  %1121 = vmatpush1.msra.mxu0 %v354
  %1122 = vmatprep.subr.mxu0 0.0
  %1123 = vmatpush1.msra.mxu0 %v355
  %1124 = vmatprep.subr.mxu0 0.0
  %1125 = vmatpush1.msra.mxu0 %v356
  %1126 = vmatprep.subr.mxu0 0.0
  %1127 = vmatpush1.msra.mxu0 %v357
  %1128 = vmatprep.subr.mxu0 0.0
  %1129 = vmatpush1.msra.mxu0 %v358
  %1130 = vmatprep.subr.mxu0 0.0
  %1131 = vmatpush1.msra.mxu0 %v359
  %1132 = vmatprep.subr.mxu0 0.0
  %1133 = vmatpush1.msra.mxu0 %v360
  %1134 = vmatprep.subr.mxu0 0.0
  %1135 = vmatpush1.msra.mxu0 %v361
  %1136 = vmatprep.subr.mxu0 0.0
  %1137 = vmatpush1.msra.mxu0 %v362
  %1138 = vmatprep.subr.mxu0 0.0
  %1139 = vmatpush1.msra.mxu0 %v363
  %1140 = vmatprep.subr.mxu0 0.0
  %1141 = vmatpush1.msra.mxu0 %v364
  %1142 = vmatprep.mubr.f32.mxu0 %v39
  %1143 = vmatmul.mubr.f32.gmra.mrb[0].mxu0 %v38
  %v1144 = vpop.f32.mrb[0].mxu0
  %v1145 = vadd.f32 %v1075, %v1144
  %v1146 = vpop.f32.mrb[0].mxu0
  %1147 = vdwg.mxu0
  %1148 = vmatprep.subr.mxu0 0.0
  %1149 = vmatpush1.msra.mxu0 %v365
  %1150 = vmatprep.subr.mxu0 0.0
  %1151 = vmatpush1.msra.mxu0 %v366
  %1152 = vmatprep.subr.mxu0 0.0
  %1153 = vmatpush1.msra.mxu0 %v367
  %1154 = vmatprep.subr.mxu0 0.0
  %1155 = vmatpush1.msra.mxu0 %v368
  %1156 = vmatprep.subr.mxu0 0.0
  %1157 = vmatpush1.msra.mxu0 %v369
  %1158 = vmatprep.subr.mxu0 0.0
  %1159 = vmatpush1.msra.mxu0 %v370
  %1160 = vmatprep.subr.mxu0 0.0
  %1161 = vmatpush1.msra.mxu0 %v371
  %1162 = vmatprep.subr.mxu0 0.0
  %1163 = vmatpush1.msra.mxu0 %v372
  %1164 = vmatprep.subr.mxu0 0.0
  %1165 = vmatpush1.msra.mxu0 %v373
  %1166 = vmatprep.subr.mxu0 0.0
  %1167 = vmatpush1.msra.mxu0 %v374
  %1168 = vmatprep.subr.mxu0 0.0
  %1169 = vmatpush1.msra.mxu0 %v375
  %1170 = vmatprep.subr.mxu0 0.0
  %1171 = vmatpush1.msra.mxu0 %v376
  %1172 = vmatprep.subr.mxu0 0.0
  %1173 = vmatpush1.msra.mxu0 %v377
  %1174 = vmatprep.subr.mxu0 0.0
  %1175 = vmatpush1.msra.mxu0 %v378
  %1176 = vmatprep.subr.mxu0 0.0
  %1177 = vmatpush1.msra.mxu0 %v379
  %1178 = vmatprep.subr.mxu0 0.0
  %1179 = vmatpush1.msra.mxu0 %v380
  %1180 = vmatprep.subr.mxu0 0.0
  %1181 = vmatpush1.msra.mxu0 %v381
  %1182 = vmatprep.subr.mxu0 0.0
  %1183 = vmatpush1.msra.mxu0 %v382
  %1184 = vmatprep.subr.mxu0 0.0
  %1185 = vmatpush1.msra.mxu0 %v383
  %1186 = vmatprep.subr.mxu0 0.0
  %1187 = vmatpush1.msra.mxu0 %v384
  %1188 = vmatprep.subr.mxu0 0.0
  %1189 = vmatpush1.msra.mxu0 %v385
  %1190 = vmatprep.subr.mxu0 0.0
  %1191 = vmatpush1.msra.mxu0 %v386
  %1192 = vmatprep.subr.mxu0 0.0
  %1193 = vmatpush1.msra.mxu0 %v387
  %1194 = vmatprep.subr.mxu0 0.0
  %1195 = vmatpush1.msra.mxu0 %v388
  %1196 = vmatprep.subr.mxu0 0.0
  %1197 = vmatpush1.msra.mxu0 %v389
  %1198 = vmatprep.subr.mxu0 0.0
  %1199 = vmatpush1.msra.mxu0 %v390
  %1200 = vmatprep.subr.mxu0 0.0
  %1201 = vmatpush1.msra.mxu0 %v391
  %1202 = vmatprep.subr.mxu0 0.0
  %1203 = vmatpush1.msra.mxu0 %v392
  %1204 = vmatprep.subr.mxu0 0.0
  %1205 = vmatpush1.msra.mxu0 %v393
  %1206 = vmatprep.subr.mxu0 0.0
  %1207 = vmatpush1.msra.mxu0 %v394
  %1208 = vmatprep.subr.mxu0 0.0
  %1209 = vmatpush1.msra.mxu0 %v395
  %1210 = vmatprep.subr.mxu0 0.0
  %1211 = vmatpush1.msra.mxu0 %v396
  %1212 = vmatprep.mubr.f32.mxu0 %v41
  %1213 = vmatmul.mubr.f32.gmra.mrb[0].mxu0 %v40
  %v1214 = vpop.f32.mrb[0].mxu0
  %v1215 = vadd.f32 %v1145, %v1214
  %v1216 = vpop.f32.mrb[0].mxu0
  %1217 = vdwg.mxu0
  %1218 = vmatprep.subr.mxu0 0.0
  %1219 = vmatpush1.msra.mxu0 %v397
  %1220 = vmatprep.subr.mxu0 0.0
  %1221 = vmatpush1.msra.mxu0 %v398
  %1222 = vmatprep.subr.mxu0 0.0
  %1223 = vmatpush1.msra.mxu0 %v399
  %1224 = vmatprep.subr.mxu0 0.0
  %1225 = vmatpush1.msra.mxu0 %v400
  %1226 = vmatprep.subr.mxu0 0.0
  %1227 = vmatpush1.msra.mxu0 %v401
  %1228 = vmatprep.subr.mxu0 0.0
  %1229 = vmatpush1.msra.mxu0 %v402
  %1230 = vmatprep.subr.mxu0 0.0
  %1231 = vmatpush1.msra.mxu0 %v403
  %1232 = vmatprep.subr.mxu0 0.0
  %1233 = vmatpush1.msra.mxu0 %v404
  %1234 = vmatprep.subr.mxu0 0.0
  %1235 = vmatpush1.msra.mxu0 %v405
  %1236 = vmatprep.subr.mxu0 0.0
  %1237 = vmatpush1.msra.mxu0 %v406
  %1238 = vmatprep.subr.mxu0 0.0
  %1239 = vmatpush1.msra.mxu0 %v407
  %1240 = vmatprep.subr.mxu0 0.0
  %1241 = vmatpush1.msra.mxu0 %v408
  %1242 = vmatprep.subr.mxu0 0.0
  %1243 = vmatpush1.msra.mxu0 %v409
  %1244 = vmatprep.subr.mxu0 0.0
  %1245 = vmatpush1.msra.mxu0 %v410
  %1246 = vmatprep.subr.mxu0 0.0
  %1247 = vmatpush1.msra.mxu0 %v411
  %1248 = vmatprep.subr.mxu0 0.0
  %1249 = vmatpush1.msra.mxu0 %v412
  %1250 = vmatprep.subr.mxu0 0.0
  %1251 = vmatpush1.msra.mxu0 %v413
  %1252 = vmatprep.subr.mxu0 0.0
  %1253 = vmatpush1.msra.mxu0 %v414
  %1254 = vmatprep.subr.mxu0 0.0
  %1255 = vmatpush1.msra.mxu0 %v415
  %1256 = vmatprep.subr.mxu0 0.0
  %1257 = vmatpush1.msra.mxu0 %v416
  %1258 = vmatprep.subr.mxu0 0.0
  %1259 = vmatpush1.msra.mxu0 %v417
  %1260 = vmatprep.subr.mxu0 0.0
  %1261 = vmatpush1.msra.mxu0 %v418
  %1262 = vmatprep.subr.mxu0 0.0
  %1263 = vmatpush1.msra.mxu0 %v419
  %1264 = vmatprep.subr.mxu0 0.0
  %1265 = vmatpush1.msra.mxu0 %v420
  %1266 = vmatprep.subr.mxu0 0.0
  %1267 = vmatpush1.msra.mxu0 %v421
  %1268 = vmatprep.subr.mxu0 0.0
  %1269 = vmatpush1.msra.mxu0 %v422
  %1270 = vmatprep.subr.mxu0 0.0
  %1271 = vmatpush1.msra.mxu0 %v423
  %1272 = vmatprep.subr.mxu0 0.0
  %1273 = vmatpush1.msra.mxu0 %v424
  %1274 = vmatprep.subr.mxu0 0.0
  %1275 = vmatpush1.msra.mxu0 %v425
  %1276 = vmatprep.subr.mxu0 0.0
  %1277 = vmatpush1.msra.mxu0 %v426
  %1278 = vmatprep.subr.mxu0 0.0
  %1279 = vmatpush1.msra.mxu0 %v427
  %1280 = vmatprep.subr.mxu0 0.0
  %1281 = vmatpush1.msra.mxu0 %v428
  %1282 = vmatprep.mubr.f32.mxu0 %v43
  %1283 = vmatmul.mubr.f32.gmra.mrb[0].mxu0 %v42
  %v1284 = vpop.f32.mrb[0].mxu0
  %v1285 = vadd.f32 %v1215, %v1284
  %v1286 = vpop.f32.mrb[0].mxu0
  %1287 = vdwg.mxu0
  %1288 = vmatprep.subr.mxu0 0.0
  %1289 = vmatpush1.msra.mxu0 %v429
  %1290 = vmatprep.subr.mxu0 0.0
  %1291 = vmatpush1.msra.mxu0 %v430
  %1292 = vmatprep.subr.mxu0 0.0
  %1293 = vmatpush1.msra.mxu0 %v431
  %1294 = vmatprep.subr.mxu0 0.0
  %1295 = vmatpush1.msra.mxu0 %v432
  %1296 = vmatprep.subr.mxu0 0.0
  %1297 = vmatpush1.msra.mxu0 %v433
  %1298 = vmatprep.subr.mxu0 0.0
  %1299 = vmatpush1.msra.mxu0 %v434
  %1300 = vmatprep.subr.mxu0 0.0
  %1301 = vmatpush1.msra.mxu0 %v435
  %1302 = vmatprep.subr.mxu0 0.0
  %1303 = vmatpush1.msra.mxu0 %v436
  %1304 = vmatprep.subr.mxu0 0.0
  %1305 = vmatpush1.msra.mxu0 0.0
  %1306 = vmatprep.subr.mxu0 0.0
  %1307 = vmatpush1.msra.mxu0 0.0
  %1308 = vmatprep.subr.mxu0 0.0
  %1309 = vmatpush1.msra.mxu0 0.0
  %1310 = vmatprep.subr.mxu0 0.0
  %1311 = vmatpush1.msra.mxu0 0.0
  %1312 = vmatprep.subr.mxu0 0.0
  %1313 = vmatpush1.msra.mxu0 0.0
  %1314 = vmatprep.subr.mxu0 0.0
  %1315 = vmatpush1.msra.mxu0 0.0
  %1316 = vmatprep.subr.mxu0 0.0
  %1317 = vmatpush1.msra.mxu0 0.0
  %1318 = vmatprep.subr.mxu0 0.0
  %1319 = vmatpush1.msra.mxu0 0.0
  %1320 = vmatprep.subr.mxu0 0.0
  %1321 = vmatpush1.msra.mxu0 0.0
  %1322 = vmatprep.subr.mxu0 0.0
  %1323 = vmatpush1.msra.mxu0 0.0
  %1324 = vmatprep.subr.mxu0 0.0
  %1325 = vmatpush1.msra.mxu0 0.0
  %1326 = vmatprep.subr.mxu0 0.0
  %1327 = vmatpush1.msra.mxu0 0.0
  %1328 = vmatprep.subr.mxu0 0.0
  %1329 = vmatpush1.msra.mxu0 0.0
  %1330 = vmatprep.subr.mxu0 0.0
  %1331 = vmatpush1.msra.mxu0 0.0
  %1332 = vmatprep.subr.mxu0 0.0
  %1333 = vmatpush1.msra.mxu0 0.0
  %1334 = vmatprep.subr.mxu0 0.0
  %1335 = vmatpush1.msra.mxu0 0.0
  %1336 = vmatprep.subr.mxu0 0.0
  %1337 = vmatpush1.msra.mxu0 0.0
  %1338 = vmatprep.subr.mxu0 0.0
  %1339 = vmatpush1.msra.mxu0 0.0
  %1340 = vmatprep.subr.mxu0 0.0
  %1341 = vmatpush1.msra.mxu0 0.0
  %1342 = vmatprep.subr.mxu0 0.0
  %1343 = vmatpush1.msra.mxu0 0.0
  %1344 = vmatprep.subr.mxu0 0.0
  %1345 = vmatpush1.msra.mxu0 0.0
  %1346 = vmatprep.subr.mxu0 0.0
  %1347 = vmatpush1.msra.mxu0 0.0
  %1348 = vmatprep.subr.mxu0 0.0
  %1349 = vmatpush1.msra.mxu0 0.0
  %1350 = vmatprep.subr.mxu0 0.0
  %1351 = vmatpush1.msra.mxu0 0.0
  %1352 = vmatprep.mubr.f32.mxu0 0.0
  %1353 = vmatmul.mubr.f32.gmra.mrb[0].mxu0 %v446
  %v1354 = vpop.f32.mrb[0].mxu0
  %v1355 = vadd.f32 %v1285, %v1354
  %v1356 = vpop.f32.mrb[0].mxu0
  %1357 = vdwg.mxu0
  %v1358 = vmax.f32 %v1355, 0.0
  %v1359 = vld [vmem:[%s3] sm:$0xff]
  %v1360 = vld [vmem:[%s3 + $0x8] sm:$0xff]
  %v1361 = vld [vmem:[%s3 + $0x10] sm:$0xff]
  %v1362 = vld [vmem:[%s3 + $0x18] sm:$0xff]
  %v1363 = vld [vmem:[%s3 + $0x20] sm:$0xff]
  %v1364 = vld [vmem:[%s3 + $0x28] sm:$0xff]
  %v1365 = vld [vmem:[%s3 + $0x30] sm:$0xff]
  %v1366 = vld [vmem:[%s3 + $0x38] sm:$0xff]
  %v1367 = vld [vmem:[%s3 + $0x40] sm:$0xff]
  %v1368 = vld [vmem:[%s3 + $0x48] sm:$0xff]
  %v1369 = vld [vmem:[%s3 + $0x50] sm:$0xff]
  %v1370 = vld [vmem:[%s3 + $0x58] sm:$0xff]
  %v1371 = vld [vmem:[%s3 + $0x60] sm:$0xff]
  %v1372 = vld [vmem:[%s3 + $0x68] sm:$0xff]
  %v1373 = vld [vmem:[%s3 + $0x70] sm:$0xff]
  %v1374 = vld [vmem:[%s3 + $0x78] sm:$0xff]
  %v1375 = vld [vmem:[%s4] sm:$0x1]
  %v1377 = vlaneseq
  %v1378 = vshrl.u32 %v1377, 7
  %v1379 = vsub.s32 0, %v1378
  %v1380 = vrot.slane %v1375, %v1379
  %1382 = vmatprep.subr.mxu0 0.0
  %1383 = vmatpush1.msra.mxu0 %v1359
  %1384 = vmatprep.subr.mxu0 0.0
  %1385 = vmatpush1.msra.mxu0 %v1360
  %1386 = vmatprep.subr.mxu0 0.0
  %1387 = vmatpush1.msra.mxu0 %v1361
  %1388 = vmatprep.subr.mxu0 0.0
  %1389 = vmatpush1.msra.mxu0 %v1362
  %1390 = vmatprep.subr.mxu0 0.0
  %1391 = vmatpush1.msra.mxu0 %v1363
  %1392 = vmatprep.subr.mxu0 0.0
  %1393 = vmatpush1.msra.mxu0 %v1364
  %1394 = vmatprep.subr.mxu0 0.0
  %1395 = vmatpush1.msra.mxu0 %v1365
  %1396 = vmatprep.subr.mxu0 0.0
  %1397 = vmatpush1.msra.mxu0 %v1366
  %1398 = vmatprep.subr.mxu0 0.0
  %1399 = vmatpush1.msra.mxu0 %v1367
  %1400 = vmatprep.subr.mxu0 0.0
  %1401 = vmatpush1.msra.mxu0 %v1368
  %1402 = vmatprep.subr.mxu0 0.0
  %1403 = vmatpush1.msra.mxu0 %v1369
  %1404 = vmatprep.subr.mxu0 0.0
  %1405 = vmatpush1.msra.mxu0 %v1370
  %1406 = vmatprep.subr.mxu0 0.0
  %1407 = vmatpush1.msra.mxu0 %v1371
  %1408 = vmatprep.subr.mxu0 0.0
  %1409 = vmatpush1.msra.mxu0 %v1372
  %1410 = vmatprep.subr.mxu0 0.0
  %1411 = vmatpush1.msra.mxu0 %v1373
  %1412 = vmatprep.subr.mxu0 0.0
  %1413 = vmatpush1.msra.mxu0 %v1374
  %1414 = vmatprep.subr.mxu0 0.0
  %1415 = vmatpush1.msra.mxu0 0.0
  %1416 = vmatprep.subr.mxu0 0.0
  %1417 = vmatpush1.msra.mxu0 0.0
  %1418 = vmatprep.subr.mxu0 0.0
  %1419 = vmatpush1.msra.mxu0 0.0
  %1420 = vmatprep.subr.mxu0 0.0
  %1421 = vmatpush1.msra.mxu0 0.0
  %1422 = vmatprep.subr.mxu0 0.0
  %1423 = vmatpush1.msra.mxu0 0.0
  %1424 = vmatprep.subr.mxu0 0.0
  %1425 = vmatpush1.msra.mxu0 0.0
  %1426 = vmatprep.subr.mxu0 0.0
  %1427 = vmatpush1.msra.mxu0 0.0
  %1428 = vmatprep.subr.mxu0 0.0
  %1429 = vmatpush1.msra.mxu0 0.0
  %1430 = vmatprep.subr.mxu0 0.0
  %1431 = vmatpush1.msra.mxu0 0.0
  %1432 = vmatprep.subr.mxu0 0.0
  %1433 = vmatpush1.msra.mxu0 0.0
  %1434 = vmatprep.subr.mxu0 0.0
  %1435 = vmatpush1.msra.mxu0 0.0
  %1436 = vmatprep.subr.mxu0 0.0
  %1437 = vmatpush1.msra.mxu0 0.0
  %1438 = vmatprep.subr.mxu0 0.0
  %1439 = vmatpush1.msra.mxu0 0.0
  %1440 = vmatprep.subr.mxu0 0.0
  %1441 = vmatpush1.msra.mxu0 0.0
  %1442 = vmatprep.subr.mxu0 0.0
  %1443 = vmatpush1.msra.mxu0 0.0
  %1444 = vmatprep.subr.mxu0 0.0
  %1445 = vmatpush1.msra.mxu0 0.0
  %1446 = vmatprep.mubr.f32.mxu0 0.0
  %1447 = vmatmul.mubr.f32.gmra.mrb[0].mxu0 %v1358
  %v1448 = vpop.f32.mrb[0].mxu0
  %v1449 = vadd.f32 %v1380, %v1448
  %v1450 = vpop.f32.mrb[0].mxu0
  %1451 = vdwg.mxu0
  %vm1452 = vcmask 80896
  %1453 = vst.msk [vmem:[%s5] sm:$0xff] %vm1452, %v1449
  // Predicated region
  $region22: #{colored_mnist_forward.5} parent=0 // pred_check
    _
  $region23: #{colored_mnist_forward.5} parent=0 // pred_check_branch
    %1455 = sbr.rel (0) target = $region25
  $region24: #{colored_mnist_forward.5} parent=0 // pred_region
    _
  $region25: #{colored_mnist_forward.5} parent=0 // pred_fallthru
    _
  // Predicated region
  $region26: #{colored_mnist_forward.5} parent=0 // pred_check
    _
  $region27: #{colored_mnist_forward.5} parent=0 // pred_check_branch
    %1457 = sbr.rel (0) target = $region29
  $region28: #{colored_mnist_forward.5} parent=0 // pred_region
    _
  $region29: #{colored_mnist_forward.5} parent=0 // pred_fallthru
    _

</llo_original>
